<compile_context>
chip_gen: v6e
topology: v6e:2x2x1
jax: 0.10.0
libtpu: 0.0.40
codegen_flags: <defaults>
</compile_context>

<pallas_src>
import functools

import numpy as np

import jax
import jax.numpy as jnp
from jax.experimental import pallas as pl
from jax.experimental.pallas import tpu as pltpu


def _conv_stats_kernel(x_ref, w_ref, mask_ref, y_ref, sum_ref, ssq_ref, *, KH, KW, WP, R):
    """Phase 1: conv via in-kernel im2col (KH*KW shifted row-slices) + BN sum/sumsq accumulation.

    x_ref:    (1, ROWS, C_in)   flattened padded NHWC rows for one batch element
    w_ref:    (KH*KW, C_in, Cp) per-tap weight matrices (C_out zero-padded to Cp)
    mask_ref: (R, 1)            1.0 for valid output positions, 0.0 for the WP-row overhang
    y_ref:    (1, R, Cp)        conv output tile (lane-dense, Cp = multiple of 128)
    sum_ref, ssq_ref: (1, Cp)   per-channel sum / sum-of-squares, accumulated across the grid
    """
    @pl.when(pl.program_id(0) == 0)
    def _init():
        sum_ref[...] = jnp.zeros_like(sum_ref)
        ssq_ref[...] = jnp.zeros_like(ssq_ref)

    acc = jnp.zeros(y_ref.shape[1:], jnp.float32)          # (R, Cp)
    for kh in range(KH):
        for kw in range(KW):
            start = kh * WP + kw
            slab = x_ref[0, pl.ds(start, R), :]             # (R, C_in) — contiguous row slice
            acc = acc + jnp.dot(slab, w_ref[kh * KW + kw],
                                preferred_element_type=jnp.float32)

    y_ref[0] = acc

    # Mask out the ow >= OW "overhang" rows before accumulating batch-norm statistics.
    yv = acc * mask_ref[...]
    sum_ref[...] += jnp.sum(yv, axis=0, keepdims=True)
    ssq_ref[...] += jnp.sum(yv * yv, axis=0, keepdims=True)


def _bn_relu_kernel(y_ref, scale_ref, shift_ref, o_ref):
    """Phase 2: y * scale + shift, then ReLU. Pure elementwise, lane-dense."""
    o_ref[0] = jnp.maximum(y_ref[0] * scale_ref[...] + shift_ref[...], 0.0).astype(o_ref.dtype)


def basic_conv2d(x, weight, gamma=None, beta=None, *, stride=1, padding=1, eps=1e-5):
    """x: [N, C_in, H, W] (NCHW, like PyTorch). weight: [C_out, C_in, KH, KW].
    Returns [N, C_out, OH, OW] matching BasicConv2d.forward (training-mode BN)."""
    N, C_in, H, W = x.shape
    C_out, C_in_w, KH, KW = weight.shape
    assert C_in_w == C_in
    assert stride == 1, "this Pallas fast path implements stride=1 (demo/default config)"

    if gamma is None:
        gamma = jnp.ones((C_out,), jnp.float32)
    if beta is None:
        beta = jnp.zeros((C_out,), jnp.float32)

    HP = H + 2 * padding
    WP = W + 2 * padding
    OH = HP - KH + 1
    OW = WP - KW + 1
    R = OH * WP                                   # rows per batch element (incl. KW-1 overhang cols/row)
    Cp = ((C_out + 127) // 128) * 128             # lane-dense output channel count

    # --- wrapper glue (cheap, single pass over x): NCHW -> NHWC, spatial pad, flatten rows ----
    xn = jnp.transpose(x, (0, 2, 3, 1)).astype(jnp.float32)                    # (N, H, W, C_in)
    xp = jnp.pad(xn, ((0, 0), (padding, padding), (padding, padding), (0, 0)))  # (N, HP, WP, C_in)
    rows = HP * WP
    rows_pad = -(-(rows + KW - 1) // 8) * 8       # room for the last shifted slice, 8-row aligned
    x3 = jnp.pad(xp.reshape(N, rows, C_in), ((0, 0), (0, rows_pad - rows), (0, 0)))

    # weights: (C_out, C_in, KH, KW) -> (KH*KW, C_in, Cp), zero-padded output channels
    wt = jnp.transpose(weight.astype(jnp.float32), (2, 3, 1, 0)).reshape(KH * KW, C_in, C_out)
    wt = jnp.pad(wt, ((0, 0), (0, 0), (0, Cp - C_out)))

    # validity mask for the ow >= OW overhang rows (static, tiny)
    mask_np = (np.arange(R) % WP < OW).astype(np.float32).reshape(R, 1)
    mask = jnp.asarray(mask_np)

    # --- phase 1: conv + per-channel sum / sumsq -------------------------------------------
    y, s, sq = pl.pallas_call(
        functools.partial(_conv_stats_kernel, KH=KH, KW=KW, WP=WP, R=R),
        out_shape=(
            jax.ShapeDtypeStruct((N, R, Cp), jnp.float32),
            jax.ShapeDtypeStruct((1, Cp), jnp.float32),
            jax.ShapeDtypeStruct((1, Cp), jnp.float32),
        ),
        grid_spec=pltpu.PrefetchScalarGridSpec(
            num_scalar_prefetch=0,
            grid=(N,),
            in_specs=[
                pl.BlockSpec((1, rows_pad, C_in), lambda n: (n, 0, 0)),
                pl.BlockSpec((KH * KW, C_in, Cp), lambda n: (0, 0, 0)),   # VMEM-resident
                pl.BlockSpec((R, 1), lambda n: (0, 0)),                   # VMEM-resident
            ],
            out_specs=(
                pl.BlockSpec((1, R, Cp), lambda n: (n, 0, 0)),
                pl.BlockSpec((1, Cp), lambda n: (0, 0)),                  # accumulator
                pl.BlockSpec((1, Cp), lambda n: (0, 0)),                  # accumulator
            ),
        ),
        compiler_params=pltpu.CompilerParams(
            dimension_semantics=("arbitrary",),    # stats accumulate across this axis
        ),
    )(x3, wt, mask)

    # --- tiny [1, Cp] stats math in the wrapper --------------------------------------------
    m_total = jnp.float32(N * OH * OW)
    mean = s / m_total
    var = jnp.maximum(sq / m_total - mean * mean, 0.0)     # biased batch variance (training mode)
    inv_std = jax.lax.rsqrt(var + eps)
    gpad = jnp.pad(gamma.astype(jnp.float32), (0, Cp - C_out)).reshape(1, Cp)
    bpad = jnp.pad(beta.astype(jnp.float32), (0, Cp - C_out)).reshape(1, Cp)
    scale = gpad * inv_std
    shift = bpad - mean * scale

    # --- phase 2: apply BN + ReLU ------------------------------------------------------------
    out_pad = pl.pallas_call(
        _bn_relu_kernel,
        out_shape=jax.ShapeDtypeStruct((N, R, Cp), jnp.float32),
        grid_spec=pltpu.PrefetchScalarGridSpec(
            num_scalar_prefetch=0,
            grid=(N,),
            in_specs=[
                pl.BlockSpec((1, R, Cp), lambda n: (n, 0, 0)),
                pl.BlockSpec((1, Cp), lambda n: (0, 0)),                  # VMEM-resident
                pl.BlockSpec((1, Cp), lambda n: (0, 0)),                  # VMEM-resident
            ],
            out_specs=pl.BlockSpec((1, R, Cp), lambda n: (n, 0, 0)),
        ),
        compiler_params=pltpu.CompilerParams(
            dimension_semantics=("parallel",),     # independent tiles: sharded across TCs on v7x
        ),
    )(y, scale, shift)

    # slice real channels / valid columns first (smallest possible transpose), then back to NCHW
    out = out_pad.reshape(N, OH, WP, Cp)[:, :, :OW, :C_out]
    return jnp.transpose(out, (0, 3, 1, 2))


def _reference(x, weight, gamma, beta, *, stride=1, padding=1, eps=1e-5):
    """Plain-JAX reference matching PyTorch BasicConv2d forward (training-mode BN)."""
    y = jax.lax.conv_general_dilated(
        x.astype(jnp.float32), weight.astype(jnp.float32),
        window_strides=(stride, stride),
        padding=[(padding, padding), (padding, padding)],
        dimension_numbers=("NCHW", "OIHW", "NCHW"),
    )
    mean = jnp.mean(y, axis=(0, 2, 3), keepdims=True)
    var = jnp.mean((y - mean) ** 2, axis=(0, 2, 3), keepdims=True)
    yhat = (y - mean) / jnp.sqrt(var + eps)
    yhat = yhat * gamma.reshape(1, -1, 1, 1) + beta.reshape(1, -1, 1, 1)
    return jnp.maximum(yhat, 0.0)


if __name__ == "__main__":
    key = jax.random.PRNGKey(0)
    k_x, k_w = jax.random.split(key)

    # BasicConv2d(in_channels=4, out_channels=8, kernel_size=3, padding=1)
    N, C_in, H, W = 2, 4, 16, 16
    C_out, KH, KW = 8, 3, 3

    x = jax.random.normal(k_x, (N, C_in, H, W), dtype=jnp.float32)
    weight = 0.1 * jax.random.normal(k_w, (C_out, C_in, KH, KW), dtype=jnp.float32)
    gamma = jnp.ones((C_out,), dtype=jnp.float32)   # BatchNorm2d default weight
    beta = jnp.zeros((C_out,), dtype=jnp.float32)   # BatchNorm2d default bias

    out = basic_conv2d(x, weight, gamma, beta, stride=1, padding=1, eps=1e-5)
    out = jax.block_until_ready(out)

    ref = jax.block_until_ready(_reference(x, weight, gamma, beta))
    assert out.shape == (N, C_out, H, W)
    assert jnp.allclose(out, ref, atol=1e-3, rtol=1e-3), float(jnp.max(jnp.abs(out - ref)))

    print("KERNEL_OK")
</pallas_src>

<mosaic_0001>
module attributes {stable_mosaic.version = 11 : i64} {
  func.func @_conv_stats_kernel(%arg0: i32, %arg1: memref<1x328x4xf32, #tpu.memory_space<vmem>>, %arg2: memref<9x4x128xf32, #tpu.memory_space<vmem>>, %arg3: memref<288x1xf32, #tpu.memory_space<vmem>>, %arg4: memref<1x288x128xf32, #tpu.memory_space<vmem>>, %arg5: memref<1x128xf32, #tpu.memory_space<vmem>>, %arg6: memref<1x128xf32, #tpu.memory_space<vmem>>) attributes {dimension_semantics = [#tpu.dimension_semantics<arbitrary>], iteration_bounds = array<i64: 2>, scalar_prefetch = 0 : i64, scratch_operands = 0 : i64, tpu.core_type = #tpu.core_type<tc>, window_params = [{transform_indices = @transform_0, window_bounds = array<i64: 1, 328, 4>}, {pipeline_mode = #tpu.pipeline_mode<synchronous>, transform_indices = @transform_1, window_bounds = array<i64: 9, 4, 128>}, {pipeline_mode = #tpu.pipeline_mode<synchronous>, transform_indices = @transform_2, window_bounds = array<i64: 288, 1>}, {transform_indices = @transform_3, window_bounds = array<i64: 1, 288, 128>}, {pipeline_mode = #tpu.pipeline_mode<synchronous>, transform_indices = @transform_4, window_bounds = array<i64: 1, 128>}, {pipeline_mode = #tpu.pipeline_mode<synchronous>, transform_indices = @transform_5, window_bounds = array<i64: 1, 128>}]} {
    %c0_i32 = arith.constant 0 : i32
    %0 = arith.cmpi eq, %arg0, %c0_i32 : i32
    %1 = arith.extui %0 : i1 to i32
    %c0_i32_0 = arith.constant 0 : i32
    %2 = arith.cmpi ne, %1, %c0_i32_0 : i32
    scf.if %2 {
      %cst_64 = arith.constant 0.000000e+00 : f32
      %75 = vector.broadcast %cst_64 : f32 to vector<1x128xf32>
      %c0_65 = arith.constant 0 : index
      %c0_66 = arith.constant 0 : index
      %76 = vector.load %arg5[%c0_65, %c0_66] : memref<1x128xf32, #tpu.memory_space<vmem>>, vector<1x128xf32>
      tpu.vector_store %arg5[%c0_65, %c0_66], %75 {strides = array<i32>} : memref<1x128xf32, #tpu.memory_space<vmem>>, vector<1x128xf32>,
      %cst_67 = arith.constant 0.000000e+00 : f32
      %77 = vector.broadcast %cst_67 : f32 to vector<1x128xf32>
      %c0_68 = arith.constant 0 : index
      %c0_69 = arith.constant 0 : index
      %78 = vector.load %arg6[%c0_68, %c0_69] : memref<1x128xf32, #tpu.memory_space<vmem>>, vector<1x128xf32>
      tpu.vector_store %arg6[%c0_68, %c0_69], %77 {strides = array<i32>} : memref<1x128xf32, #tpu.memory_space<vmem>>, vector<1x128xf32>,
    } else {
    }
    %cst = arith.constant 0.000000e+00 : f32
    %3 = vector.broadcast %cst : f32 to vector<288x128xf32>
    %c0 = arith.constant 0 : index
    %c0_1 = arith.constant 0 : index
    %c0_2 = arith.constant 0 : index
    %4 = vector.load %arg1[%c0, %c0_1, %c0_2] : memref<1x328x4xf32, #tpu.memory_space<vmem>>, vector<1x288x4xf32>
    %5 = vector.shape_cast %4 : vector<1x288x4xf32> to vector<288x4xf32>
    %c0_3 = arith.constant 0 : index
    %c0_4 = arith.constant 0 : index
    %c0_5 = arith.constant 0 : index
    %6 = vector.load %arg2[%c0_3, %c0_4, %c0_5] : memref<9x4x128xf32, #tpu.memory_space<vmem>>, vector<1x4x128xf32>
    %7 = vector.shape_cast %6 : vector<1x4x128xf32> to vector<4x128xf32>
    %cst_6 = arith.constant dense<0.000000e+00> : vector<288x128xf32>
    %8 = tpu.matmul %5, %7, %cst_6 {dimension_numbers = #tpu.dot_dimension_numbers<[1], [0], [0], [1], [0, 0, 1, 1], [], []>} : vector<288x4xf32>, vector<4x128xf32>, vector<288x128xf32> -> vector<288x128xf32>
    %9 = arith.addf %3, %8 : vector<288x128xf32>
    %c0_7 = arith.constant 0 : index
    %c1 = arith.constant 1 : index
    %c0_8 = arith.constant 0 : index
    %10 = vector.load %arg1[%c0_7, %c1, %c0_8] : memref<1x328x4xf32, #tpu.memory_space<vmem>>, vector<1x288x4xf32>
    %11 = vector.shape_cast %10 : vector<1x288x4xf32> to vector<288x4xf32>
    %c1_9 = arith.constant 1 : index
    %c0_10 = arith.constant 0 : index
    %c0_11 = arith.constant 0 : index
    %12 = vector.load %arg2[%c1_9, %c0_10, %c0_11] : memref<9x4x128xf32, #tpu.memory_space<vmem>>, vector<1x4x128xf32>
    %13 = vector.shape_cast %12 : vector<1x4x128xf32> to vector<4x128xf32>
    %cst_12 = arith.constant dense<0.000000e+00> : vector<288x128xf32>
    %14 = tpu.matmul %11, %13, %cst_12 {dimension_numbers = #tpu.dot_dimension_numbers<[1], [0], [0], [1], [0, 0, 1, 1], [], []>} : vector<288x4xf32>, vector<4x128xf32>, vector<288x128xf32> -> vector<288x128xf32>
    %15 = arith.addf %9, %14 : vector<288x128xf32>
    %c0_13 = arith.constant 0 : index
    %c2 = arith.constant 2 : index
    %c0_14 = arith.constant 0 : index
    %16 = vector.load %arg1[%c0_13, %c2, %c0_14] : memref<1x328x4xf32, #tpu.memory_space<vmem>>, vector<1x288x4xf32>
    %17 = vector.shape_cast %16 : vector<1x288x4xf32> to vector<288x4xf32>
    %c2_15 = arith.constant 2 : index
    %c0_16 = arith.constant 0 : index
    %c0_17 = arith.constant 0 : index
    %18 = vector.load %arg2[%c2_15, %c0_16, %c0_17] : memref<9x4x128xf32, #tpu.memory_space<vmem>>, vector<1x4x128xf32>
    %19 = vector.shape_cast %18 : vector<1x4x128xf32> to vector<4x128xf32>
    %cst_18 = arith.constant dense<0.000000e+00> : vector<288x128xf32>
    %20 = tpu.matmul %17, %19, %cst_18 {dimension_numbers = #tpu.dot_dimension_numbers<[1], [0], [0], [1], [0, 0, 1, 1], [], []>} : vector<288x4xf32>, vector<4x128xf32>, vector<288x128xf32> -> vector<288x128xf32>
    %21 = arith.addf %15, %20 : vector<288x128xf32>
    %c0_19 = arith.constant 0 : index
    %c18 = arith.constant 18 : index
    %c0_20 = arith.constant 0 : index
    %22 = vector.load %arg1[%c0_19, %c18, %c0_20] : memref<1x328x4xf32, #tpu.memory_space<vmem>>, vector<1x288x4xf32>
    %23 = vector.shape_cast %22 : vector<1x288x4xf32> to vector<288x4xf32>
    %c3 = arith.constant 3 : index
    %c0_21 = arith.constant 0 : index
    %c0_22 = arith.constant 0 : index
    %24 = vector.load %arg2[%c3, %c0_21, %c0_22] : memref<9x4x128xf32, #tpu.memory_space<vmem>>, vector<1x4x128xf32>
    %25 = vector.shape_cast %24 : vector<1x4x128xf32> to vector<4x128xf32>
    %cst_23 = arith.constant dense<0.000000e+00> : vector<288x128xf32>
    %26 = tpu.matmul %23, %25, %cst_23 {dimension_numbers = #tpu.dot_dimension_numbers<[1], [0], [0], [1], [0, 0, 1, 1], [], []>} : vector<288x4xf32>, vector<4x128xf32>, vector<288x128xf32> -> vector<288x128xf32>
    %27 = arith.addf %21, %26 : vector<288x128xf32>
    %c0_24 = arith.constant 0 : index
    %c19 = arith.constant 19 : index
    %c0_25 = arith.constant 0 : index
    %28 = vector.load %arg1[%c0_24, %c19, %c0_25] : memref<1x328x4xf32, #tpu.memory_space<vmem>>, vector<1x288x4xf32>
    %29 = vector.shape_cast %28 : vector<1x288x4xf32> to vector<288x4xf32>
    %c4 = arith.constant 4 : index
    %c0_26 = arith.constant 0 : index
    %c0_27 = arith.constant 0 : index
    %30 = vector.load %arg2[%c4, %c0_26, %c0_27] : memref<9x4x128xf32, #tpu.memory_space<vmem>>, vector<1x4x128xf32>
    %31 = vector.shape_cast %30 : vector<1x4x128xf32> to vector<4x128xf32>
    %cst_28 = arith.constant dense<0.000000e+00> : vector<288x128xf32>
    %32 = tpu.matmul %29, %31, %cst_28 {dimension_numbers = #tpu.dot_dimension_numbers<[1], [0], [0], [1], [0, 0, 1, 1], [], []>} : vector<288x4xf32>, vector<4x128xf32>, vector<288x128xf32> -> vector<288x128xf32>
    %33 = arith.addf %27, %32 : vector<288x128xf32>
    %c0_29 = arith.constant 0 : index
    %c20 = arith.constant 20 : index
    %c0_30 = arith.constant 0 : index
    %34 = vector.load %arg1[%c0_29, %c20, %c0_30] : memref<1x328x4xf32, #tpu.memory_space<vmem>>, vector<1x288x4xf32>
    %35 = vector.shape_cast %34 : vector<1x288x4xf32> to vector<288x4xf32>
    %c5 = arith.constant 5 : index
    %c0_31 = arith.constant 0 : index
    %c0_32 = arith.constant 0 : index
    %36 = vector.load %arg2[%c5, %c0_31, %c0_32] : memref<9x4x128xf32, #tpu.memory_space<vmem>>, vector<1x4x128xf32>
    %37 = vector.shape_cast %36 : vector<1x4x128xf32> to vector<4x128xf32>
    %cst_33 = arith.constant dense<0.000000e+00> : vector<288x128xf32>
    %38 = tpu.matmul %35, %37, %cst_33 {dimension_numbers = #tpu.dot_dimension_numbers<[1], [0], [0], [1], [0, 0, 1, 1], [], []>} : vector<288x4xf32>, vector<4x128xf32>, vector<288x128xf32> -> vector<288x128xf32>
    %39 = arith.addf %33, %38 : vector<288x128xf32>
    %c0_34 = arith.constant 0 : index
    %c36 = arith.constant 36 : index
    %c0_35 = arith.constant 0 : index
    %40 = vector.load %arg1[%c0_34, %c36, %c0_35] : memref<1x328x4xf32, #tpu.memory_space<vmem>>, vector<1x288x4xf32>
    %41 = vector.shape_cast %40 : vector<1x288x4xf32> to vector<288x4xf32>
    %c6 = arith.constant 6 : index
    %c0_36 = arith.constant 0 : index
    %c0_37 = arith.constant 0 : index
    %42 = vector.load %arg2[%c6, %c0_36, %c0_37] : memref<9x4x128xf32, #tpu.memory_space<vmem>>, vector<1x4x128xf32>
    %43 = vector.shape_cast %42 : vector<1x4x128xf32> to vector<4x128xf32>
    %cst_38 = arith.constant dense<0.000000e+00> : vector<288x128xf32>
    %44 = tpu.matmul %41, %43, %cst_38 {dimension_numbers = #tpu.dot_dimension_numbers<[1], [0], [0], [1], [0, 0, 1, 1], [], []>} : vector<288x4xf32>, vector<4x128xf32>, vector<288x128xf32> -> vector<288x128xf32>
    %45 = arith.addf %39, %44 : vector<288x128xf32>
    %c0_39 = arith.constant 0 : index
    %c37 = arith.constant 37 : index
    %c0_40 = arith.constant 0 : index
    %46 = vector.load %arg1[%c0_39, %c37, %c0_40] : memref<1x328x4xf32, #tpu.memory_space<vmem>>, vector<1x288x4xf32>
    %47 = vector.shape_cast %46 : vector<1x288x4xf32> to vector<288x4xf32>
    %c7 = arith.constant 7 : index
    %c0_41 = arith.constant 0 : index
    %c0_42 = arith.constant 0 : index
    %48 = vector.load %arg2[%c7, %c0_41, %c0_42] : memref<9x4x128xf32, #tpu.memory_space<vmem>>, vector<1x4x128xf32>
    %49 = vector.shape_cast %48 : vector<1x4x128xf32> to vector<4x128xf32>
    %cst_43 = arith.constant dense<0.000000e+00> : vector<288x128xf32>
    %50 = tpu.matmul %47, %49, %cst_43 {dimension_numbers = #tpu.dot_dimension_numbers<[1], [0], [0], [1], [0, 0, 1, 1], [], []>} : vector<288x4xf32>, vector<4x128xf32>, vector<288x128xf32> -> vector<288x128xf32>
    %51 = arith.addf %45, %50 : vector<288x128xf32>
    %c0_44 = arith.constant 0 : index
    %c38 = arith.constant 38 : index
    %c0_45 = arith.constant 0 : index
    %52 = vector.load %arg1[%c0_44, %c38, %c0_45] : memref<1x328x4xf32, #tpu.memory_space<vmem>>, vector<1x288x4xf32>
    %53 = vector.shape_cast %52 : vector<1x288x4xf32> to vector<288x4xf32>
    %c8 = arith.constant 8 : index
    %c0_46 = arith.constant 0 : index
    %c0_47 = arith.constant 0 : index
    %54 = vector.load %arg2[%c8, %c0_46, %c0_47] : memref<9x4x128xf32, #tpu.memory_space<vmem>>, vector<1x4x128xf32>
    %55 = vector.shape_cast %54 : vector<1x4x128xf32> to vector<4x128xf32>
    %cst_48 = arith.constant dense<0.000000e+00> : vector<288x128xf32>
    %56 = tpu.matmul %53, %55, %cst_48 {dimension_numbers = #tpu.dot_dimension_numbers<[1], [0], [0], [1], [0, 0, 1, 1], [], []>} : vector<288x4xf32>, vector<4x128xf32>, vector<288x128xf32> -> vector<288x128xf32>
    %57 = arith.addf %51, %56 : vector<288x128xf32>
    %c0_49 = arith.constant 0 : index
    %c0_50 = arith.constant 0 : index
    %c0_51 = arith.constant 0 : index
    %58 = vector.load %arg4[%c0_49, %c0_50, %c0_51] : memref<1x288x128xf32, #tpu.memory_space<vmem>>, vector<1x288x128xf32>
    %59 = vector.shape_cast %58 : vector<1x288x128xf32> to vector<288x128xf32>
    %60 = vector.shape_cast %57 : vector<288x128xf32> to vector<1x288x128xf32>
    tpu.vector_store %arg4[%c0_49, %c0_50, %c0_51], %60 {strides = array<i32>} : memref<1x288x128xf32, #tpu.memory_space<vmem>>, vector<1x288x128xf32>,
    %c0_52 = arith.constant 0 : index
    %c0_53 = arith.constant 0 : index
    %61 = vector.load %arg3[%c0_52, %c0_53] : memref<288x1xf32, #tpu.memory_space<vmem>>, vector<288x1xf32>
    %62 = vector.broadcast %61 : vector<288x1xf32> to vector<288x128xf32>
    %63 = arith.mulf %57, %62 : vector<288x128xf32>
    %c0_54 = arith.constant 0 : index
    %c0_55 = arith.constant 0 : index
    %64 = vector.load %arg5[%c0_54, %c0_55] : memref<1x128xf32, #tpu.memory_space<vmem>>, vector<1x128xf32>
    %cst_56 = arith.constant dense<0.000000e+00> : vector<128xf32>
    %65 = vector.multi_reduction <add>, %63, %cst_56 [0] : vector<288x128xf32> to vector<128xf32>
    %66 = vector.shape_cast %65 : vector<128xf32> to vector<1x128xf32>
    %67 = arith.addf %64, %66 : vector<1x128xf32>
    %c0_57 = arith.constant 0 : index
    %c0_58 = arith.constant 0 : index
    %68 = vector.load %arg5[%c0_57, %c0_58] : memref<1x128xf32, #tpu.memory_space<vmem>>, vector<1x128xf32>
    tpu.vector_store %arg5[%c0_57, %c0_58], %67 {strides = array<i32>} : memref<1x128xf32, #tpu.memory_space<vmem>>, vector<1x128xf32>,
    %c0_59 = arith.constant 0 : index
    %c0_60 = arith.constant 0 : index
    %69 = vector.load %arg6[%c0_59, %c0_60] : memref<1x128xf32, #tpu.memory_space<vmem>>, vector<1x128xf32>
    %70 = arith.mulf %63, %63 : vector<288x128xf32>
    %cst_61 = arith.constant dense<0.000000e+00> : vector<128xf32>
    %71 = vector.multi_reduction <add>, %70, %cst_61 [0] : vector<288x128xf32> to vector<128xf32>
    %72 = vector.shape_cast %71 : vector<128xf32> to vector<1x128xf32>
    %73 = arith.addf %69, %72 : vector<1x128xf32>
    %c0_62 = arith.constant 0 : index
    %c0_63 = arith.constant 0 : index
    %74 = vector.load %arg6[%c0_62, %c0_63] : memref<1x128xf32, #tpu.memory_space<vmem>>, vector<1x128xf32>
    tpu.vector_store %arg6[%c0_62, %c0_63], %73 {strides = array<i32>} : memref<1x128xf32, #tpu.memory_space<vmem>>, vector<1x128xf32>,
    return
  }
  func.func @transform_0(%arg0: i32) -> (i32, i32, i32) {
    %c0_i32 = arith.constant 0 : i32
    %c0_i32_0 = arith.constant 0 : i32
    %c0_i32_1 = arith.constant 0 : i32
    return %arg0, %c0_i32, %c0_i32_0 : i32, i32, i32
  }
  func.func @transform_1(%arg0: i32) -> (i32, i32, i32) {
    %c0_i32 = arith.constant 0 : i32
    %c0_i32_0 = arith.constant 0 : i32
    %c0_i32_1 = arith.constant 0 : i32
    %c0_i32_2 = arith.constant 0 : i32
    return %c0_i32, %c0_i32_0, %c0_i32_1 : i32, i32, i32
  }
  func.func @transform_2(%arg0: i32) -> (i32, i32) {
    %c0_i32 = arith.constant 0 : i32
    %c0_i32_0 = arith.constant 0 : i32
    %c0_i32_1 = arith.constant 0 : i32
    return %c0_i32, %c0_i32_0 : i32, i32
  }
  func.func @transform_3(%arg0: i32) -> (i32, i32, i32) {
    %c0_i32 = arith.constant 0 : i32
    %c0_i32_0 = arith.constant 0 : i32
    %c0_i32_1 = arith.constant 0 : i32
    return %arg0, %c0_i32, %c0_i32_0 : i32, i32, i32
  }
  func.func @transform_4(%arg0: i32) -> (i32, i32) {
    %c0_i32 = arith.constant 0 : i32
    %c0_i32_0 = arith.constant 0 : i32
    %c0_i32_1 = arith.constant 0 : i32
    return %c0_i32, %c0_i32_0 : i32, i32
  }
  func.func @transform_5(%arg0: i32) -> (i32, i32) {
    %c0_i32 = arith.constant 0 : i32
    %c0_i32_0 = arith.constant 0 : i32
    %c0_i32_1 = arith.constant 0 : i32
    return %c0_i32, %c0_i32_0 : i32, i32
  }
}

</mosaic_0001>

<llo_original>
// kernel: tpu_custom_call.1
$region0: #{tpu_custom_call.1}
  #allocation0 [shape = 'u32[]', space=smem, size = 0x4, offset = 0x4, fixed_abs, tag = 'smem constant byte address 0x4 - core index']
  #allocation1 [shape = 'u32[144,128]{1,0:T(1,128)}', space=vmem, size = 0x12000, scoped, tag = 'internal scratch']
  %s0 = inlined_call_operand.vmem [shape: f32[2,328,4], index: 0, kind: input, shape index: {}]
  %s1 = inlined_call_operand.vmem [shape: f32[9,4,128], index: 1, kind: input, shape index: {}]
  %s2 = inlined_call_operand.vmem [shape: f32[288,1], index: 2, kind: input, shape index: {}]
  %s3 = inlined_call_operand.hbm [shape: f32[2,288,128], index: 3, kind: output, shape index: {0}]
  %s4 = inlined_call_operand.hbm [shape: f32[1,128], index: 4, kind: output, shape index: {1}]
  %s5 = inlined_call_operand.hbm [shape: f32[1,128], index: 5, kind: output, shape index: {2}]
  %6 = xla_tuple %s3, %s4, %s5
  %s7 = sld [smem:[#allocation0]]
  $region65: #{tpu_custom_call.1} parent=0
    _
  %s9 = ssub.s32 1, %s7
  %s10 = scalar_select 0, %s9, %s7
  $region1: #{tpu_custom_call.1} parent=0
    #allocation2 [shape = 'u8[294912]{0}', space=vmem, size = 0x48000, scoped, tag = 'output window, operand 0']
    #allocation3 [shape = 's32[2]{0}', space=sflag, size = 0x8, scoped, tag = 'scoped memory for tpu_custom_call.1']
    #allocation4 [shape = 'u8[512]{0}', space=vmem, size = 0x400, scoped, tag = 'output window, operand 1, single buffered']
    #allocation5 [shape = 's32[1]{0}', space=sflag, size = 0x4, scoped, tag = 'scoped memory for tpu_custom_call.1']
    #allocation6 [shape = 'u8[512]{0}', space=vmem, size = 0x400, scoped, tag = 'output window, operand 2, single buffered']
    %11 = vsyncpa [#allocation3], 0
    %s12 = scalar_lea.sflag [#allocation3], 1
    %13 = vsyncpa %s12, 0
    %14 = vsyncpa [#allocation5], 0
    loop: start=0, step=1, limit=4
    $region2: #{tpu_custom_call.1} parent=1 // loop_pre_header
      _
    $region3: #{tpu_custom_call.1} parent=1 // loop_header
      %s16 = sphi 0, %s20
      %p17 = scmp.ge.s32.totalorder %s16, 4
      %s26 = sphi 0, %s28
      %s29 = sphi 0, %s26
      %s30 = sphi 0, %s29
      %s46 = sphi 0, %s30
      %s50 = sphi 0, %s50
      %s52 = sphi 0, %s50
      %s53 = sphi 0, %s52
      %s67 = sphi 0, %s53
      %s71 = sphi 0, %s71
      %s73 = sphi 0, %s71
      %s74 = sphi 0, %s73
      %s88 = sphi 0, %s74
      %s94 = sphi 0, %s96
      %s97 = sphi 0, %s94
      %s98 = sphi 0, %s97
      %s114 = sphi 0, %s98
      %s118 = sphi 0, %s118
      %s120 = sphi 0, %s118
      %s121 = sphi 0, %s120
      %s135 = sphi 0, %s121
      %s139 = sphi 0, %s139
      %s141 = sphi 0, %s139
      %s142 = sphi 0, %s141
      %s156 = sphi 0, %s142
    $region4: #{tpu_custom_call.1} parent=1 // loop_header_branch
      %19 = sbr.rel (%p17) target = $region8
    $region5: #{tpu_custom_call.1} parent=1 // loop_body
      %s21 = ssub.s32 %s16, 1
      %s22 = ssub.s32 %s16, 2
      %s23 = sadd.s32 %s16, 1
      %s24 = ssub.s32 %s16, %s23
      %p25 = scmp.eq.s32.totalorder %s24, 0
      %s27 = sadd.s32 %s26, 1
      %s28 = scalar_select %p25, %s26, %s27
      %p31 = pneg %p25
      %p32 = scmp.eq.s32.totalorder %s16, 1
      %p33 = por %p31, %p32
      %p34 = scmp.ne.s32.totalorder %s26, %s29
      %p35 = scmp.eq.s32.totalorder %s16, 0
      %p36 = por %p34, %p35
      %p37 = scmp.ne.s32.totalorder %s26, %s29
      %p38 = scmp.eq.s32.totalorder %s21, 1
      %p39 = por %p37, %p38
      %p40 = scmp.ne.s32.totalorder %s29, %s30
      %p41 = scmp.eq.s32.totalorder %s21, 0
      %p42 = por %p40, %p41
      %p43 = scmp.ne.s32.totalorder %s29, %s30
      %p44 = scmp.eq.s32.totalorder %s22, 1
      %p45 = por %p43, %p44
      %p47 = scmp.ne.s32.totalorder %s30, %s46
      %p48 = scmp.eq.s32.totalorder %s22, 0
      %p49 = por %p47, %p48
      %s51 = sadd.s32 %s50, 1
      %p54 = scmp.eq.s32.totalorder %s16, 1
      %p55 = scmp.ne.s32.totalorder %s50, %s52
      %p56 = scmp.eq.s32.totalorder %s16, 0
      %p57 = por %p55, %p56
      %p58 = scmp.ne.s32.totalorder %s50, %s52
      %p59 = scmp.eq.s32.totalorder %s21, 1
      %p60 = por %p58, %p59
      %p61 = scmp.ne.s32.totalorder %s52, %s53
      %p62 = scmp.eq.s32.totalorder %s21, 0
      %p63 = por %p61, %p62
      %p64 = scmp.ne.s32.totalorder %s52, %s53
      %p65 = scmp.eq.s32.totalorder %s22, 1
      %p66 = por %p64, %p65
      %p68 = scmp.ne.s32.totalorder %s53, %s67
      %p69 = scmp.eq.s32.totalorder %s22, 0
      %p70 = por %p68, %p69
      %s72 = sadd.s32 %s71, 1
      %p75 = scmp.eq.s32.totalorder %s16, 1
      %p76 = scmp.ne.s32.totalorder %s71, %s73
      %p77 = scmp.eq.s32.totalorder %s16, 0
      %p78 = por %p76, %p77
      %p79 = scmp.ne.s32.totalorder %s71, %s73
      %p80 = scmp.eq.s32.totalorder %s21, 1
      %p81 = por %p79, %p80
      %p82 = scmp.ne.s32.totalorder %s73, %s74
      %p83 = scmp.eq.s32.totalorder %s21, 0
      %p84 = por %p82, %p83
      %p85 = scmp.ne.s32.totalorder %s73, %s74
      %p86 = scmp.eq.s32.totalorder %s22, 1
      %p87 = por %p85, %p86
      %p89 = scmp.ne.s32.totalorder %s74, %s88
      %p90 = scmp.eq.s32.totalorder %s22, 0
      %p91 = por %p89, %p90
      %s92 = ssub.s32 %s16, %s23
      %p93 = scmp.eq.s32.totalorder %s92, 0
      %s95 = sadd.s32 %s94, 1
      %s96 = scalar_select %p93, %s94, %s95
      %p99 = pneg %p93
      %p100 = scmp.eq.s32.totalorder %s16, 1
      %p101 = por %p99, %p100
      %p102 = scmp.ne.s32.totalorder %s94, %s97
      %p103 = scmp.eq.s32.totalorder %s16, 0
      %p104 = por %p102, %p103
      %p105 = scmp.ne.s32.totalorder %s94, %s97
      %p106 = scmp.eq.s32.totalorder %s21, 1
      %p107 = por %p105, %p106
      %p108 = scmp.ne.s32.totalorder %s97, %s98
      %p109 = scmp.eq.s32.totalorder %s21, 0
      %p110 = por %p108, %p109
      %p111 = scmp.ne.s32.totalorder %s97, %s98
      %p112 = scmp.eq.s32.totalorder %s22, 1
      %p113 = por %p111, %p112
      %p115 = scmp.ne.s32.totalorder %s98, %s114
      %p116 = scmp.eq.s32.totalorder %s22, 0
      %p117 = por %p115, %p116
      %s119 = sadd.s32 %s118, 1
      %p122 = scmp.eq.s32.totalorder %s16, 1
      %p123 = scmp.ne.s32.totalorder %s118, %s120
      %p124 = scmp.eq.s32.totalorder %s16, 0
      %p125 = por %p123, %p124
      %p126 = scmp.ne.s32.totalorder %s118, %s120
      %p127 = scmp.eq.s32.totalorder %s21, 1
      %p128 = por %p126, %p127
      %p129 = scmp.ne.s32.totalorder %s120, %s121
      %p130 = scmp.eq.s32.totalorder %s21, 0
      %p131 = por %p129, %p130
      %p132 = scmp.ne.s32.totalorder %s120, %s121
      %p133 = scmp.eq.s32.totalorder %s22, 1
      %p134 = por %p132, %p133
      %p136 = scmp.ne.s32.totalorder %s121, %s135
      %p137 = scmp.eq.s32.totalorder %s22, 0
      %p138 = por %p136, %p137
      %s140 = sadd.s32 %s139, 1
      %p143 = scmp.eq.s32.totalorder %s16, 1
      %p144 = scmp.ne.s32.totalorder %s139, %s141
      %p145 = scmp.eq.s32.totalorder %s16, 0
      %p146 = por %p144, %p145
      %p147 = scmp.ne.s32.totalorder %s139, %s141
      %p148 = scmp.eq.s32.totalorder %s21, 1
      %p149 = por %p147, %p148
      %p150 = scmp.ne.s32.totalorder %s141, %s142
      %p151 = scmp.eq.s32.totalorder %s21, 0
      %p152 = por %p150, %p151
      %p153 = scmp.ne.s32.totalorder %s141, %s142
      %p154 = scmp.eq.s32.totalorder %s22, 1
      %p155 = por %p153, %p154
      %p157 = scmp.ne.s32.totalorder %s142, %s156
      %p158 = scmp.eq.s32.totalorder %s22, 0
      %p159 = por %p157, %p158
      %p160 = scmp.le.s32.totalorder 1, %s16
      %p161 = scmp.lt.s32.totalorder %s16, 3
      %p162 = pnand %p160, %p161
      %p163 = pneg %p162
      // Predicated region
      $region9: #{tpu_custom_call.1} parent=5 // pred_check
        _
      $region10: #{tpu_custom_call.1} parent=5 // pred_check_branch
        %165 = sbr.rel (%p162) target = $region12
      $region11: #{tpu_custom_call.1} parent=5 // pred_region
        %s166 = ssub.s32 %s16, 1
        // Predicated region
        $region13: #{tpu_custom_call.1} parent=11 // pred_check
          %p167 = pneg %p63
        $region14: #{tpu_custom_call.1} parent=11 // pred_check_branch
          %169 = sbr.rel (%p167) target = $region16
        $region15: #{tpu_custom_call.1} parent=11 // pred_region
          _
        $region16: #{tpu_custom_call.1} parent=11 // pred_fallthru
          _
        // Predicated region
        $region17: #{tpu_custom_call.1} parent=11 // pred_check
          %p170 = pneg %p84
        $region18: #{tpu_custom_call.1} parent=11 // pred_check_branch
          %172 = sbr.rel (%p170) target = $region20
        $region19: #{tpu_custom_call.1} parent=11 // pred_region
          _
        $region20: #{tpu_custom_call.1} parent=11 // pred_fallthru
          _
      $region12: #{tpu_custom_call.1} parent=5 // pred_fallthru
        _
      %p173 = scmp.lt.s32.totalorder %s16, 2
      // Predicated region
      $region21: #{tpu_custom_call.1} parent=5 // pred_check
        %p174 = pneg %p173
      $region22: #{tpu_custom_call.1} parent=5 // pred_check_branch
        %176 = sbr.rel (%p174) target = $region24
      $region23: #{tpu_custom_call.1} parent=5 // pred_region
        // Predicated region
        $region25: #{tpu_custom_call.1} parent=23 // pred_check
          %p177 = pneg %p36
        $region26: #{tpu_custom_call.1} parent=23 // pred_check_branch
          %179 = sbr.rel (%p177) target = $region28
        $region27: #{tpu_custom_call.1} parent=23 // pred_region
          %p180 = scmp.lt.s32.totalorder %s16, 1
          %s181 = scalar_select %p180, %s16, 1
          %s182 = smul.addr %s181, 41
          %s183 = smul.addr %s182, 8
          %s184 = scalar_lea.vmem %s0, %s183
        $region28: #{tpu_custom_call.1} parent=23 // pred_fallthru
          _
      $region24: #{tpu_custom_call.1} parent=5 // pred_fallthru
        _
      %p185 = scmp.le.s32.totalorder 1, %s16
      %p186 = scmp.lt.s32.totalorder %s16, 3
      %p187 = pnand %p185, %p186
      %p188 = pneg %p187
      // Predicated region
      $region29: #{tpu_custom_call.1} parent=5 // pred_check
        _
      $region30: #{tpu_custom_call.1} parent=5 // pred_check_branch
        %190 = sbr.rel (%p187) target = $region32
      $region31: #{tpu_custom_call.1} parent=5 // pred_region
        %s191 = ssub.s32 %s16, 1
        %p192 = scmp.lt.s32.totalorder %s21, 1
        %s193 = scalar_select %p192, %s21, 1
        %s194 = smul.addr %s193, 41
        %s195 = smul.addr %s194, 8
        %s196 = scalar_lea.vmem %s0, %s195
        %p197 = pneg %p42
        %p198 = pneg %p39
        %p199 = pneg %p63
        %p200 = pneg %p60
        %p201 = pneg %p84
        %p202 = pneg %p81
        %p203 = pneg %p110
        %p204 = pneg %p107
        %s205 = sand.u32 %s97, 1
        %s206 = scalar_lea.sflag [#allocation3], %s205
        %s207 = sand.u32 %s97, 1
        %s208 = smul.addr %s207, 288
        %s209 = scalar_lea.vmem [#allocation2], %s208
        %p210 = pneg %p131
        %p211 = pneg %p128
        %p212 = pneg %p152
        %p213 = pneg %p149
        %p214 = scmp.lt.s32.totalorder %s21, 1
        %s215 = scalar_select %p214, %s21, 1
        %s216 = smul.addr %s215, 41
        %s217 = smul.addr %s216, 8
        %s218 = scalar_lea.vmem %s0, %s217
        %p219 = scmp.eq.s32.totalorder %s21, 0
        // Predicated region
        $region33: #{tpu_custom_call.1} parent=31 // pred_check
          %p220 = pneg %p219
        $region34: #{tpu_custom_call.1} parent=31 // pred_check_branch
          %222 = sbr.rel (%p220) target = $region36
        $region35: #{tpu_custom_call.1} parent=31 // pred_region
          %223 = vst [vmem:[#allocation4] sm:$0x1] 0.0
          %224 = vst [vmem:[#allocation6] sm:$0x1] 0.0
        $region36: #{tpu_custom_call.1} parent=31 // pred_fallthru
          _
        %v225 = vld [vmem:[%s218] sm:$0xff]
        %v226 = vld [vmem:[%s218 + $0x8] sm:$0xff]
        %v227 = vld [vmem:[%s218 + $0x10] sm:$0xff]
        %v228 = vld [vmem:[%s218 + $0x18] sm:$0xff]
        %v229 = vld [vmem:[%s218 + $0x20] sm:$0xff]
        %v230 = vld [vmem:[%s218 + $0x28] sm:$0xff]
        %v231 = vld [vmem:[%s218 + $0x30] sm:$0xff]
        %v232 = vld [vmem:[%s218 + $0x38] sm:$0xff]
        %v233 = vld [vmem:[%s218 + $0x40] sm:$0xff]
        %v234 = vld [vmem:[%s218 + $0x48] sm:$0xff]
        %v235 = vld [vmem:[%s218 + $0x50] sm:$0xff]
        %v236 = vld [vmem:[%s218 + $0x58] sm:$0xff]
        %v237 = vld [vmem:[%s218 + $0x60] sm:$0xff]
        %v238 = vld [vmem:[%s218 + $0x68] sm:$0xff]
        %v239 = vld [vmem:[%s218 + $0x70] sm:$0xff]
        %v240 = vld [vmem:[%s218 + $0x78] sm:$0xff]
        %v241 = vld [vmem:[%s218 + $0x80] sm:$0xff]
        %v242 = vld [vmem:[%s218 + $0x88] sm:$0xff]
        %v243 = vld [vmem:[%s218 + $0x90] sm:$0xff]
        %v244 = vld [vmem:[%s218 + $0x98] sm:$0xff]
        %v245 = vld [vmem:[%s218 + $0xa0] sm:$0xff]
        %v246 = vld [vmem:[%s218 + $0xa8] sm:$0xff]
        %v247 = vld [vmem:[%s218 + $0xb0] sm:$0xff]
        %v248 = vld [vmem:[%s218 + $0xb8] sm:$0xff]
        %v249 = vld [vmem:[%s218 + $0xc0] sm:$0xff]
        %v250 = vld [vmem:[%s218 + $0xc8] sm:$0xff]
        %v251 = vld [vmem:[%s218 + $0xd0] sm:$0xff]
        %v252 = vld [vmem:[%s218 + $0xd8] sm:$0xff]
        %v253 = vld [vmem:[%s218 + $0xe0] sm:$0xff]
        %v254 = vld [vmem:[%s218 + $0xe8] sm:$0xff]
        %v255 = vld [vmem:[%s218 + $0xf0] sm:$0xff]
        %v256 = vld [vmem:[%s218 + $0xf8] sm:$0xff]
        %v257 = vld [vmem:[%s218 + $0x100] sm:$0xff]
        %v258 = vld [vmem:[%s218 + $0x108] sm:$0xff]
        %v259 = vld [vmem:[%s218 + $0x110] sm:$0xff]
        %v260 = vld [vmem:[%s218 + $0x118] sm:$0xff]
        %v261 = vld [vmem:[%s1] sm:$0xf]
        %v262 = vld [vmem:[%s218 + $0x1] sm:$0xff]
        %v263 = vld [vmem:[%s218 + $0x9] sm:$0xff]
        %v264 = vld [vmem:[%s218 + $0x11] sm:$0xff]
        %v265 = vld [vmem:[%s218 + $0x19] sm:$0xff]
        %v266 = vld [vmem:[%s218 + $0x21] sm:$0xff]
        %v267 = vld [vmem:[%s218 + $0x29] sm:$0xff]
        %v268 = vld [vmem:[%s218 + $0x31] sm:$0xff]
        %v269 = vld [vmem:[%s218 + $0x39] sm:$0xff]
        %v270 = vld [vmem:[%s218 + $0x41] sm:$0xff]
        %v271 = vld [vmem:[%s218 + $0x49] sm:$0xff]
        %v272 = vld [vmem:[%s218 + $0x51] sm:$0xff]
        %v273 = vld [vmem:[%s218 + $0x59] sm:$0xff]
        %v274 = vld [vmem:[%s218 + $0x61] sm:$0xff]
        %v275 = vld [vmem:[%s218 + $0x69] sm:$0xff]
        %v276 = vld [vmem:[%s218 + $0x71] sm:$0xff]
        %v277 = vld [vmem:[%s218 + $0x79] sm:$0xff]
        %v278 = vld [vmem:[%s218 + $0x81] sm:$0xff]
        %v279 = vld [vmem:[%s218 + $0x89] sm:$0xff]
        %v280 = vld [vmem:[%s218 + $0x91] sm:$0xff]
        %v281 = vld [vmem:[%s218 + $0x99] sm:$0xff]
        %v282 = vld [vmem:[%s218 + $0xa1] sm:$0xff]
        %v283 = vld [vmem:[%s218 + $0xa9] sm:$0xff]
        %v284 = vld [vmem:[%s218 + $0xb1] sm:$0xff]
        %v285 = vld [vmem:[%s218 + $0xb9] sm:$0xff]
        %v286 = vld [vmem:[%s218 + $0xc1] sm:$0xff]
        %v287 = vld [vmem:[%s218 + $0xc9] sm:$0xff]
        %v288 = vld [vmem:[%s218 + $0xd1] sm:$0xff]
        %v289 = vld [vmem:[%s218 + $0xd9] sm:$0xff]
        %v290 = vld [vmem:[%s218 + $0xe1] sm:$0xff]
        %v291 = vld [vmem:[%s218 + $0xe9] sm:$0xff]
        %v292 = vld [vmem:[%s218 + $0xf1] sm:$0xff]
        %v293 = vld [vmem:[%s218 + $0xf9] sm:$0xff]
        %v294 = vld [vmem:[%s218 + $0x101] sm:$0xff]
        %v295 = vld [vmem:[%s218 + $0x109] sm:$0xff]
        %v296 = vld [vmem:[%s218 + $0x111] sm:$0xff]
        %v297 = vld [vmem:[%s218 + $0x119] sm:$0xff]
        %s298 = scalar_lea.vmem %s1, 4
        %v299 = vld [vmem:[%s298] sm:$0xf]
        %vm300 = vcmask 31744
        %v302 = vsel %vm300, %v262, 0
        %v305 = vsel %vm300, %v263, 0
        %v308 = vsel %vm300, %v264, 0
        %v311 = vsel %vm300, %v265, 0
        %v314 = vsel %vm300, %v266, 0
        %v317 = vsel %vm300, %v267, 0
        %v320 = vsel %vm300, %v268, 0
        %v323 = vsel %vm300, %v269, 0
        %v326 = vsel %vm300, %v270, 0
        %v329 = vsel %vm300, %v271, 0
        %v332 = vsel %vm300, %v272, 0
        %v335 = vsel %vm300, %v273, 0
        %v338 = vsel %vm300, %v274, 0
        %v341 = vsel %vm300, %v275, 0
        %v344 = vsel %vm300, %v276, 0
        %v347 = vsel %vm300, %v277, 0
        %v350 = vsel %vm300, %v278, 0
        %v353 = vsel %vm300, %v279, 0
        %v356 = vsel %vm300, %v280, 0
        %v359 = vsel %vm300, %v281, 0
        %v362 = vsel %vm300, %v282, 0
        %v365 = vsel %vm300, %v283, 0
        %v368 = vsel %vm300, %v284, 0
        %v371 = vsel %vm300, %v285, 0
        %v374 = vsel %vm300, %v286, 0
        %v377 = vsel %vm300, %v287, 0
        %v380 = vsel %vm300, %v288, 0
        %v383 = vsel %vm300, %v289, 0
        %v386 = vsel %vm300, %v290, 0
        %v389 = vsel %vm300, %v291, 0
        %v392 = vsel %vm300, %v292, 0
        %v395 = vsel %vm300, %v293, 0
        %v398 = vsel %vm300, %v294, 0
        %v401 = vsel %vm300, %v295, 0
        %v404 = vsel %vm300, %v296, 0
        %v407 = vsel %vm300, %v297, 0
        %vm409 = vcmask 1043456
        %v411 = vsel %vm409, %v299, 0
        %413 = vmatprep.subr.mxu0 0.0
        %414 = vmatpush1.msra.mxu0 0.0
        %415 = vmatprep.subr.mxu0 0.0
        %416 = vmatpush1.msra.mxu0 0.0
        %417 = vmatprep.subr.mxu0 0.0
        %418 = vmatpush1.msra.mxu0 0.0
        %419 = vmatprep.subr.mxu0 0.0
        %420 = vmatpush1.msra.mxu0 0.0
        %421 = vmatprep.subr.mxu0 0.0
        %422 = vmatpush1.msra.mxu0 0.0
        %423 = vmatprep.subr.mxu0 0.0
        %424 = vmatpush1.msra.mxu0 0.0
        %425 = vmatprep.subr.mxu0 0.0
        %426 = vmatpush1.msra.mxu0 0.0
        %427 = vmatprep.subr.mxu0 0.0
        %428 = vmatpush1.msra.mxu0 0.0
        %429 = vmatprep.subr.mxu0 0.0
        %430 = vmatpush1.msra.mxu0 0.0
        %431 = vmatprep.subr.mxu0 0.0
        %432 = vmatpush1.msra.mxu0 0.0
        %433 = vmatprep.subr.mxu0 0.0
        %434 = vmatpush1.msra.mxu0 0.0
        %435 = vmatprep.subr.mxu0 0.0
        %436 = vmatpush1.msra.mxu0 0.0
        %437 = vmatprep.subr.mxu0 0.0
        %438 = vmatpush1.msra.mxu0 0.0
        %439 = vmatprep.subr.mxu0 0.0
        %440 = vmatpush1.msra.mxu0 0.0
        %441 = vmatprep.subr.mxu0 0.0
        %442 = vmatpush1.msra.mxu0 0.0
        %443 = vmatprep.subr.mxu0 0.0
        %444 = vmatpush1.msra.mxu0 %v411
        %445 = vmatprep.subr.mxu0 0.0
        %446 = vmatpush2.msra.mxu0 0.0
        %447 = vmatprep.subr.mxu0 0.0
        %448 = vmatpush2.msra.mxu0 0.0
        %449 = vmatprep.subr.mxu0 0.0
        %450 = vmatpush2.msra.mxu0 0.0
        %451 = vmatprep.subr.mxu0 0.0
        %452 = vmatpush2.msra.mxu0 0.0
        %453 = vmatprep.subr.mxu0 0.0
        %454 = vmatpush2.msra.mxu0 0.0
        %455 = vmatprep.subr.mxu0 0.0
        %456 = vmatpush2.msra.mxu0 0.0
        %457 = vmatprep.subr.mxu0 0.0
        %458 = vmatpush2.msra.mxu0 0.0
        %459 = vmatprep.subr.mxu0 0.0
        %460 = vmatpush2.msra.mxu0 0.0
        %461 = vmatprep.subr.mxu0 0.0
        %462 = vmatpush2.msra.mxu0 0.0
        %463 = vmatprep.subr.mxu0 0.0
        %464 = vmatpush2.msra.mxu0 0.0
        %465 = vmatprep.subr.mxu0 0.0
        %466 = vmatpush2.msra.mxu0 0.0
        %467 = vmatprep.subr.mxu0 0.0
        %468 = vmatpush2.msra.mxu0 0.0
        %469 = vmatprep.subr.mxu0 0.0
        %470 = vmatpush2.msra.mxu0 0.0
        %471 = vmatprep.subr.mxu0 0.0
        %472 = vmatpush2.msra.mxu0 0.0
        %473 = vmatprep.subr.mxu0 0.0
        %474 = vmatpush2.msra.mxu0 0.0
        %475 = vmatprep.subr.mxu0 0.0
        %476 = vmatpush2.msra.mxu0 0.0
        %477 = vmatprep.mubr.f32.mxu0 0.0
        %478 = vmatmul.mubr.f32.gmra.mxu0 %v302
        %v479 = vpop.f32.mrf.mxu0
        %v480 = vadd.f32 0.0, %v479
        %v481 = vpop.f32.mrf.mxu0
        %482 = vmatprep.mubr.f32.mxu0 0.0
        %483 = vmatmul.mubr.f32.gmra.mxu0 %v305
        %v484 = vpop.f32.mrf.mxu0
        %v485 = vadd.f32 0.0, %v484
        %v486 = vpop.f32.mrf.mxu0
        %487 = vmatprep.mubr.f32.mxu0 0.0
        %488 = vmatmul.mubr.f32.gmra.mxu0 %v308
        %v489 = vpop.f32.mrf.mxu0
        %v490 = vadd.f32 0.0, %v489
        %v491 = vpop.f32.mrf.mxu0
        %492 = vmatprep.mubr.f32.mxu0 0.0
        %493 = vmatmul.mubr.f32.gmra.mxu0 %v311
        %v494 = vpop.f32.mrf.mxu0
        %v495 = vadd.f32 0.0, %v494
        %v496 = vpop.f32.mrf.mxu0
        %497 = vmatprep.mubr.f32.mxu0 0.0
        %498 = vmatmul.mubr.f32.gmra.mxu0 %v314
        %v499 = vpop.f32.mrf.mxu0
        %v500 = vadd.f32 0.0, %v499
        %v501 = vpop.f32.mrf.mxu0
        %502 = vmatprep.mubr.f32.mxu0 0.0
        %503 = vmatmul.mubr.f32.gmra.mxu0 %v317
        %v504 = vpop.f32.mrf.mxu0
        %v505 = vadd.f32 0.0, %v504
        %v506 = vpop.f32.mrf.mxu0
        %507 = vmatprep.mubr.f32.mxu0 0.0
        %508 = vmatmul.mubr.f32.gmra.mxu0 %v320
        %v509 = vpop.f32.mrf.mxu0
        %v510 = vadd.f32 0.0, %v509
        %v511 = vpop.f32.mrf.mxu0
        %512 = vmatprep.mubr.f32.mxu0 0.0
        %513 = vmatmul.mubr.f32.gmra.mxu0 %v323
        %v514 = vpop.f32.mrf.mxu0
        %v515 = vadd.f32 0.0, %v514
        %v516 = vpop.f32.mrf.mxu0
        %517 = vmatprep.mubr.f32.mxu0 0.0
        %518 = vmatmul.mubr.f32.gmra.mxu0 %v326
        %v519 = vpop.f32.mrf.mxu0
        %v520 = vadd.f32 0.0, %v519
        %v521 = vpop.f32.mrf.mxu0
        %522 = vmatprep.mubr.f32.mxu0 0.0
        %523 = vmatmul.mubr.f32.gmra.mxu0 %v329
        %v524 = vpop.f32.mrf.mxu0
        %v525 = vadd.f32 0.0, %v524
        %v526 = vpop.f32.mrf.mxu0
        %527 = vmatprep.mubr.f32.mxu0 0.0
        %528 = vmatmul.mubr.f32.gmra.mxu0 %v332
        %v529 = vpop.f32.mrf.mxu0
        %v530 = vadd.f32 0.0, %v529
        %v531 = vpop.f32.mrf.mxu0
        %532 = vmatprep.mubr.f32.mxu0 0.0
        %533 = vmatmul.mubr.f32.gmra.mxu0 %v335
        %v534 = vpop.f32.mrf.mxu0
        %v535 = vadd.f32 0.0, %v534
        %v536 = vpop.f32.mrf.mxu0
        %537 = vmatprep.mubr.f32.mxu0 0.0
        %538 = vmatmul.mubr.f32.gmra.mxu0 %v338
        %v539 = vpop.f32.mrf.mxu0
        %v540 = vadd.f32 0.0, %v539
        %v541 = vpop.f32.mrf.mxu0
        %542 = vmatprep.mubr.f32.mxu0 0.0
        %543 = vmatmul.mubr.f32.gmra.mxu0 %v341
        %v544 = vpop.f32.mrf.mxu0
        %v545 = vadd.f32 0.0, %v544
        %v546 = vpop.f32.mrf.mxu0
        %547 = vmatprep.mubr.f32.mxu0 0.0
        %548 = vmatmul.mubr.f32.gmra.mxu0 %v344
        %v549 = vpop.f32.mrf.mxu0
        %v550 = vadd.f32 0.0, %v549
        %v551 = vpop.f32.mrf.mxu0
        %552 = vmatprep.mubr.f32.mxu0 0.0
        %553 = vmatmul.mubr.f32.gmra.mxu0 %v347
        %v554 = vpop.f32.mrf.mxu0
        %v555 = vadd.f32 0.0, %v554
        %v556 = vpop.f32.mrf.mxu0
        %557 = vmatprep.mubr.f32.mxu0 0.0
        %558 = vmatmul.mubr.f32.gmra.mxu0 %v350
        %v559 = vpop.f32.mrf.mxu0
        %v560 = vadd.f32 0.0, %v559
        %v561 = vpop.f32.mrf.mxu0
        %562 = vmatprep.mubr.f32.mxu0 0.0
        %563 = vmatmul.mubr.f32.gmra.mxu0 %v353
        %v564 = vpop.f32.mrf.mxu0
        %v565 = vadd.f32 0.0, %v564
        %v566 = vpop.f32.mrf.mxu0
        %567 = vmatprep.mubr.f32.mxu0 0.0
        %568 = vmatmul.mubr.f32.gmra.mxu0 %v356
        %v569 = vpop.f32.mrf.mxu0
        %v570 = vadd.f32 0.0, %v569
        %v571 = vpop.f32.mrf.mxu0
        %572 = vmatprep.mubr.f32.mxu0 0.0
        %573 = vmatmul.mubr.f32.gmra.mxu0 %v359
        %v574 = vpop.f32.mrf.mxu0
        %v575 = vadd.f32 0.0, %v574
        %v576 = vpop.f32.mrf.mxu0
        %577 = vmatprep.mubr.f32.mxu0 0.0
        %578 = vmatmul.mubr.f32.gmra.mxu0 %v362
        %v579 = vpop.f32.mrf.mxu0
        %v580 = vadd.f32 0.0, %v579
        %v581 = vpop.f32.mrf.mxu0
        %582 = vmatprep.mubr.f32.mxu0 0.0
        %583 = vmatmul.mubr.f32.gmra.mxu0 %v365
        %v584 = vpop.f32.mrf.mxu0
        %v585 = vadd.f32 0.0, %v584
        %v586 = vpop.f32.mrf.mxu0
        %587 = vmatprep.mubr.f32.mxu0 0.0
        %588 = vmatmul.mubr.f32.gmra.mxu0 %v368
        %v589 = vpop.f32.mrf.mxu0
        %v590 = vadd.f32 0.0, %v589
        %v591 = vpop.f32.mrf.mxu0
        %592 = vmatprep.mubr.f32.mxu0 0.0
        %593 = vmatmul.mubr.f32.gmra.mxu0 %v371
        %v594 = vpop.f32.mrf.mxu0
        %v595 = vadd.f32 0.0, %v594
        %v596 = vpop.f32.mrf.mxu0
        %597 = vmatprep.mubr.f32.mxu0 0.0
        %598 = vmatmul.mubr.f32.gmra.mxu0 %v374
        %v599 = vpop.f32.mrf.mxu0
        %v600 = vadd.f32 0.0, %v599
        %v601 = vpop.f32.mrf.mxu0
        %602 = vmatprep.mubr.f32.mxu0 0.0
        %603 = vmatmul.mubr.f32.gmra.mxu0 %v377
        %v604 = vpop.f32.mrf.mxu0
        %v605 = vadd.f32 0.0, %v604
        %v606 = vpop.f32.mrf.mxu0
        %607 = vmatprep.mubr.f32.mxu0 0.0
        %608 = vmatmul.mubr.f32.gmra.mxu0 %v380
        %v609 = vpop.f32.mrf.mxu0
        %v610 = vadd.f32 0.0, %v609
        %v611 = vpop.f32.mrf.mxu0
        %612 = vmatprep.mubr.f32.mxu0 0.0
        %613 = vmatmul.mubr.f32.gmra.mxu0 %v383
        %v614 = vpop.f32.mrf.mxu0
        %v615 = vadd.f32 0.0, %v614
        %v616 = vpop.f32.mrf.mxu0
        %617 = vmatprep.mubr.f32.mxu0 0.0
        %618 = vmatmul.mubr.f32.gmra.mxu0 %v386
        %v619 = vpop.f32.mrf.mxu0
        %v620 = vadd.f32 0.0, %v619
        %v621 = vpop.f32.mrf.mxu0
        %622 = vmatprep.mubr.f32.mxu0 0.0
        %623 = vmatmul.mubr.f32.gmra.mxu0 %v389
        %v624 = vpop.f32.mrf.mxu0
        %v625 = vadd.f32 0.0, %v624
        %v626 = vpop.f32.mrf.mxu0
        %627 = vmatprep.mubr.f32.mxu0 0.0
        %628 = vmatmul.mubr.f32.gmra.mxu0 %v392
        %v629 = vpop.f32.mrf.mxu0
        %v630 = vadd.f32 0.0, %v629
        %v631 = vpop.f32.mrf.mxu0
        %632 = vmatprep.mubr.f32.mxu0 0.0
        %633 = vmatmul.mubr.f32.gmra.mxu0 %v395
        %v634 = vpop.f32.mrf.mxu0
        %v635 = vadd.f32 0.0, %v634
        %v636 = vpop.f32.mrf.mxu0
        %637 = vmatprep.mubr.f32.mxu0 0.0
        %638 = vmatmul.mubr.f32.gmra.mxu0 %v398
        %v639 = vpop.f32.mrf.mxu0
        %v640 = vadd.f32 0.0, %v639
        %v641 = vpop.f32.mrf.mxu0
        %642 = vmatprep.mubr.f32.mxu0 0.0
        %643 = vmatmul.mubr.f32.gmra.mxu0 %v401
        %v644 = vpop.f32.mrf.mxu0
        %v645 = vadd.f32 0.0, %v644
        %v646 = vpop.f32.mrf.mxu0
        %647 = vmatprep.mubr.f32.mxu0 0.0
        %648 = vmatmul.mubr.f32.gmra.mxu0 %v404
        %v649 = vpop.f32.mrf.mxu0
        %v650 = vadd.f32 0.0, %v649
        %v651 = vpop.f32.mrf.mxu0
        %652 = vmatprep.mubr.f32.mxu0 0.0
        %653 = vmatmul.mubr.f32.gmra.mxu0 %v407
        %v654 = vpop.f32.mrf.mxu0
        %v655 = vadd.f32 0.0, %v654
        %v656 = vpop.f32.mrf.mxu0
        %657 = vdwg.mxu0
        %v659 = vsel %vm300, %v225, 0
        %v662 = vsel %vm300, %v226, 0
        %v665 = vsel %vm300, %v227, 0
        %v668 = vsel %vm300, %v228, 0
        %v671 = vsel %vm300, %v229, 0
        %v674 = vsel %vm300, %v230, 0
        %v677 = vsel %vm300, %v231, 0
        %v680 = vsel %vm300, %v232, 0
        %v683 = vsel %vm300, %v233, 0
        %v686 = vsel %vm300, %v234, 0
        %v689 = vsel %vm300, %v235, 0
        %v692 = vsel %vm300, %v236, 0
        %v695 = vsel %vm300, %v237, 0
        %v698 = vsel %vm300, %v238, 0
        %v701 = vsel %vm300, %v239, 0
        %v704 = vsel %vm300, %v240, 0
        %v707 = vsel %vm300, %v241, 0
        %v710 = vsel %vm300, %v242, 0
        %v713 = vsel %vm300, %v243, 0
        %v716 = vsel %vm300, %v244, 0
        %v719 = vsel %vm300, %v245, 0
        %v722 = vsel %vm300, %v246, 0
        %v725 = vsel %vm300, %v247, 0
        %v728 = vsel %vm300, %v248, 0
        %v731 = vsel %vm300, %v249, 0
        %v734 = vsel %vm300, %v250, 0
        %v737 = vsel %vm300, %v251, 0
        %v740 = vsel %vm300, %v252, 0
        %v743 = vsel %vm300, %v253, 0
        %v746 = vsel %vm300, %v254, 0
        %v749 = vsel %vm300, %v255, 0
        %v752 = vsel %vm300, %v256, 0
        %v755 = vsel %vm300, %v257, 0
        %v758 = vsel %vm300, %v258, 0
        %v761 = vsel %vm300, %v259, 0
        %v764 = vsel %vm300, %v260, 0
        %v767 = vsel %vm409, %v261, 0
        %769 = vmatprep.subr.mxu0 0.0
        %770 = vmatpush1.msra.mxu0 0.0
        %771 = vmatprep.subr.mxu0 0.0
        %772 = vmatpush1.msra.mxu0 0.0
        %773 = vmatprep.subr.mxu0 0.0
        %774 = vmatpush1.msra.mxu0 0.0
        %775 = vmatprep.subr.mxu0 0.0
        %776 = vmatpush1.msra.mxu0 0.0
        %777 = vmatprep.subr.mxu0 0.0
        %778 = vmatpush1.msra.mxu0 0.0
        %779 = vmatprep.subr.mxu0 0.0
        %780 = vmatpush1.msra.mxu0 0.0
        %781 = vmatprep.subr.mxu0 0.0
        %782 = vmatpush1.msra.mxu0 0.0
        %783 = vmatprep.subr.mxu0 0.0
        %784 = vmatpush1.msra.mxu0 0.0
        %785 = vmatprep.subr.mxu0 0.0
        %786 = vmatpush1.msra.mxu0 0.0
        %787 = vmatprep.subr.mxu0 0.0
        %788 = vmatpush1.msra.mxu0 0.0
        %789 = vmatprep.subr.mxu0 0.0
        %790 = vmatpush1.msra.mxu0 0.0
        %791 = vmatprep.subr.mxu0 0.0
        %792 = vmatpush1.msra.mxu0 0.0
        %793 = vmatprep.subr.mxu0 0.0
        %794 = vmatpush1.msra.mxu0 0.0
        %795 = vmatprep.subr.mxu0 0.0
        %796 = vmatpush1.msra.mxu0 0.0
        %797 = vmatprep.subr.mxu0 0.0
        %798 = vmatpush1.msra.mxu0 0.0
        %799 = vmatprep.subr.mxu0 0.0
        %800 = vmatpush1.msra.mxu0 %v767
        %801 = vmatprep.subr.mxu0 0.0
        %802 = vmatpush2.msra.mxu0 0.0
        %803 = vmatprep.subr.mxu0 0.0
        %804 = vmatpush2.msra.mxu0 0.0
        %805 = vmatprep.subr.mxu0 0.0
        %806 = vmatpush2.msra.mxu0 0.0
        %807 = vmatprep.subr.mxu0 0.0
        %808 = vmatpush2.msra.mxu0 0.0
        %809 = vmatprep.subr.mxu0 0.0
        %810 = vmatpush2.msra.mxu0 0.0
        %811 = vmatprep.subr.mxu0 0.0
        %812 = vmatpush2.msra.mxu0 0.0
        %813 = vmatprep.subr.mxu0 0.0
        %814 = vmatpush2.msra.mxu0 0.0
        %815 = vmatprep.subr.mxu0 0.0
        %816 = vmatpush2.msra.mxu0 0.0
        %817 = vmatprep.subr.mxu0 0.0
        %818 = vmatpush2.msra.mxu0 0.0
        %819 = vmatprep.subr.mxu0 0.0
        %820 = vmatpush2.msra.mxu0 0.0
        %821 = vmatprep.subr.mxu0 0.0
        %822 = vmatpush2.msra.mxu0 0.0
        %823 = vmatprep.subr.mxu0 0.0
        %824 = vmatpush2.msra.mxu0 0.0
        %825 = vmatprep.subr.mxu0 0.0
        %826 = vmatpush2.msra.mxu0 0.0
        %827 = vmatprep.subr.mxu0 0.0
        %828 = vmatpush2.msra.mxu0 0.0
        %829 = vmatprep.subr.mxu0 0.0
        %830 = vmatpush2.msra.mxu0 0.0
        %831 = vmatprep.subr.mxu0 0.0
        %832 = vmatpush2.msra.mxu0 0.0
        %833 = vmatprep.mubr.f32.mxu0 0.0
        %834 = vmatmul.mubr.f32.gmra.mxu0 %v659
        %v835 = vpop.f32.mrf.mxu0
        %v836 = vadd.f32 %v480, %v835
        %v837 = vpop.f32.mrf.mxu0
        %838 = vmatprep.mubr.f32.mxu0 0.0
        %839 = vmatmul.mubr.f32.gmra.mxu0 %v662
        %v840 = vpop.f32.mrf.mxu0
        %v841 = vadd.f32 %v485, %v840
        %v842 = vpop.f32.mrf.mxu0
        %843 = vmatprep.mubr.f32.mxu0 0.0
        %844 = vmatmul.mubr.f32.gmra.mxu0 %v665
        %v845 = vpop.f32.mrf.mxu0
        %v846 = vadd.f32 %v490, %v845
        %v847 = vpop.f32.mrf.mxu0
        %848 = vmatprep.mubr.f32.mxu0 0.0
        %849 = vmatmul.mubr.f32.gmra.mxu0 %v668
        %v850 = vpop.f32.mrf.mxu0
        %v851 = vadd.f32 %v495, %v850
        %v852 = vpop.f32.mrf.mxu0
        %853 = vmatprep.mubr.f32.mxu0 0.0
        %854 = vmatmul.mubr.f32.gmra.mxu0 %v671
        %v855 = vpop.f32.mrf.mxu0
        %v856 = vadd.f32 %v500, %v855
        %v857 = vpop.f32.mrf.mxu0
        %858 = vmatprep.mubr.f32.mxu0 0.0
        %859 = vmatmul.mubr.f32.gmra.mxu0 %v674
        %v860 = vpop.f32.mrf.mxu0
        %v861 = vadd.f32 %v505, %v860
        %v862 = vpop.f32.mrf.mxu0
        %863 = vmatprep.mubr.f32.mxu0 0.0
        %864 = vmatmul.mubr.f32.gmra.mxu0 %v677
        %v865 = vpop.f32.mrf.mxu0
        %v866 = vadd.f32 %v510, %v865
        %v867 = vpop.f32.mrf.mxu0
        %868 = vmatprep.mubr.f32.mxu0 0.0
        %869 = vmatmul.mubr.f32.gmra.mxu0 %v680
        %v870 = vpop.f32.mrf.mxu0
        %v871 = vadd.f32 %v515, %v870
        %v872 = vpop.f32.mrf.mxu0
        %873 = vmatprep.mubr.f32.mxu0 0.0
        %874 = vmatmul.mubr.f32.gmra.mxu0 %v683
        %v875 = vpop.f32.mrf.mxu0
        %v876 = vadd.f32 %v520, %v875
        %v877 = vpop.f32.mrf.mxu0
        %878 = vmatprep.mubr.f32.mxu0 0.0
        %879 = vmatmul.mubr.f32.gmra.mxu0 %v686
        %v880 = vpop.f32.mrf.mxu0
        %v881 = vadd.f32 %v525, %v880
        %v882 = vpop.f32.mrf.mxu0
        %883 = vmatprep.mubr.f32.mxu0 0.0
        %884 = vmatmul.mubr.f32.gmra.mxu0 %v689
        %v885 = vpop.f32.mrf.mxu0
        %v886 = vadd.f32 %v530, %v885
        %v887 = vpop.f32.mrf.mxu0
        %888 = vmatprep.mubr.f32.mxu0 0.0
        %889 = vmatmul.mubr.f32.gmra.mxu0 %v692
        %v890 = vpop.f32.mrf.mxu0
        %v891 = vadd.f32 %v535, %v890
        %v892 = vpop.f32.mrf.mxu0
        %893 = vmatprep.mubr.f32.mxu0 0.0
        %894 = vmatmul.mubr.f32.gmra.mxu0 %v695
        %v895 = vpop.f32.mrf.mxu0
        %v896 = vadd.f32 %v540, %v895
        %v897 = vpop.f32.mrf.mxu0
        %898 = vmatprep.mubr.f32.mxu0 0.0
        %899 = vmatmul.mubr.f32.gmra.mxu0 %v698
        %v900 = vpop.f32.mrf.mxu0
        %v901 = vadd.f32 %v545, %v900
        %v902 = vpop.f32.mrf.mxu0
        %903 = vmatprep.mubr.f32.mxu0 0.0
        %904 = vmatmul.mubr.f32.gmra.mxu0 %v701
        %v905 = vpop.f32.mrf.mxu0
        %v906 = vadd.f32 %v550, %v905
        %v907 = vpop.f32.mrf.mxu0
        %908 = vmatprep.mubr.f32.mxu0 0.0
        %909 = vmatmul.mubr.f32.gmra.mxu0 %v704
        %v910 = vpop.f32.mrf.mxu0
        %v911 = vadd.f32 %v555, %v910
        %v912 = vpop.f32.mrf.mxu0
        %913 = vmatprep.mubr.f32.mxu0 0.0
        %914 = vmatmul.mubr.f32.gmra.mxu0 %v707
        %v915 = vpop.f32.mrf.mxu0
        %v916 = vadd.f32 %v560, %v915
        %v917 = vpop.f32.mrf.mxu0
        %918 = vmatprep.mubr.f32.mxu0 0.0
        %919 = vmatmul.mubr.f32.gmra.mxu0 %v710
        %v920 = vpop.f32.mrf.mxu0
        %v921 = vadd.f32 %v565, %v920
        %v922 = vpop.f32.mrf.mxu0
        %923 = vmatprep.mubr.f32.mxu0 0.0
        %924 = vmatmul.mubr.f32.gmra.mxu0 %v713
        %v925 = vpop.f32.mrf.mxu0
        %v926 = vadd.f32 %v570, %v925
        %v927 = vpop.f32.mrf.mxu0
        %928 = vmatprep.mubr.f32.mxu0 0.0
        %929 = vmatmul.mubr.f32.gmra.mxu0 %v716
        %v930 = vpop.f32.mrf.mxu0
        %v931 = vadd.f32 %v575, %v930
        %v932 = vpop.f32.mrf.mxu0
        %933 = vmatprep.mubr.f32.mxu0 0.0
        %934 = vmatmul.mubr.f32.gmra.mxu0 %v719
        %v935 = vpop.f32.mrf.mxu0
        %v936 = vadd.f32 %v580, %v935
        %v937 = vpop.f32.mrf.mxu0
        %938 = vmatprep.mubr.f32.mxu0 0.0
        %939 = vmatmul.mubr.f32.gmra.mxu0 %v722
        %v940 = vpop.f32.mrf.mxu0
        %v941 = vadd.f32 %v585, %v940
        %v942 = vpop.f32.mrf.mxu0
        %943 = vmatprep.mubr.f32.mxu0 0.0
        %944 = vmatmul.mubr.f32.gmra.mxu0 %v725
        %v945 = vpop.f32.mrf.mxu0
        %v946 = vadd.f32 %v590, %v945
        %v947 = vpop.f32.mrf.mxu0
        %948 = vmatprep.mubr.f32.mxu0 0.0
        %949 = vmatmul.mubr.f32.gmra.mxu0 %v728
        %v950 = vpop.f32.mrf.mxu0
        %v951 = vadd.f32 %v595, %v950
        %v952 = vpop.f32.mrf.mxu0
        %953 = vmatprep.mubr.f32.mxu0 0.0
        %954 = vmatmul.mubr.f32.gmra.mxu0 %v731
        %v955 = vpop.f32.mrf.mxu0
        %v956 = vadd.f32 %v600, %v955
        %v957 = vpop.f32.mrf.mxu0
        %958 = vmatprep.mubr.f32.mxu0 0.0
        %959 = vmatmul.mubr.f32.gmra.mxu0 %v734
        %v960 = vpop.f32.mrf.mxu0
        %v961 = vadd.f32 %v605, %v960
        %v962 = vpop.f32.mrf.mxu0
        %963 = vmatprep.mubr.f32.mxu0 0.0
        %964 = vmatmul.mubr.f32.gmra.mxu0 %v737
        %v965 = vpop.f32.mrf.mxu0
        %v966 = vadd.f32 %v610, %v965
        %v967 = vpop.f32.mrf.mxu0
        %968 = vmatprep.mubr.f32.mxu0 0.0
        %969 = vmatmul.mubr.f32.gmra.mxu0 %v740
        %v970 = vpop.f32.mrf.mxu0
        %v971 = vadd.f32 %v615, %v970
        %v972 = vpop.f32.mrf.mxu0
        %973 = vmatprep.mubr.f32.mxu0 0.0
        %974 = vmatmul.mubr.f32.gmra.mxu0 %v743
        %v975 = vpop.f32.mrf.mxu0
        %v976 = vadd.f32 %v620, %v975
        %v977 = vpop.f32.mrf.mxu0
        %978 = vmatprep.mubr.f32.mxu0 0.0
        %979 = vmatmul.mubr.f32.gmra.mxu0 %v746
        %v980 = vpop.f32.mrf.mxu0
        %v981 = vadd.f32 %v625, %v980
        %v982 = vpop.f32.mrf.mxu0
        %983 = vmatprep.mubr.f32.mxu0 0.0
        %984 = vmatmul.mubr.f32.gmra.mxu0 %v749
        %v985 = vpop.f32.mrf.mxu0
        %v986 = vadd.f32 %v630, %v985
        %v987 = vpop.f32.mrf.mxu0
        %988 = vmatprep.mubr.f32.mxu0 0.0
        %989 = vmatmul.mubr.f32.gmra.mxu0 %v752
        %v990 = vpop.f32.mrf.mxu0
        %v991 = vadd.f32 %v635, %v990
        %v992 = vpop.f32.mrf.mxu0
        %993 = vmatprep.mubr.f32.mxu0 0.0
        %994 = vmatmul.mubr.f32.gmra.mxu0 %v755
        %v995 = vpop.f32.mrf.mxu0
        %v996 = vadd.f32 %v640, %v995
        %v997 = vpop.f32.mrf.mxu0
        %998 = vmatprep.mubr.f32.mxu0 0.0
        %999 = vmatmul.mubr.f32.gmra.mxu0 %v758
        %v1000 = vpop.f32.mrf.mxu0
        %v1001 = vadd.f32 %v645, %v1000
        %v1002 = vpop.f32.mrf.mxu0
        %1003 = vmatprep.mubr.f32.mxu0 0.0
        %1004 = vmatmul.mubr.f32.gmra.mxu0 %v761
        %v1005 = vpop.f32.mrf.mxu0
        %v1006 = vadd.f32 %v650, %v1005
        %v1007 = vpop.f32.mrf.mxu0
        %1008 = vmatprep.mubr.f32.mxu0 0.0
        %1009 = vmatmul.mubr.f32.gmra.mxu0 %v764
        %v1010 = vpop.f32.mrf.mxu0
        %v1011 = vadd.f32 %v655, %v1010
        %v1012 = vpop.f32.mrf.mxu0
        %1013 = vdwg.mxu0
        %v1014 = vld [vmem:[%s218 + $0x2] sm:$0xff]
        %v1015 = vld [vmem:[%s218 + $0xa] sm:$0xff]
        %v1016 = vld [vmem:[%s218 + $0x12] sm:$0xff]
        %v1017 = vld [vmem:[%s218 + $0x1a] sm:$0xff]
        %v1018 = vld [vmem:[%s218 + $0x22] sm:$0xff]
        %v1019 = vld [vmem:[%s218 + $0x2a] sm:$0xff]
        %v1020 = vld [vmem:[%s218 + $0x32] sm:$0xff]
        %v1021 = vld [vmem:[%s218 + $0x3a] sm:$0xff]
        %v1022 = vld [vmem:[%s218 + $0x42] sm:$0xff]
        %v1023 = vld [vmem:[%s218 + $0x4a] sm:$0xff]
        %v1024 = vld [vmem:[%s218 + $0x52] sm:$0xff]
        %v1025 = vld [vmem:[%s218 + $0x5a] sm:$0xff]
        %v1026 = vld [vmem:[%s218 + $0x62] sm:$0xff]
        %v1027 = vld [vmem:[%s218 + $0x6a] sm:$0xff]
        %v1028 = vld [vmem:[%s218 + $0x72] sm:$0xff]
        %v1029 = vld [vmem:[%s218 + $0x7a] sm:$0xff]
        %v1030 = vld [vmem:[%s218 + $0x82] sm:$0xff]
        %v1031 = vld [vmem:[%s218 + $0x8a] sm:$0xff]
        %v1032 = vld [vmem:[%s218 + $0x92] sm:$0xff]
        %v1033 = vld [vmem:[%s218 + $0x9a] sm:$0xff]
        %v1034 = vld [vmem:[%s218 + $0xa2] sm:$0xff]
        %v1035 = vld [vmem:[%s218 + $0xaa] sm:$0xff]
        %v1036 = vld [vmem:[%s218 + $0xb2] sm:$0xff]
        %v1037 = vld [vmem:[%s218 + $0xba] sm:$0xff]
        %v1038 = vld [vmem:[%s218 + $0xc2] sm:$0xff]
        %v1039 = vld [vmem:[%s218 + $0xca] sm:$0xff]
        %v1040 = vld [vmem:[%s218 + $0xd2] sm:$0xff]
        %v1041 = vld [vmem:[%s218 + $0xda] sm:$0xff]
        %v1042 = vld [vmem:[%s218 + $0xe2] sm:$0xff]
        %v1043 = vld [vmem:[%s218 + $0xea] sm:$0xff]
        %v1044 = vld [vmem:[%s218 + $0xf2] sm:$0xff]
        %v1045 = vld [vmem:[%s218 + $0xfa] sm:$0xff]
        %v1046 = vld [vmem:[%s218 + $0x102] sm:$0xff]
        %v1047 = vld [vmem:[%s218 + $0x10a] sm:$0xff]
        %v1048 = vld [vmem:[%s218 + $0x112] sm:$0xff]
        %v1049 = vld [vmem:[%s218 + $0x11a] sm:$0xff]
        %s1050 = scalar_lea.vmem %s1, 8
        %v1051 = vld [vmem:[%s1050] sm:$0xf]
        %v1053 = vsel %vm300, %v1014, 0
        %v1056 = vsel %vm300, %v1015, 0
        %v1059 = vsel %vm300, %v1016, 0
        %v1062 = vsel %vm300, %v1017, 0
        %v1065 = vsel %vm300, %v1018, 0
        %v1068 = vsel %vm300, %v1019, 0
        %v1071 = vsel %vm300, %v1020, 0
        %v1074 = vsel %vm300, %v1021, 0
        %v1077 = vsel %vm300, %v1022, 0
        %v1080 = vsel %vm300, %v1023, 0
        %v1083 = vsel %vm300, %v1024, 0
        %v1086 = vsel %vm300, %v1025, 0
        %v1089 = vsel %vm300, %v1026, 0
        %v1092 = vsel %vm300, %v1027, 0
        %v1095 = vsel %vm300, %v1028, 0
        %v1098 = vsel %vm300, %v1029, 0
        %v1101 = vsel %vm300, %v1030, 0
        %v1104 = vsel %vm300, %v1031, 0
        %v1107 = vsel %vm300, %v1032, 0
        %v1110 = vsel %vm300, %v1033, 0
        %v1113 = vsel %vm300, %v1034, 0
        %v1116 = vsel %vm300, %v1035, 0
        %v1119 = vsel %vm300, %v1036, 0
        %v1122 = vsel %vm300, %v1037, 0
        %v1125 = vsel %vm300, %v1038, 0
        %v1128 = vsel %vm300, %v1039, 0
        %v1131 = vsel %vm300, %v1040, 0
        %v1134 = vsel %vm300, %v1041, 0
        %v1137 = vsel %vm300, %v1042, 0
        %v1140 = vsel %vm300, %v1043, 0
        %v1143 = vsel %vm300, %v1044, 0
        %v1146 = vsel %vm300, %v1045, 0
        %v1149 = vsel %vm300, %v1046, 0
        %v1152 = vsel %vm300, %v1047, 0
        %v1155 = vsel %vm300, %v1048, 0
        %v1158 = vsel %vm300, %v1049, 0
        %v1161 = vsel %vm409, %v1051, 0
        %1163 = vmatprep.subr.mxu0 0.0
        %1164 = vmatpush1.msra.mxu0 0.0
        %1165 = vmatprep.subr.mxu0 0.0
        %1166 = vmatpush1.msra.mxu0 0.0
        %1167 = vmatprep.subr.mxu0 0.0
        %1168 = vmatpush1.msra.mxu0 0.0
        %1169 = vmatprep.subr.mxu0 0.0
        %1170 = vmatpush1.msra.mxu0 0.0
        %1171 = vmatprep.subr.mxu0 0.0
        %1172 = vmatpush1.msra.mxu0 0.0
        %1173 = vmatprep.subr.mxu0 0.0
        %1174 = vmatpush1.msra.mxu0 0.0
        %1175 = vmatprep.subr.mxu0 0.0
        %1176 = vmatpush1.msra.mxu0 0.0
        %1177 = vmatprep.subr.mxu0 0.0
        %1178 = vmatpush1.msra.mxu0 0.0
        %1179 = vmatprep.subr.mxu0 0.0
        %1180 = vmatpush1.msra.mxu0 0.0
        %1181 = vmatprep.subr.mxu0 0.0
        %1182 = vmatpush1.msra.mxu0 0.0
        %1183 = vmatprep.subr.mxu0 0.0
        %1184 = vmatpush1.msra.mxu0 0.0
        %1185 = vmatprep.subr.mxu0 0.0
        %1186 = vmatpush1.msra.mxu0 0.0
        %1187 = vmatprep.subr.mxu0 0.0
        %1188 = vmatpush1.msra.mxu0 0.0
        %1189 = vmatprep.subr.mxu0 0.0
        %1190 = vmatpush1.msra.mxu0 0.0
        %1191 = vmatprep.subr.mxu0 0.0
        %1192 = vmatpush1.msra.mxu0 0.0
        %1193 = vmatprep.subr.mxu0 0.0
        %1194 = vmatpush1.msra.mxu0 %v1161
        %1195 = vmatprep.subr.mxu0 0.0
        %1196 = vmatpush2.msra.mxu0 0.0
        %1197 = vmatprep.subr.mxu0 0.0
        %1198 = vmatpush2.msra.mxu0 0.0
        %1199 = vmatprep.subr.mxu0 0.0
        %1200 = vmatpush2.msra.mxu0 0.0
        %1201 = vmatprep.subr.mxu0 0.0
        %1202 = vmatpush2.msra.mxu0 0.0
        %1203 = vmatprep.subr.mxu0 0.0
        %1204 = vmatpush2.msra.mxu0 0.0
        %1205 = vmatprep.subr.mxu0 0.0
        %1206 = vmatpush2.msra.mxu0 0.0
        %1207 = vmatprep.subr.mxu0 0.0
        %1208 = vmatpush2.msra.mxu0 0.0
        %1209 = vmatprep.subr.mxu0 0.0
        %1210 = vmatpush2.msra.mxu0 0.0
        %1211 = vmatprep.subr.mxu0 0.0
        %1212 = vmatpush2.msra.mxu0 0.0
        %1213 = vmatprep.subr.mxu0 0.0
        %1214 = vmatpush2.msra.mxu0 0.0
        %1215 = vmatprep.subr.mxu0 0.0
        %1216 = vmatpush2.msra.mxu0 0.0
        %1217 = vmatprep.subr.mxu0 0.0
        %1218 = vmatpush2.msra.mxu0 0.0
        %1219 = vmatprep.subr.mxu0 0.0
        %1220 = vmatpush2.msra.mxu0 0.0
        %1221 = vmatprep.subr.mxu0 0.0
        %1222 = vmatpush2.msra.mxu0 0.0
        %1223 = vmatprep.subr.mxu0 0.0
        %1224 = vmatpush2.msra.mxu0 0.0
        %1225 = vmatprep.subr.mxu0 0.0
        %1226 = vmatpush2.msra.mxu0 0.0
        %1227 = vmatprep.mubr.f32.mxu0 0.0
        %1228 = vmatmul.mubr.f32.gmra.mxu0 %v1053
        %v1229 = vpop.f32.mrf.mxu0
        %v1230 = vadd.f32 0.0, %v1229
        %v1231 = vpop.f32.mrf.mxu0
        %1232 = vmatprep.mubr.f32.mxu0 0.0
        %1233 = vmatmul.mubr.f32.gmra.mxu0 %v1056
        %v1234 = vpop.f32.mrf.mxu0
        %v1235 = vadd.f32 0.0, %v1234
        %v1236 = vpop.f32.mrf.mxu0
        %1237 = vmatprep.mubr.f32.mxu0 0.0
        %1238 = vmatmul.mubr.f32.gmra.mxu0 %v1059
        %v1239 = vpop.f32.mrf.mxu0
        %v1240 = vadd.f32 0.0, %v1239
        %v1241 = vpop.f32.mrf.mxu0
        %1242 = vmatprep.mubr.f32.mxu0 0.0
        %1243 = vmatmul.mubr.f32.gmra.mxu0 %v1062
        %v1244 = vpop.f32.mrf.mxu0
        %v1245 = vadd.f32 0.0, %v1244
        %v1246 = vpop.f32.mrf.mxu0
        %1247 = vmatprep.mubr.f32.mxu0 0.0
        %1248 = vmatmul.mubr.f32.gmra.mxu0 %v1065
        %v1249 = vpop.f32.mrf.mxu0
        %v1250 = vadd.f32 0.0, %v1249
        %v1251 = vpop.f32.mrf.mxu0
        %1252 = vmatprep.mubr.f32.mxu0 0.0
        %1253 = vmatmul.mubr.f32.gmra.mxu0 %v1068
        %v1254 = vpop.f32.mrf.mxu0
        %v1255 = vadd.f32 0.0, %v1254
        %v1256 = vpop.f32.mrf.mxu0
        %1257 = vmatprep.mubr.f32.mxu0 0.0
        %1258 = vmatmul.mubr.f32.gmra.mxu0 %v1071
        %v1259 = vpop.f32.mrf.mxu0
        %v1260 = vadd.f32 0.0, %v1259
        %v1261 = vpop.f32.mrf.mxu0
        %1262 = vmatprep.mubr.f32.mxu0 0.0
        %1263 = vmatmul.mubr.f32.gmra.mxu0 %v1074
        %v1264 = vpop.f32.mrf.mxu0
        %v1265 = vadd.f32 0.0, %v1264
        %v1266 = vpop.f32.mrf.mxu0
        %1267 = vmatprep.mubr.f32.mxu0 0.0
        %1268 = vmatmul.mubr.f32.gmra.mxu0 %v1077
        %v1269 = vpop.f32.mrf.mxu0
        %v1270 = vadd.f32 0.0, %v1269
        %v1271 = vpop.f32.mrf.mxu0
        %1272 = vmatprep.mubr.f32.mxu0 0.0
        %1273 = vmatmul.mubr.f32.gmra.mxu0 %v1080
        %v1274 = vpop.f32.mrf.mxu0
        %v1275 = vadd.f32 0.0, %v1274
        %v1276 = vpop.f32.mrf.mxu0
        %1277 = vmatprep.mubr.f32.mxu0 0.0
        %1278 = vmatmul.mubr.f32.gmra.mxu0 %v1083
        %v1279 = vpop.f32.mrf.mxu0
        %v1280 = vadd.f32 0.0, %v1279
        %v1281 = vpop.f32.mrf.mxu0
        %1282 = vmatprep.mubr.f32.mxu0 0.0
        %1283 = vmatmul.mubr.f32.gmra.mxu0 %v1086
        %v1284 = vpop.f32.mrf.mxu0
        %v1285 = vadd.f32 0.0, %v1284
        %v1286 = vpop.f32.mrf.mxu0
        %1287 = vmatprep.mubr.f32.mxu0 0.0
        %1288 = vmatmul.mubr.f32.gmra.mxu0 %v1089
        %v1289 = vpop.f32.mrf.mxu0
        %v1290 = vadd.f32 0.0, %v1289
        %v1291 = vpop.f32.mrf.mxu0
        %1292 = vmatprep.mubr.f32.mxu0 0.0
        %1293 = vmatmul.mubr.f32.gmra.mxu0 %v1092
        %v1294 = vpop.f32.mrf.mxu0
        %v1295 = vadd.f32 0.0, %v1294
        %v1296 = vpop.f32.mrf.mxu0
        %1297 = vmatprep.mubr.f32.mxu0 0.0
        %1298 = vmatmul.mubr.f32.gmra.mxu0 %v1095
        %v1299 = vpop.f32.mrf.mxu0
        %v1300 = vadd.f32 0.0, %v1299
        %v1301 = vpop.f32.mrf.mxu0
        %1302 = vmatprep.mubr.f32.mxu0 0.0
        %1303 = vmatmul.mubr.f32.gmra.mxu0 %v1098
        %v1304 = vpop.f32.mrf.mxu0
        %v1305 = vadd.f32 0.0, %v1304
        %v1306 = vpop.f32.mrf.mxu0
        %1307 = vmatprep.mubr.f32.mxu0 0.0
        %1308 = vmatmul.mubr.f32.gmra.mxu0 %v1101
        %v1309 = vpop.f32.mrf.mxu0
        %v1310 = vadd.f32 0.0, %v1309
        %v1311 = vpop.f32.mrf.mxu0
        %1312 = vmatprep.mubr.f32.mxu0 0.0
        %1313 = vmatmul.mubr.f32.gmra.mxu0 %v1104
        %v1314 = vpop.f32.mrf.mxu0
        %v1315 = vadd.f32 0.0, %v1314
        %v1316 = vpop.f32.mrf.mxu0
        %1317 = vmatprep.mubr.f32.mxu0 0.0
        %1318 = vmatmul.mubr.f32.gmra.mxu0 %v1107
        %v1319 = vpop.f32.mrf.mxu0
        %v1320 = vadd.f32 0.0, %v1319
        %v1321 = vpop.f32.mrf.mxu0
        %1322 = vmatprep.mubr.f32.mxu0 0.0
        %1323 = vmatmul.mubr.f32.gmra.mxu0 %v1110
        %v1324 = vpop.f32.mrf.mxu0
        %v1325 = vadd.f32 0.0, %v1324
        %v1326 = vpop.f32.mrf.mxu0
        %1327 = vmatprep.mubr.f32.mxu0 0.0
        %1328 = vmatmul.mubr.f32.gmra.mxu0 %v1113
        %v1329 = vpop.f32.mrf.mxu0
        %v1330 = vadd.f32 0.0, %v1329
        %v1331 = vpop.f32.mrf.mxu0
        %1332 = vmatprep.mubr.f32.mxu0 0.0
        %1333 = vmatmul.mubr.f32.gmra.mxu0 %v1116
        %v1334 = vpop.f32.mrf.mxu0
        %v1335 = vadd.f32 0.0, %v1334
        %v1336 = vpop.f32.mrf.mxu0
        %1337 = vmatprep.mubr.f32.mxu0 0.0
        %1338 = vmatmul.mubr.f32.gmra.mxu0 %v1119
        %v1339 = vpop.f32.mrf.mxu0
        %v1340 = vadd.f32 0.0, %v1339
        %v1341 = vpop.f32.mrf.mxu0
        %1342 = vmatprep.mubr.f32.mxu0 0.0
        %1343 = vmatmul.mubr.f32.gmra.mxu0 %v1122
        %v1344 = vpop.f32.mrf.mxu0
        %v1345 = vadd.f32 0.0, %v1344
        %v1346 = vpop.f32.mrf.mxu0
        %1347 = vmatprep.mubr.f32.mxu0 0.0
        %1348 = vmatmul.mubr.f32.gmra.mxu0 %v1125
        %v1349 = vpop.f32.mrf.mxu0
        %v1350 = vadd.f32 0.0, %v1349
        %v1351 = vpop.f32.mrf.mxu0
        %1352 = vmatprep.mubr.f32.mxu0 0.0
        %1353 = vmatmul.mubr.f32.gmra.mxu0 %v1128
        %v1354 = vpop.f32.mrf.mxu0
        %v1355 = vadd.f32 0.0, %v1354
        %v1356 = vpop.f32.mrf.mxu0
        %1357 = vmatprep.mubr.f32.mxu0 0.0
        %1358 = vmatmul.mubr.f32.gmra.mxu0 %v1131
        %v1359 = vpop.f32.mrf.mxu0
        %v1360 = vadd.f32 0.0, %v1359
        %v1361 = vpop.f32.mrf.mxu0
        %1362 = vmatprep.mubr.f32.mxu0 0.0
        %1363 = vmatmul.mubr.f32.gmra.mxu0 %v1134
        %v1364 = vpop.f32.mrf.mxu0
        %v1365 = vadd.f32 0.0, %v1364
        %v1366 = vpop.f32.mrf.mxu0
        %1367 = vmatprep.mubr.f32.mxu0 0.0
        %1368 = vmatmul.mubr.f32.gmra.mxu0 %v1137
        %v1369 = vpop.f32.mrf.mxu0
        %v1370 = vadd.f32 0.0, %v1369
        %v1371 = vpop.f32.mrf.mxu0
        %1372 = vmatprep.mubr.f32.mxu0 0.0
        %1373 = vmatmul.mubr.f32.gmra.mxu0 %v1140
        %v1374 = vpop.f32.mrf.mxu0
        %v1375 = vadd.f32 0.0, %v1374
        %v1376 = vpop.f32.mrf.mxu0
        %1377 = vmatprep.mubr.f32.mxu0 0.0
        %1378 = vmatmul.mubr.f32.gmra.mxu0 %v1143
        %v1379 = vpop.f32.mrf.mxu0
        %v1380 = vadd.f32 0.0, %v1379
        %v1381 = vpop.f32.mrf.mxu0
        %1382 = vmatprep.mubr.f32.mxu0 0.0
        %1383 = vmatmul.mubr.f32.gmra.mxu0 %v1146
        %v1384 = vpop.f32.mrf.mxu0
        %v1385 = vadd.f32 0.0, %v1384
        %v1386 = vpop.f32.mrf.mxu0
        %1387 = vmatprep.mubr.f32.mxu0 0.0
        %1388 = vmatmul.mubr.f32.gmra.mxu0 %v1149
        %v1389 = vpop.f32.mrf.mxu0
        %v1390 = vadd.f32 0.0, %v1389
        %v1391 = vpop.f32.mrf.mxu0
        %1392 = vmatprep.mubr.f32.mxu0 0.0
        %1393 = vmatmul.mubr.f32.gmra.mxu0 %v1152
        %v1394 = vpop.f32.mrf.mxu0
        %v1395 = vadd.f32 0.0, %v1394
        %v1396 = vpop.f32.mrf.mxu0
        %1397 = vmatprep.mubr.f32.mxu0 0.0
        %1398 = vmatmul.mubr.f32.gmra.mxu0 %v1155
        %v1399 = vpop.f32.mrf.mxu0
        %v1400 = vadd.f32 0.0, %v1399
        %v1401 = vpop.f32.mrf.mxu0
        %1402 = vmatprep.mubr.f32.mxu0 0.0
        %1403 = vmatmul.mubr.f32.gmra.mxu0 %v1158
        %v1404 = vpop.f32.mrf.mxu0
        %v1405 = vadd.f32 0.0, %v1404
        %v1406 = vpop.f32.mrf.mxu0
        %1407 = vdwg.mxu0
        %v1408 = vadd.f32 %v836, %v1230
        %v1409 = vadd.f32 %v841, %v1235
        %v1410 = vadd.f32 %v846, %v1240
        %v1411 = vadd.f32 %v851, %v1245
        %v1412 = vadd.f32 %v856, %v1250
        %v1413 = vadd.f32 %v861, %v1255
        %v1414 = vadd.f32 %v866, %v1260
        %v1415 = vadd.f32 %v871, %v1265
        %v1416 = vadd.f32 %v876, %v1270
        %v1417 = vadd.f32 %v881, %v1275
        %v1418 = vadd.f32 %v886, %v1280
        %v1419 = vadd.f32 %v891, %v1285
        %v1420 = vadd.f32 %v896, %v1290
        %v1421 = vadd.f32 %v901, %v1295
        %v1422 = vadd.f32 %v906, %v1300
        %v1423 = vadd.f32 %v911, %v1305
        %v1424 = vadd.f32 %v916, %v1310
        %v1425 = vadd.f32 %v921, %v1315
        %v1426 = vadd.f32 %v926, %v1320
        %v1427 = vadd.f32 %v931, %v1325
        %v1428 = vadd.f32 %v936, %v1330
        %v1429 = vadd.f32 %v941, %v1335
        %v1430 = vadd.f32 %v946, %v1340
        %v1431 = vadd.f32 %v951, %v1345
        %v1432 = vadd.f32 %v956, %v1350
        %v1433 = vadd.f32 %v961, %v1355
        %v1434 = vadd.f32 %v966, %v1360
        %v1435 = vadd.f32 %v971, %v1365
        %v1436 = vadd.f32 %v976, %v1370
        %v1437 = vadd.f32 %v981, %v1375
        %v1438 = vadd.f32 %v986, %v1380
        %v1439 = vadd.f32 %v991, %v1385
        %v1440 = vadd.f32 %v996, %v1390
        %v1441 = vadd.f32 %v1001, %v1395
        %v1442 = vadd.f32 %v1006, %v1400
        %v1443 = vadd.f32 %v1011, %v1405
        %v1444 = vld [vmem:[%s218 + $0x12] sm:$0xff]
        %v1445 = vld [vmem:[%s218 + $0x1a] sm:$0xff]
        %v1446 = vld [vmem:[%s218 + $0x22] sm:$0xff]
        %v1447 = vld [vmem:[%s218 + $0x2a] sm:$0xff]
        %v1448 = vld [vmem:[%s218 + $0x32] sm:$0xff]
        %v1449 = vld [vmem:[%s218 + $0x3a] sm:$0xff]
        %v1450 = vld [vmem:[%s218 + $0x42] sm:$0xff]
        %v1451 = vld [vmem:[%s218 + $0x4a] sm:$0xff]
        %v1452 = vld [vmem:[%s218 + $0x52] sm:$0xff]
        %v1453 = vld [vmem:[%s218 + $0x5a] sm:$0xff]
        %v1454 = vld [vmem:[%s218 + $0x62] sm:$0xff]
        %v1455 = vld [vmem:[%s218 + $0x6a] sm:$0xff]
        %v1456 = vld [vmem:[%s218 + $0x72] sm:$0xff]
        %v1457 = vld [vmem:[%s218 + $0x7a] sm:$0xff]
        %v1458 = vld [vmem:[%s218 + $0x82] sm:$0xff]
        %v1459 = vld [vmem:[%s218 + $0x8a] sm:$0xff]
        %v1460 = vld [vmem:[%s218 + $0x92] sm:$0xff]
        %v1461 = vld [vmem:[%s218 + $0x9a] sm:$0xff]
        %v1462 = vld [vmem:[%s218 + $0xa2] sm:$0xff]
        %v1463 = vld [vmem:[%s218 + $0xaa] sm:$0xff]
        %v1464 = vld [vmem:[%s218 + $0xb2] sm:$0xff]
        %v1465 = vld [vmem:[%s218 + $0xba] sm:$0xff]
        %v1466 = vld [vmem:[%s218 + $0xc2] sm:$0xff]
        %v1467 = vld [vmem:[%s218 + $0xca] sm:$0xff]
        %v1468 = vld [vmem:[%s218 + $0xd2] sm:$0xff]
        %v1469 = vld [vmem:[%s218 + $0xda] sm:$0xff]
        %v1470 = vld [vmem:[%s218 + $0xe2] sm:$0xff]
        %v1471 = vld [vmem:[%s218 + $0xea] sm:$0xff]
        %v1472 = vld [vmem:[%s218 + $0xf2] sm:$0xff]
        %v1473 = vld [vmem:[%s218 + $0xfa] sm:$0xff]
        %v1474 = vld [vmem:[%s218 + $0x102] sm:$0xff]
        %v1475 = vld [vmem:[%s218 + $0x10a] sm:$0xff]
        %v1476 = vld [vmem:[%s218 + $0x112] sm:$0xff]
        %v1477 = vld [vmem:[%s218 + $0x11a] sm:$0xff]
        %v1478 = vld [vmem:[%s218 + $0x122] sm:$0xff]
        %v1479 = vld [vmem:[%s218 + $0x12a] sm:$0xff]
        %s1480 = scalar_lea.vmem %s1, 12
        %v1481 = vld [vmem:[%s1480] sm:$0xf]
        %v1483 = vsel %vm300, %v1444, 0
        %v1486 = vsel %vm300, %v1445, 0
        %v1489 = vsel %vm300, %v1446, 0
        %v1492 = vsel %vm300, %v1447, 0
        %v1495 = vsel %vm300, %v1448, 0
        %v1498 = vsel %vm300, %v1449, 0
        %v1501 = vsel %vm300, %v1450, 0
        %v1504 = vsel %vm300, %v1451, 0
        %v1507 = vsel %vm300, %v1452, 0
        %v1510 = vsel %vm300, %v1453, 0
        %v1513 = vsel %vm300, %v1454, 0
        %v1516 = vsel %vm300, %v1455, 0
        %v1519 = vsel %vm300, %v1456, 0
        %v1522 = vsel %vm300, %v1457, 0
        %v1525 = vsel %vm300, %v1458, 0
        %v1528 = vsel %vm300, %v1459, 0
        %v1531 = vsel %vm300, %v1460, 0
        %v1534 = vsel %vm300, %v1461, 0
        %v1537 = vsel %vm300, %v1462, 0
        %v1540 = vsel %vm300, %v1463, 0
        %v1543 = vsel %vm300, %v1464, 0
        %v1546 = vsel %vm300, %v1465, 0
        %v1549 = vsel %vm300, %v1466, 0
        %v1552 = vsel %vm300, %v1467, 0
        %v1555 = vsel %vm300, %v1468, 0
        %v1558 = vsel %vm300, %v1469, 0
        %v1561 = vsel %vm300, %v1470, 0
        %v1564 = vsel %vm300, %v1471, 0
        %v1567 = vsel %vm300, %v1472, 0
        %v1570 = vsel %vm300, %v1473, 0
        %v1573 = vsel %vm300, %v1474, 0
        %v1576 = vsel %vm300, %v1475, 0
        %v1579 = vsel %vm300, %v1476, 0
        %v1582 = vsel %vm300, %v1477, 0
        %v1585 = vsel %vm300, %v1478, 0
        %v1588 = vsel %vm300, %v1479, 0
        %v1591 = vsel %vm409, %v1481, 0
        %1593 = vmatprep.subr.mxu0 0.0
        %1594 = vmatpush1.msra.mxu0 0.0
        %1595 = vmatprep.subr.mxu0 0.0
        %1596 = vmatpush1.msra.mxu0 0.0
        %1597 = vmatprep.subr.mxu0 0.0
        %1598 = vmatpush1.msra.mxu0 0.0
        %1599 = vmatprep.subr.mxu0 0.0
        %1600 = vmatpush1.msra.mxu0 0.0
        %1601 = vmatprep.subr.mxu0 0.0
        %1602 = vmatpush1.msra.mxu0 0.0
        %1603 = vmatprep.subr.mxu0 0.0
        %1604 = vmatpush1.msra.mxu0 0.0
        %1605 = vmatprep.subr.mxu0 0.0
        %1606 = vmatpush1.msra.mxu0 0.0
        %1607 = vmatprep.subr.mxu0 0.0
        %1608 = vmatpush1.msra.mxu0 0.0
        %1609 = vmatprep.subr.mxu0 0.0
        %1610 = vmatpush1.msra.mxu0 0.0
        %1611 = vmatprep.subr.mxu0 0.0
        %1612 = vmatpush1.msra.mxu0 0.0
        %1613 = vmatprep.subr.mxu0 0.0
        %1614 = vmatpush1.msra.mxu0 0.0
        %1615 = vmatprep.subr.mxu0 0.0
        %1616 = vmatpush1.msra.mxu0 0.0
        %1617 = vmatprep.subr.mxu0 0.0
        %1618 = vmatpush1.msra.mxu0 0.0
        %1619 = vmatprep.subr.mxu0 0.0
        %1620 = vmatpush1.msra.mxu0 0.0
        %1621 = vmatprep.subr.mxu0 0.0
        %1622 = vmatpush1.msra.mxu0 0.0
        %1623 = vmatprep.subr.mxu0 0.0
        %1624 = vmatpush1.msra.mxu0 %v1591
        %1625 = vmatprep.subr.mxu0 0.0
        %1626 = vmatpush2.msra.mxu0 0.0
        %1627 = vmatprep.subr.mxu0 0.0
        %1628 = vmatpush2.msra.mxu0 0.0
        %1629 = vmatprep.subr.mxu0 0.0
        %1630 = vmatpush2.msra.mxu0 0.0
        %1631 = vmatprep.subr.mxu0 0.0
        %1632 = vmatpush2.msra.mxu0 0.0
        %1633 = vmatprep.subr.mxu0 0.0
        %1634 = vmatpush2.msra.mxu0 0.0
        %1635 = vmatprep.subr.mxu0 0.0
        %1636 = vmatpush2.msra.mxu0 0.0
        %1637 = vmatprep.subr.mxu0 0.0
        %1638 = vmatpush2.msra.mxu0 0.0
        %1639 = vmatprep.subr.mxu0 0.0
        %1640 = vmatpush2.msra.mxu0 0.0
        %1641 = vmatprep.subr.mxu0 0.0
        %1642 = vmatpush2.msra.mxu0 0.0
        %1643 = vmatprep.subr.mxu0 0.0
        %1644 = vmatpush2.msra.mxu0 0.0
        %1645 = vmatprep.subr.mxu0 0.0
        %1646 = vmatpush2.msra.mxu0 0.0
        %1647 = vmatprep.subr.mxu0 0.0
        %1648 = vmatpush2.msra.mxu0 0.0
        %1649 = vmatprep.subr.mxu0 0.0
        %1650 = vmatpush2.msra.mxu0 0.0
        %1651 = vmatprep.subr.mxu0 0.0
        %1652 = vmatpush2.msra.mxu0 0.0
        %1653 = vmatprep.subr.mxu0 0.0
        %1654 = vmatpush2.msra.mxu0 0.0
        %1655 = vmatprep.subr.mxu0 0.0
        %1656 = vmatpush2.msra.mxu0 0.0
        %1657 = vmatprep.mubr.f32.mxu0 0.0
        %1658 = vmatmul.mubr.f32.gmra.mxu0 %v1483
        %v1659 = vpop.f32.mrf.mxu0
        %v1660 = vadd.f32 0.0, %v1659
        %v1661 = vpop.f32.mrf.mxu0
        %1662 = vmatprep.mubr.f32.mxu0 0.0
        %1663 = vmatmul.mubr.f32.gmra.mxu0 %v1486
        %v1664 = vpop.f32.mrf.mxu0
        %v1665 = vadd.f32 0.0, %v1664
        %v1666 = vpop.f32.mrf.mxu0
        %1667 = vmatprep.mubr.f32.mxu0 0.0
        %1668 = vmatmul.mubr.f32.gmra.mxu0 %v1489
        %v1669 = vpop.f32.mrf.mxu0
        %v1670 = vadd.f32 0.0, %v1669
        %v1671 = vpop.f32.mrf.mxu0
        %1672 = vmatprep.mubr.f32.mxu0 0.0
        %1673 = vmatmul.mubr.f32.gmra.mxu0 %v1492
        %v1674 = vpop.f32.mrf.mxu0
        %v1675 = vadd.f32 0.0, %v1674
        %v1676 = vpop.f32.mrf.mxu0
        %1677 = vmatprep.mubr.f32.mxu0 0.0
        %1678 = vmatmul.mubr.f32.gmra.mxu0 %v1495
        %v1679 = vpop.f32.mrf.mxu0
        %v1680 = vadd.f32 0.0, %v1679
        %v1681 = vpop.f32.mrf.mxu0
        %1682 = vmatprep.mubr.f32.mxu0 0.0
        %1683 = vmatmul.mubr.f32.gmra.mxu0 %v1498
        %v1684 = vpop.f32.mrf.mxu0
        %v1685 = vadd.f32 0.0, %v1684
        %v1686 = vpop.f32.mrf.mxu0
        %1687 = vmatprep.mubr.f32.mxu0 0.0
        %1688 = vmatmul.mubr.f32.gmra.mxu0 %v1501
        %v1689 = vpop.f32.mrf.mxu0
        %v1690 = vadd.f32 0.0, %v1689
        %v1691 = vpop.f32.mrf.mxu0
        %1692 = vmatprep.mubr.f32.mxu0 0.0
        %1693 = vmatmul.mubr.f32.gmra.mxu0 %v1504
        %v1694 = vpop.f32.mrf.mxu0
        %v1695 = vadd.f32 0.0, %v1694
        %v1696 = vpop.f32.mrf.mxu0
        %1697 = vmatprep.mubr.f32.mxu0 0.0
        %1698 = vmatmul.mubr.f32.gmra.mxu0 %v1507
        %v1699 = vpop.f32.mrf.mxu0
        %v1700 = vadd.f32 0.0, %v1699
        %v1701 = vpop.f32.mrf.mxu0
        %1702 = vmatprep.mubr.f32.mxu0 0.0
        %1703 = vmatmul.mubr.f32.gmra.mxu0 %v1510
        %v1704 = vpop.f32.mrf.mxu0
        %v1705 = vadd.f32 0.0, %v1704
        %v1706 = vpop.f32.mrf.mxu0
        %1707 = vmatprep.mubr.f32.mxu0 0.0
        %1708 = vmatmul.mubr.f32.gmra.mxu0 %v1513
        %v1709 = vpop.f32.mrf.mxu0
        %v1710 = vadd.f32 0.0, %v1709
        %v1711 = vpop.f32.mrf.mxu0
        %1712 = vmatprep.mubr.f32.mxu0 0.0
        %1713 = vmatmul.mubr.f32.gmra.mxu0 %v1516
        %v1714 = vpop.f32.mrf.mxu0
        %v1715 = vadd.f32 0.0, %v1714
        %v1716 = vpop.f32.mrf.mxu0
        %1717 = vmatprep.mubr.f32.mxu0 0.0
        %1718 = vmatmul.mubr.f32.gmra.mxu0 %v1519
        %v1719 = vpop.f32.mrf.mxu0
        %v1720 = vadd.f32 0.0, %v1719
        %v1721 = vpop.f32.mrf.mxu0
        %1722 = vmatprep.mubr.f32.mxu0 0.0
        %1723 = vmatmul.mubr.f32.gmra.mxu0 %v1522
        %v1724 = vpop.f32.mrf.mxu0
        %v1725 = vadd.f32 0.0, %v1724
        %v1726 = vpop.f32.mrf.mxu0
        %1727 = vmatprep.mubr.f32.mxu0 0.0
        %1728 = vmatmul.mubr.f32.gmra.mxu0 %v1525
        %v1729 = vpop.f32.mrf.mxu0
        %v1730 = vadd.f32 0.0, %v1729
        %v1731 = vpop.f32.mrf.mxu0
        %1732 = vmatprep.mubr.f32.mxu0 0.0
        %1733 = vmatmul.mubr.f32.gmra.mxu0 %v1528
        %v1734 = vpop.f32.mrf.mxu0
        %v1735 = vadd.f32 0.0, %v1734
        %v1736 = vpop.f32.mrf.mxu0
        %1737 = vmatprep.mubr.f32.mxu0 0.0
        %1738 = vmatmul.mubr.f32.gmra.mxu0 %v1531
        %v1739 = vpop.f32.mrf.mxu0
        %v1740 = vadd.f32 0.0, %v1739
        %v1741 = vpop.f32.mrf.mxu0
        %1742 = vmatprep.mubr.f32.mxu0 0.0
        %1743 = vmatmul.mubr.f32.gmra.mxu0 %v1534
        %v1744 = vpop.f32.mrf.mxu0
        %v1745 = vadd.f32 0.0, %v1744
        %v1746 = vpop.f32.mrf.mxu0
        %1747 = vmatprep.mubr.f32.mxu0 0.0
        %1748 = vmatmul.mubr.f32.gmra.mxu0 %v1537
        %v1749 = vpop.f32.mrf.mxu0
        %v1750 = vadd.f32 0.0, %v1749
        %v1751 = vpop.f32.mrf.mxu0
        %1752 = vmatprep.mubr.f32.mxu0 0.0
        %1753 = vmatmul.mubr.f32.gmra.mxu0 %v1540
        %v1754 = vpop.f32.mrf.mxu0
        %v1755 = vadd.f32 0.0, %v1754
        %v1756 = vpop.f32.mrf.mxu0
        %1757 = vmatprep.mubr.f32.mxu0 0.0
        %1758 = vmatmul.mubr.f32.gmra.mxu0 %v1543
        %v1759 = vpop.f32.mrf.mxu0
        %v1760 = vadd.f32 0.0, %v1759
        %v1761 = vpop.f32.mrf.mxu0
        %1762 = vmatprep.mubr.f32.mxu0 0.0
        %1763 = vmatmul.mubr.f32.gmra.mxu0 %v1546
        %v1764 = vpop.f32.mrf.mxu0
        %v1765 = vadd.f32 0.0, %v1764
        %v1766 = vpop.f32.mrf.mxu0
        %1767 = vmatprep.mubr.f32.mxu0 0.0
        %1768 = vmatmul.mubr.f32.gmra.mxu0 %v1549
        %v1769 = vpop.f32.mrf.mxu0
        %v1770 = vadd.f32 0.0, %v1769
        %v1771 = vpop.f32.mrf.mxu0
        %1772 = vmatprep.mubr.f32.mxu0 0.0
        %1773 = vmatmul.mubr.f32.gmra.mxu0 %v1552
        %v1774 = vpop.f32.mrf.mxu0
        %v1775 = vadd.f32 0.0, %v1774
        %v1776 = vpop.f32.mrf.mxu0
        %1777 = vmatprep.mubr.f32.mxu0 0.0
        %1778 = vmatmul.mubr.f32.gmra.mxu0 %v1555
        %v1779 = vpop.f32.mrf.mxu0
        %v1780 = vadd.f32 0.0, %v1779
        %v1781 = vpop.f32.mrf.mxu0
        %1782 = vmatprep.mubr.f32.mxu0 0.0
        %1783 = vmatmul.mubr.f32.gmra.mxu0 %v1558
        %v1784 = vpop.f32.mrf.mxu0
        %v1785 = vadd.f32 0.0, %v1784
        %v1786 = vpop.f32.mrf.mxu0
        %1787 = vmatprep.mubr.f32.mxu0 0.0
        %1788 = vmatmul.mubr.f32.gmra.mxu0 %v1561
        %v1789 = vpop.f32.mrf.mxu0
        %v1790 = vadd.f32 0.0, %v1789
        %v1791 = vpop.f32.mrf.mxu0
        %1792 = vmatprep.mubr.f32.mxu0 0.0
        %1793 = vmatmul.mubr.f32.gmra.mxu0 %v1564
        %v1794 = vpop.f32.mrf.mxu0
        %v1795 = vadd.f32 0.0, %v1794
        %v1796 = vpop.f32.mrf.mxu0
        %1797 = vmatprep.mubr.f32.mxu0 0.0
        %1798 = vmatmul.mubr.f32.gmra.mxu0 %v1567
        %v1799 = vpop.f32.mrf.mxu0
        %v1800 = vadd.f32 0.0, %v1799
        %v1801 = vpop.f32.mrf.mxu0
        %1802 = vmatprep.mubr.f32.mxu0 0.0
        %1803 = vmatmul.mubr.f32.gmra.mxu0 %v1570
        %v1804 = vpop.f32.mrf.mxu0
        %v1805 = vadd.f32 0.0, %v1804
        %v1806 = vpop.f32.mrf.mxu0
        %1807 = vmatprep.mubr.f32.mxu0 0.0
        %1808 = vmatmul.mubr.f32.gmra.mxu0 %v1573
        %v1809 = vpop.f32.mrf.mxu0
        %v1810 = vadd.f32 0.0, %v1809
        %v1811 = vpop.f32.mrf.mxu0
        %1812 = vmatprep.mubr.f32.mxu0 0.0
        %1813 = vmatmul.mubr.f32.gmra.mxu0 %v1576
        %v1814 = vpop.f32.mrf.mxu0
        %v1815 = vadd.f32 0.0, %v1814
        %v1816 = vpop.f32.mrf.mxu0
        %1817 = vmatprep.mubr.f32.mxu0 0.0
        %1818 = vmatmul.mubr.f32.gmra.mxu0 %v1579
        %v1819 = vpop.f32.mrf.mxu0
        %v1820 = vadd.f32 0.0, %v1819
        %v1821 = vpop.f32.mrf.mxu0
        %1822 = vmatprep.mubr.f32.mxu0 0.0
        %1823 = vmatmul.mubr.f32.gmra.mxu0 %v1582
        %v1824 = vpop.f32.mrf.mxu0
        %v1825 = vadd.f32 0.0, %v1824
        %v1826 = vpop.f32.mrf.mxu0
        %1827 = vmatprep.mubr.f32.mxu0 0.0
        %1828 = vmatmul.mubr.f32.gmra.mxu0 %v1585
        %v1829 = vpop.f32.mrf.mxu0
        %v1830 = vadd.f32 0.0, %v1829
        %v1831 = vpop.f32.mrf.mxu0
        %1832 = vmatprep.mubr.f32.mxu0 0.0
        %1833 = vmatmul.mubr.f32.gmra.mxu0 %v1588
        %v1834 = vpop.f32.mrf.mxu0
        %v1835 = vadd.f32 0.0, %v1834
        %v1836 = vpop.f32.mrf.mxu0
        %1837 = vdwg.mxu0
        %v1838 = vadd.f32 %v1408, %v1660
        %v1839 = vadd.f32 %v1409, %v1665
        %v1840 = vadd.f32 %v1410, %v1670
        %v1841 = vadd.f32 %v1411, %v1675
        %v1842 = vadd.f32 %v1412, %v1680
        %v1843 = vadd.f32 %v1413, %v1685
        %v1844 = vadd.f32 %v1414, %v1690
        %v1845 = vadd.f32 %v1415, %v1695
        %v1846 = vadd.f32 %v1416, %v1700
        %v1847 = vadd.f32 %v1417, %v1705
        %v1848 = vadd.f32 %v1418, %v1710
        %v1849 = vadd.f32 %v1419, %v1715
        %v1850 = vadd.f32 %v1420, %v1720
        %v1851 = vadd.f32 %v1421, %v1725
        %v1852 = vadd.f32 %v1422, %v1730
        %v1853 = vadd.f32 %v1423, %v1735
        %v1854 = vadd.f32 %v1424, %v1740
        %v1855 = vadd.f32 %v1425, %v1745
        %v1856 = vadd.f32 %v1426, %v1750
        %v1857 = vadd.f32 %v1427, %v1755
        %v1858 = vadd.f32 %v1428, %v1760
        %v1859 = vadd.f32 %v1429, %v1765
        %v1860 = vadd.f32 %v1430, %v1770
        %v1861 = vadd.f32 %v1431, %v1775
        %v1862 = vadd.f32 %v1432, %v1780
        %v1863 = vadd.f32 %v1433, %v1785
        %v1864 = vadd.f32 %v1434, %v1790
        %v1865 = vadd.f32 %v1435, %v1795
        %v1866 = vadd.f32 %v1436, %v1800
        %v1867 = vadd.f32 %v1437, %v1805
        %v1868 = vadd.f32 %v1438, %v1810
        %v1869 = vadd.f32 %v1439, %v1815
        %v1870 = vadd.f32 %v1440, %v1820
        %v1871 = vadd.f32 %v1441, %v1825
        %v1872 = vadd.f32 %v1442, %v1830
        %v1873 = vadd.f32 %v1443, %v1835
        %v1874 = vld [vmem:[%s218 + $0x13] sm:$0xff]
        %v1875 = vld [vmem:[%s218 + $0x1b] sm:$0xff]
        %v1876 = vld [vmem:[%s218 + $0x23] sm:$0xff]
        %v1877 = vld [vmem:[%s218 + $0x2b] sm:$0xff]
        %v1878 = vld [vmem:[%s218 + $0x33] sm:$0xff]
        %v1879 = vld [vmem:[%s218 + $0x3b] sm:$0xff]
        %v1880 = vld [vmem:[%s218 + $0x43] sm:$0xff]
        %v1881 = vld [vmem:[%s218 + $0x4b] sm:$0xff]
        %v1882 = vld [vmem:[%s218 + $0x53] sm:$0xff]
        %v1883 = vld [vmem:[%s218 + $0x5b] sm:$0xff]
        %v1884 = vld [vmem:[%s218 + $0x63] sm:$0xff]
        %v1885 = vld [vmem:[%s218 + $0x6b] sm:$0xff]
        %v1886 = vld [vmem:[%s218 + $0x73] sm:$0xff]
        %v1887 = vld [vmem:[%s218 + $0x7b] sm:$0xff]
        %v1888 = vld [vmem:[%s218 + $0x83] sm:$0xff]
        %v1889 = vld [vmem:[%s218 + $0x8b] sm:$0xff]
        %v1890 = vld [vmem:[%s218 + $0x93] sm:$0xff]
        %v1891 = vld [vmem:[%s218 + $0x9b] sm:$0xff]
        %v1892 = vld [vmem:[%s218 + $0xa3] sm:$0xff]
        %v1893 = vld [vmem:[%s218 + $0xab] sm:$0xff]
        %v1894 = vld [vmem:[%s218 + $0xb3] sm:$0xff]
        %v1895 = vld [vmem:[%s218 + $0xbb] sm:$0xff]
        %v1896 = vld [vmem:[%s218 + $0xc3] sm:$0xff]
        %v1897 = vld [vmem:[%s218 + $0xcb] sm:$0xff]
        %v1898 = vld [vmem:[%s218 + $0xd3] sm:$0xff]
        %v1899 = vld [vmem:[%s218 + $0xdb] sm:$0xff]
        %v1900 = vld [vmem:[%s218 + $0xe3] sm:$0xff]
        %v1901 = vld [vmem:[%s218 + $0xeb] sm:$0xff]
        %v1902 = vld [vmem:[%s218 + $0xf3] sm:$0xff]
        %v1903 = vld [vmem:[%s218 + $0xfb] sm:$0xff]
        %v1904 = vld [vmem:[%s218 + $0x103] sm:$0xff]
        %v1905 = vld [vmem:[%s218 + $0x10b] sm:$0xff]
        %v1906 = vld [vmem:[%s218 + $0x113] sm:$0xff]
        %v1907 = vld [vmem:[%s218 + $0x11b] sm:$0xff]
        %v1908 = vld [vmem:[%s218 + $0x123] sm:$0xff]
        %v1909 = vld [vmem:[%s218 + $0x12b] sm:$0xff]
        %s1910 = scalar_lea.vmem %s1, 16
        %v1911 = vld [vmem:[%s1910] sm:$0xf]
        %v1913 = vsel %vm300, %v1874, 0
        %v1916 = vsel %vm300, %v1875, 0
        %v1919 = vsel %vm300, %v1876, 0
        %v1922 = vsel %vm300, %v1877, 0
        %v1925 = vsel %vm300, %v1878, 0
        %v1928 = vsel %vm300, %v1879, 0
        %v1931 = vsel %vm300, %v1880, 0
        %v1934 = vsel %vm300, %v1881, 0
        %v1937 = vsel %vm300, %v1882, 0
        %v1940 = vsel %vm300, %v1883, 0
        %v1943 = vsel %vm300, %v1884, 0
        %v1946 = vsel %vm300, %v1885, 0
        %v1949 = vsel %vm300, %v1886, 0
        %v1952 = vsel %vm300, %v1887, 0
        %v1955 = vsel %vm300, %v1888, 0
        %v1958 = vsel %vm300, %v1889, 0
        %v1961 = vsel %vm300, %v1890, 0
        %v1964 = vsel %vm300, %v1891, 0
        %v1967 = vsel %vm300, %v1892, 0
        %v1970 = vsel %vm300, %v1893, 0
        %v1973 = vsel %vm300, %v1894, 0
        %v1976 = vsel %vm300, %v1895, 0
        %v1979 = vsel %vm300, %v1896, 0
        %v1982 = vsel %vm300, %v1897, 0
        %v1985 = vsel %vm300, %v1898, 0
        %v1988 = vsel %vm300, %v1899, 0
        %v1991 = vsel %vm300, %v1900, 0
        %v1994 = vsel %vm300, %v1901, 0
        %v1997 = vsel %vm300, %v1902, 0
        %v2000 = vsel %vm300, %v1903, 0
        %v2003 = vsel %vm300, %v1904, 0
        %v2006 = vsel %vm300, %v1905, 0
        %v2009 = vsel %vm300, %v1906, 0
        %v2012 = vsel %vm300, %v1907, 0
        %v2015 = vsel %vm300, %v1908, 0
        %v2018 = vsel %vm300, %v1909, 0
        %v2021 = vsel %vm409, %v1911, 0
        %2023 = vmatprep.subr.mxu0 0.0
        %2024 = vmatpush1.msra.mxu0 0.0
        %2025 = vmatprep.subr.mxu0 0.0
        %2026 = vmatpush1.msra.mxu0 0.0
        %2027 = vmatprep.subr.mxu0 0.0
        %2028 = vmatpush1.msra.mxu0 0.0
        %2029 = vmatprep.subr.mxu0 0.0
        %2030 = vmatpush1.msra.mxu0 0.0
        %2031 = vmatprep.subr.mxu0 0.0
        %2032 = vmatpush1.msra.mxu0 0.0
        %2033 = vmatprep.subr.mxu0 0.0
        %2034 = vmatpush1.msra.mxu0 0.0
        %2035 = vmatprep.subr.mxu0 0.0
        %2036 = vmatpush1.msra.mxu0 0.0
        %2037 = vmatprep.subr.mxu0 0.0
        %2038 = vmatpush1.msra.mxu0 0.0
        %2039 = vmatprep.subr.mxu0 0.0
        %2040 = vmatpush1.msra.mxu0 0.0
        %2041 = vmatprep.subr.mxu0 0.0
        %2042 = vmatpush1.msra.mxu0 0.0
        %2043 = vmatprep.subr.mxu0 0.0
        %2044 = vmatpush1.msra.mxu0 0.0
        %2045 = vmatprep.subr.mxu0 0.0
        %2046 = vmatpush1.msra.mxu0 0.0
        %2047 = vmatprep.subr.mxu0 0.0
        %2048 = vmatpush1.msra.mxu0 0.0
        %2049 = vmatprep.subr.mxu0 0.0
        %2050 = vmatpush1.msra.mxu0 0.0
        %2051 = vmatprep.subr.mxu0 0.0
        %2052 = vmatpush1.msra.mxu0 0.0
        %2053 = vmatprep.subr.mxu0 0.0
        %2054 = vmatpush1.msra.mxu0 %v2021
        %2055 = vmatprep.subr.mxu0 0.0
        %2056 = vmatpush2.msra.mxu0 0.0
        %2057 = vmatprep.subr.mxu0 0.0
        %2058 = vmatpush2.msra.mxu0 0.0
        %2059 = vmatprep.subr.mxu0 0.0
        %2060 = vmatpush2.msra.mxu0 0.0
        %2061 = vmatprep.subr.mxu0 0.0
        %2062 = vmatpush2.msra.mxu0 0.0
        %2063 = vmatprep.subr.mxu0 0.0
        %2064 = vmatpush2.msra.mxu0 0.0
        %2065 = vmatprep.subr.mxu0 0.0
        %2066 = vmatpush2.msra.mxu0 0.0
        %2067 = vmatprep.subr.mxu0 0.0
        %2068 = vmatpush2.msra.mxu0 0.0
        %2069 = vmatprep.subr.mxu0 0.0
        %2070 = vmatpush2.msra.mxu0 0.0
        %2071 = vmatprep.subr.mxu0 0.0
        %2072 = vmatpush2.msra.mxu0 0.0
        %2073 = vmatprep.subr.mxu0 0.0
        %2074 = vmatpush2.msra.mxu0 0.0
        %2075 = vmatprep.subr.mxu0 0.0
        %2076 = vmatpush2.msra.mxu0 0.0
        %2077 = vmatprep.subr.mxu0 0.0
        %2078 = vmatpush2.msra.mxu0 0.0
        %2079 = vmatprep.subr.mxu0 0.0
        %2080 = vmatpush2.msra.mxu0 0.0
        %2081 = vmatprep.subr.mxu0 0.0
        %2082 = vmatpush2.msra.mxu0 0.0
        %2083 = vmatprep.subr.mxu0 0.0
        %2084 = vmatpush2.msra.mxu0 0.0
        %2085 = vmatprep.subr.mxu0 0.0
        %2086 = vmatpush2.msra.mxu0 0.0
        %2087 = vmatprep.mubr.f32.mxu0 0.0
        %2088 = vmatmul.mubr.f32.gmra.mxu0 %v1913
        %v2089 = vpop.f32.mrf.mxu0
        %v2090 = vadd.f32 0.0, %v2089
        %v2091 = vpop.f32.mrf.mxu0
        %2092 = vmatprep.mubr.f32.mxu0 0.0
        %2093 = vmatmul.mubr.f32.gmra.mxu0 %v1916
        %v2094 = vpop.f32.mrf.mxu0
        %v2095 = vadd.f32 0.0, %v2094
        %v2096 = vpop.f32.mrf.mxu0
        %2097 = vmatprep.mubr.f32.mxu0 0.0
        %2098 = vmatmul.mubr.f32.gmra.mxu0 %v1919
        %v2099 = vpop.f32.mrf.mxu0
        %v2100 = vadd.f32 0.0, %v2099
        %v2101 = vpop.f32.mrf.mxu0
        %2102 = vmatprep.mubr.f32.mxu0 0.0
        %2103 = vmatmul.mubr.f32.gmra.mxu0 %v1922
        %v2104 = vpop.f32.mrf.mxu0
        %v2105 = vadd.f32 0.0, %v2104
        %v2106 = vpop.f32.mrf.mxu0
        %2107 = vmatprep.mubr.f32.mxu0 0.0
        %2108 = vmatmul.mubr.f32.gmra.mxu0 %v1925
        %v2109 = vpop.f32.mrf.mxu0
        %v2110 = vadd.f32 0.0, %v2109
        %v2111 = vpop.f32.mrf.mxu0
        %2112 = vmatprep.mubr.f32.mxu0 0.0
        %2113 = vmatmul.mubr.f32.gmra.mxu0 %v1928
        %v2114 = vpop.f32.mrf.mxu0
        %v2115 = vadd.f32 0.0, %v2114
        %v2116 = vpop.f32.mrf.mxu0
        %2117 = vmatprep.mubr.f32.mxu0 0.0
        %2118 = vmatmul.mubr.f32.gmra.mxu0 %v1931
        %v2119 = vpop.f32.mrf.mxu0
        %v2120 = vadd.f32 0.0, %v2119
        %v2121 = vpop.f32.mrf.mxu0
        %2122 = vmatprep.mubr.f32.mxu0 0.0
        %2123 = vmatmul.mubr.f32.gmra.mxu0 %v1934
        %v2124 = vpop.f32.mrf.mxu0
        %v2125 = vadd.f32 0.0, %v2124
        %v2126 = vpop.f32.mrf.mxu0
        %2127 = vmatprep.mubr.f32.mxu0 0.0
        %2128 = vmatmul.mubr.f32.gmra.mxu0 %v1937
        %v2129 = vpop.f32.mrf.mxu0
        %v2130 = vadd.f32 0.0, %v2129
        %v2131 = vpop.f32.mrf.mxu0
        %2132 = vmatprep.mubr.f32.mxu0 0.0
        %2133 = vmatmul.mubr.f32.gmra.mxu0 %v1940
        %v2134 = vpop.f32.mrf.mxu0
        %v2135 = vadd.f32 0.0, %v2134
        %v2136 = vpop.f32.mrf.mxu0
        %2137 = vmatprep.mubr.f32.mxu0 0.0
        %2138 = vmatmul.mubr.f32.gmra.mxu0 %v1943
        %v2139 = vpop.f32.mrf.mxu0
        %v2140 = vadd.f32 0.0, %v2139
        %v2141 = vpop.f32.mrf.mxu0
        %2142 = vmatprep.mubr.f32.mxu0 0.0
        %2143 = vmatmul.mubr.f32.gmra.mxu0 %v1946
        %v2144 = vpop.f32.mrf.mxu0
        %v2145 = vadd.f32 0.0, %v2144
        %v2146 = vpop.f32.mrf.mxu0
        %2147 = vmatprep.mubr.f32.mxu0 0.0
        %2148 = vmatmul.mubr.f32.gmra.mxu0 %v1949
        %v2149 = vpop.f32.mrf.mxu0
        %v2150 = vadd.f32 0.0, %v2149
        %v2151 = vpop.f32.mrf.mxu0
        %2152 = vmatprep.mubr.f32.mxu0 0.0
        %2153 = vmatmul.mubr.f32.gmra.mxu0 %v1952
        %v2154 = vpop.f32.mrf.mxu0
        %v2155 = vadd.f32 0.0, %v2154
        %v2156 = vpop.f32.mrf.mxu0
        %2157 = vmatprep.mubr.f32.mxu0 0.0
        %2158 = vmatmul.mubr.f32.gmra.mxu0 %v1955
        %v2159 = vpop.f32.mrf.mxu0
        %v2160 = vadd.f32 0.0, %v2159
        %v2161 = vpop.f32.mrf.mxu0
        %2162 = vmatprep.mubr.f32.mxu0 0.0
        %2163 = vmatmul.mubr.f32.gmra.mxu0 %v1958
        %v2164 = vpop.f32.mrf.mxu0
        %v2165 = vadd.f32 0.0, %v2164
        %v2166 = vpop.f32.mrf.mxu0
        %2167 = vmatprep.mubr.f32.mxu0 0.0
        %2168 = vmatmul.mubr.f32.gmra.mxu0 %v1961
        %v2169 = vpop.f32.mrf.mxu0
        %v2170 = vadd.f32 0.0, %v2169
        %v2171 = vpop.f32.mrf.mxu0
        %2172 = vmatprep.mubr.f32.mxu0 0.0
        %2173 = vmatmul.mubr.f32.gmra.mxu0 %v1964
        %v2174 = vpop.f32.mrf.mxu0
        %v2175 = vadd.f32 0.0, %v2174
        %v2176 = vpop.f32.mrf.mxu0
        %2177 = vmatprep.mubr.f32.mxu0 0.0
        %2178 = vmatmul.mubr.f32.gmra.mxu0 %v1967
        %v2179 = vpop.f32.mrf.mxu0
        %v2180 = vadd.f32 0.0, %v2179
        %v2181 = vpop.f32.mrf.mxu0
        %2182 = vmatprep.mubr.f32.mxu0 0.0
        %2183 = vmatmul.mubr.f32.gmra.mxu0 %v1970
        %v2184 = vpop.f32.mrf.mxu0
        %v2185 = vadd.f32 0.0, %v2184
        %v2186 = vpop.f32.mrf.mxu0
        %2187 = vmatprep.mubr.f32.mxu0 0.0
        %2188 = vmatmul.mubr.f32.gmra.mxu0 %v1973
        %v2189 = vpop.f32.mrf.mxu0
        %v2190 = vadd.f32 0.0, %v2189
        %v2191 = vpop.f32.mrf.mxu0
        %2192 = vmatprep.mubr.f32.mxu0 0.0
        %2193 = vmatmul.mubr.f32.gmra.mxu0 %v1976
        %v2194 = vpop.f32.mrf.mxu0
        %v2195 = vadd.f32 0.0, %v2194
        %v2196 = vpop.f32.mrf.mxu0
        %2197 = vmatprep.mubr.f32.mxu0 0.0
        %2198 = vmatmul.mubr.f32.gmra.mxu0 %v1979
        %v2199 = vpop.f32.mrf.mxu0
        %v2200 = vadd.f32 0.0, %v2199
        %v2201 = vpop.f32.mrf.mxu0
        %2202 = vmatprep.mubr.f32.mxu0 0.0
        %2203 = vmatmul.mubr.f32.gmra.mxu0 %v1982
        %v2204 = vpop.f32.mrf.mxu0
        %v2205 = vadd.f32 0.0, %v2204
        %v2206 = vpop.f32.mrf.mxu0
        %2207 = vmatprep.mubr.f32.mxu0 0.0
        %2208 = vmatmul.mubr.f32.gmra.mxu0 %v1985
        %v2209 = vpop.f32.mrf.mxu0
        %v2210 = vadd.f32 0.0, %v2209
        %v2211 = vpop.f32.mrf.mxu0
        %2212 = vmatprep.mubr.f32.mxu0 0.0
        %2213 = vmatmul.mubr.f32.gmra.mxu0 %v1988
        %v2214 = vpop.f32.mrf.mxu0
        %v2215 = vadd.f32 0.0, %v2214
        %v2216 = vpop.f32.mrf.mxu0
        %2217 = vmatprep.mubr.f32.mxu0 0.0
        %2218 = vmatmul.mubr.f32.gmra.mxu0 %v1991
        %v2219 = vpop.f32.mrf.mxu0
        %v2220 = vadd.f32 0.0, %v2219
        %v2221 = vpop.f32.mrf.mxu0
        %2222 = vmatprep.mubr.f32.mxu0 0.0
        %2223 = vmatmul.mubr.f32.gmra.mxu0 %v1994
        %v2224 = vpop.f32.mrf.mxu0
        %v2225 = vadd.f32 0.0, %v2224
        %v2226 = vpop.f32.mrf.mxu0
        %2227 = vmatprep.mubr.f32.mxu0 0.0
        %2228 = vmatmul.mubr.f32.gmra.mxu0 %v1997
        %v2229 = vpop.f32.mrf.mxu0
        %v2230 = vadd.f32 0.0, %v2229
        %v2231 = vpop.f32.mrf.mxu0
        %2232 = vmatprep.mubr.f32.mxu0 0.0
        %2233 = vmatmul.mubr.f32.gmra.mxu0 %v2000
        %v2234 = vpop.f32.mrf.mxu0
        %v2235 = vadd.f32 0.0, %v2234
        %v2236 = vpop.f32.mrf.mxu0
        %2237 = vmatprep.mubr.f32.mxu0 0.0
        %2238 = vmatmul.mubr.f32.gmra.mxu0 %v2003
        %v2239 = vpop.f32.mrf.mxu0
        %v2240 = vadd.f32 0.0, %v2239
        %v2241 = vpop.f32.mrf.mxu0
        %2242 = vmatprep.mubr.f32.mxu0 0.0
        %2243 = vmatmul.mubr.f32.gmra.mxu0 %v2006
        %v2244 = vpop.f32.mrf.mxu0
        %v2245 = vadd.f32 0.0, %v2244
        %v2246 = vpop.f32.mrf.mxu0
        %2247 = vmatprep.mubr.f32.mxu0 0.0
        %2248 = vmatmul.mubr.f32.gmra.mxu0 %v2009
        %v2249 = vpop.f32.mrf.mxu0
        %v2250 = vadd.f32 0.0, %v2249
        %v2251 = vpop.f32.mrf.mxu0
        %2252 = vmatprep.mubr.f32.mxu0 0.0
        %2253 = vmatmul.mubr.f32.gmra.mxu0 %v2012
        %v2254 = vpop.f32.mrf.mxu0
        %v2255 = vadd.f32 0.0, %v2254
        %v2256 = vpop.f32.mrf.mxu0
        %2257 = vmatprep.mubr.f32.mxu0 0.0
        %2258 = vmatmul.mubr.f32.gmra.mxu0 %v2015
        %v2259 = vpop.f32.mrf.mxu0
        %v2260 = vadd.f32 0.0, %v2259
        %v2261 = vpop.f32.mrf.mxu0
        %2262 = vmatprep.mubr.f32.mxu0 0.0
        %2263 = vmatmul.mubr.f32.gmra.mxu0 %v2018
        %v2264 = vpop.f32.mrf.mxu0
        %v2265 = vadd.f32 0.0, %v2264
        %v2266 = vpop.f32.mrf.mxu0
        %2267 = vdwg.mxu0
        %v2268 = vadd.f32 %v1838, %v2090
        %v2269 = vadd.f32 %v1839, %v2095
        %v2270 = vadd.f32 %v1840, %v2100
        %v2271 = vadd.f32 %v1841, %v2105
        %v2272 = vadd.f32 %v1842, %v2110
        %v2273 = vadd.f32 %v1843, %v2115
        %v2274 = vadd.f32 %v1844, %v2120
        %v2275 = vadd.f32 %v1845, %v2125
        %v2276 = vadd.f32 %v1846, %v2130
        %v2277 = vadd.f32 %v1847, %v2135
        %v2278 = vadd.f32 %v1848, %v2140
        %v2279 = vadd.f32 %v1849, %v2145
        %v2280 = vadd.f32 %v1850, %v2150
        %v2281 = vadd.f32 %v1851, %v2155
        %v2282 = vadd.f32 %v1852, %v2160
        %v2283 = vadd.f32 %v1853, %v2165
        %v2284 = vadd.f32 %v1854, %v2170
        %v2285 = vadd.f32 %v1855, %v2175
        %v2286 = vadd.f32 %v1856, %v2180
        %v2287 = vadd.f32 %v1857, %v2185
        %v2288 = vadd.f32 %v1858, %v2190
        %v2289 = vadd.f32 %v1859, %v2195
        %v2290 = vadd.f32 %v1860, %v2200
        %v2291 = vadd.f32 %v1861, %v2205
        %v2292 = vadd.f32 %v1862, %v2210
        %v2293 = vadd.f32 %v1863, %v2215
        %v2294 = vadd.f32 %v1864, %v2220
        %v2295 = vadd.f32 %v1865, %v2225
        %v2296 = vadd.f32 %v1866, %v2230
        %v2297 = vadd.f32 %v1867, %v2235
        %v2298 = vadd.f32 %v1868, %v2240
        %v2299 = vadd.f32 %v1869, %v2245
        %v2300 = vadd.f32 %v1870, %v2250
        %v2301 = vadd.f32 %v1871, %v2255
        %v2302 = vadd.f32 %v1872, %v2260
        %v2303 = vadd.f32 %v1873, %v2265
        %v2304 = vld [vmem:[%s218 + $0x14] sm:$0xff]
        %v2305 = vld [vmem:[%s218 + $0x1c] sm:$0xff]
        %v2306 = vld [vmem:[%s218 + $0x24] sm:$0xff]
        %v2307 = vld [vmem:[%s218 + $0x2c] sm:$0xff]
        %v2308 = vld [vmem:[%s218 + $0x34] sm:$0xff]
        %v2309 = vld [vmem:[%s218 + $0x3c] sm:$0xff]
        %v2310 = vld [vmem:[%s218 + $0x44] sm:$0xff]
        %v2311 = vld [vmem:[%s218 + $0x4c] sm:$0xff]
        %v2312 = vld [vmem:[%s218 + $0x54] sm:$0xff]
        %v2313 = vld [vmem:[%s218 + $0x5c] sm:$0xff]
        %v2314 = vld [vmem:[%s218 + $0x64] sm:$0xff]
        %v2315 = vld [vmem:[%s218 + $0x6c] sm:$0xff]
        %v2316 = vld [vmem:[%s218 + $0x74] sm:$0xff]
        %v2317 = vld [vmem:[%s218 + $0x7c] sm:$0xff]
        %v2318 = vld [vmem:[%s218 + $0x84] sm:$0xff]
        %v2319 = vld [vmem:[%s218 + $0x8c] sm:$0xff]
        %v2320 = vld [vmem:[%s218 + $0x94] sm:$0xff]
        %v2321 = vld [vmem:[%s218 + $0x9c] sm:$0xff]
        %v2322 = vld [vmem:[%s218 + $0xa4] sm:$0xff]
        %v2323 = vld [vmem:[%s218 + $0xac] sm:$0xff]
        %v2324 = vld [vmem:[%s218 + $0xb4] sm:$0xff]
        %v2325 = vld [vmem:[%s218 + $0xbc] sm:$0xff]
        %v2326 = vld [vmem:[%s218 + $0xc4] sm:$0xff]
        %v2327 = vld [vmem:[%s218 + $0xcc] sm:$0xff]
        %v2328 = vld [vmem:[%s218 + $0xd4] sm:$0xff]
        %v2329 = vld [vmem:[%s218 + $0xdc] sm:$0xff]
        %v2330 = vld [vmem:[%s218 + $0xe4] sm:$0xff]
        %v2331 = vld [vmem:[%s218 + $0xec] sm:$0xff]
        %v2332 = vld [vmem:[%s218 + $0xf4] sm:$0xff]
        %v2333 = vld [vmem:[%s218 + $0xfc] sm:$0xff]
        %v2334 = vld [vmem:[%s218 + $0x104] sm:$0xff]
        %v2335 = vld [vmem:[%s218 + $0x10c] sm:$0xff]
        %v2336 = vld [vmem:[%s218 + $0x114] sm:$0xff]
        %v2337 = vld [vmem:[%s218 + $0x11c] sm:$0xff]
        %v2338 = vld [vmem:[%s218 + $0x124] sm:$0xff]
        %v2339 = vld [vmem:[%s218 + $0x12c] sm:$0xff]
        %s2340 = scalar_lea.vmem %s1, 20
        %v2341 = vld [vmem:[%s2340] sm:$0xf]
        %v2343 = vsel %vm300, %v2304, 0
        %v2346 = vsel %vm300, %v2305, 0
        %v2349 = vsel %vm300, %v2306, 0
        %v2352 = vsel %vm300, %v2307, 0
        %v2355 = vsel %vm300, %v2308, 0
        %v2358 = vsel %vm300, %v2309, 0
        %v2361 = vsel %vm300, %v2310, 0
        %v2364 = vsel %vm300, %v2311, 0
        %v2367 = vsel %vm300, %v2312, 0
        %v2370 = vsel %vm300, %v2313, 0
        %v2373 = vsel %vm300, %v2314, 0
        %v2376 = vsel %vm300, %v2315, 0
        %v2379 = vsel %vm300, %v2316, 0
        %v2382 = vsel %vm300, %v2317, 0
        %v2385 = vsel %vm300, %v2318, 0
        %v2388 = vsel %vm300, %v2319, 0
        %v2391 = vsel %vm300, %v2320, 0
        %v2394 = vsel %vm300, %v2321, 0
        %v2397 = vsel %vm300, %v2322, 0
        %v2400 = vsel %vm300, %v2323, 0
        %v2403 = vsel %vm300, %v2324, 0
        %v2406 = vsel %vm300, %v2325, 0
        %v2409 = vsel %vm300, %v2326, 0
        %v2412 = vsel %vm300, %v2327, 0
        %v2415 = vsel %vm300, %v2328, 0
        %v2418 = vsel %vm300, %v2329, 0
        %v2421 = vsel %vm300, %v2330, 0
        %v2424 = vsel %vm300, %v2331, 0
        %v2427 = vsel %vm300, %v2332, 0
        %v2430 = vsel %vm300, %v2333, 0
        %v2433 = vsel %vm300, %v2334, 0
        %v2436 = vsel %vm300, %v2335, 0
        %v2439 = vsel %vm300, %v2336, 0
        %v2442 = vsel %vm300, %v2337, 0
        %v2445 = vsel %vm300, %v2338, 0
        %v2448 = vsel %vm300, %v2339, 0
        %v2451 = vsel %vm409, %v2341, 0
        %2453 = vmatprep.subr.mxu0 0.0
        %2454 = vmatpush1.msra.mxu0 0.0
        %2455 = vmatprep.subr.mxu0 0.0
        %2456 = vmatpush1.msra.mxu0 0.0
        %2457 = vmatprep.subr.mxu0 0.0
        %2458 = vmatpush1.msra.mxu0 0.0
        %2459 = vmatprep.subr.mxu0 0.0
        %2460 = vmatpush1.msra.mxu0 0.0
        %2461 = vmatprep.subr.mxu0 0.0
        %2462 = vmatpush1.msra.mxu0 0.0
        %2463 = vmatprep.subr.mxu0 0.0
        %2464 = vmatpush1.msra.mxu0 0.0
        %2465 = vmatprep.subr.mxu0 0.0
        %2466 = vmatpush1.msra.mxu0 0.0
        %2467 = vmatprep.subr.mxu0 0.0
        %2468 = vmatpush1.msra.mxu0 0.0
        %2469 = vmatprep.subr.mxu0 0.0
        %2470 = vmatpush1.msra.mxu0 0.0
        %2471 = vmatprep.subr.mxu0 0.0
        %2472 = vmatpush1.msra.mxu0 0.0
        %2473 = vmatprep.subr.mxu0 0.0
        %2474 = vmatpush1.msra.mxu0 0.0
        %2475 = vmatprep.subr.mxu0 0.0
        %2476 = vmatpush1.msra.mxu0 0.0
        %2477 = vmatprep.subr.mxu0 0.0
        %2478 = vmatpush1.msra.mxu0 0.0
        %2479 = vmatprep.subr.mxu0 0.0
        %2480 = vmatpush1.msra.mxu0 0.0
        %2481 = vmatprep.subr.mxu0 0.0
        %2482 = vmatpush1.msra.mxu0 0.0
        %2483 = vmatprep.subr.mxu0 0.0
        %2484 = vmatpush1.msra.mxu0 %v2451
        %2485 = vmatprep.subr.mxu0 0.0
        %2486 = vmatpush2.msra.mxu0 0.0
        %2487 = vmatprep.subr.mxu0 0.0
        %2488 = vmatpush2.msra.mxu0 0.0
        %2489 = vmatprep.subr.mxu0 0.0
        %2490 = vmatpush2.msra.mxu0 0.0
        %2491 = vmatprep.subr.mxu0 0.0
        %2492 = vmatpush2.msra.mxu0 0.0
        %2493 = vmatprep.subr.mxu0 0.0
        %2494 = vmatpush2.msra.mxu0 0.0
        %2495 = vmatprep.subr.mxu0 0.0
        %2496 = vmatpush2.msra.mxu0 0.0
        %2497 = vmatprep.subr.mxu0 0.0
        %2498 = vmatpush2.msra.mxu0 0.0
        %2499 = vmatprep.subr.mxu0 0.0
        %2500 = vmatpush2.msra.mxu0 0.0
        %2501 = vmatprep.subr.mxu0 0.0
        %2502 = vmatpush2.msra.mxu0 0.0
        %2503 = vmatprep.subr.mxu0 0.0
        %2504 = vmatpush2.msra.mxu0 0.0
        %2505 = vmatprep.subr.mxu0 0.0
        %2506 = vmatpush2.msra.mxu0 0.0
        %2507 = vmatprep.subr.mxu0 0.0
        %2508 = vmatpush2.msra.mxu0 0.0
        %2509 = vmatprep.subr.mxu0 0.0
        %2510 = vmatpush2.msra.mxu0 0.0
        %2511 = vmatprep.subr.mxu0 0.0
        %2512 = vmatpush2.msra.mxu0 0.0
        %2513 = vmatprep.subr.mxu0 0.0
        %2514 = vmatpush2.msra.mxu0 0.0
        %2515 = vmatprep.subr.mxu0 0.0
        %2516 = vmatpush2.msra.mxu0 0.0
        %2517 = vmatprep.mubr.f32.mxu0 0.0
        %2518 = vmatmul.mubr.f32.gmra.mxu0 %v2343
        %v2519 = vpop.f32.mrf.mxu0
        %v2520 = vadd.f32 0.0, %v2519
        %v2521 = vpop.f32.mrf.mxu0
        %2522 = vmatprep.mubr.f32.mxu0 0.0
        %2523 = vmatmul.mubr.f32.gmra.mxu0 %v2346
        %v2524 = vpop.f32.mrf.mxu0
        %v2525 = vadd.f32 0.0, %v2524
        %v2526 = vpop.f32.mrf.mxu0
        %2527 = vmatprep.mubr.f32.mxu0 0.0
        %2528 = vmatmul.mubr.f32.gmra.mxu0 %v2349
        %v2529 = vpop.f32.mrf.mxu0
        %v2530 = vadd.f32 0.0, %v2529
        %v2531 = vpop.f32.mrf.mxu0
        %2532 = vmatprep.mubr.f32.mxu0 0.0
        %2533 = vmatmul.mubr.f32.gmra.mxu0 %v2352
        %v2534 = vpop.f32.mrf.mxu0
        %v2535 = vadd.f32 0.0, %v2534
        %v2536 = vpop.f32.mrf.mxu0
        %2537 = vmatprep.mubr.f32.mxu0 0.0
        %2538 = vmatmul.mubr.f32.gmra.mxu0 %v2355
        %v2539 = vpop.f32.mrf.mxu0
        %v2540 = vadd.f32 0.0, %v2539
        %v2541 = vpop.f32.mrf.mxu0
        %2542 = vmatprep.mubr.f32.mxu0 0.0
        %2543 = vmatmul.mubr.f32.gmra.mxu0 %v2358
        %v2544 = vpop.f32.mrf.mxu0
        %v2545 = vadd.f32 0.0, %v2544
        %v2546 = vpop.f32.mrf.mxu0
        %2547 = vmatprep.mubr.f32.mxu0 0.0
        %2548 = vmatmul.mubr.f32.gmra.mxu0 %v2361
        %v2549 = vpop.f32.mrf.mxu0
        %v2550 = vadd.f32 0.0, %v2549
        %v2551 = vpop.f32.mrf.mxu0
        %2552 = vmatprep.mubr.f32.mxu0 0.0
        %2553 = vmatmul.mubr.f32.gmra.mxu0 %v2364
        %v2554 = vpop.f32.mrf.mxu0
        %v2555 = vadd.f32 0.0, %v2554
        %v2556 = vpop.f32.mrf.mxu0
        %2557 = vmatprep.mubr.f32.mxu0 0.0
        %2558 = vmatmul.mubr.f32.gmra.mxu0 %v2367
        %v2559 = vpop.f32.mrf.mxu0
        %v2560 = vadd.f32 0.0, %v2559
        %v2561 = vpop.f32.mrf.mxu0
        %2562 = vmatprep.mubr.f32.mxu0 0.0
        %2563 = vmatmul.mubr.f32.gmra.mxu0 %v2370
        %v2564 = vpop.f32.mrf.mxu0
        %v2565 = vadd.f32 0.0, %v2564
        %v2566 = vpop.f32.mrf.mxu0
        %2567 = vmatprep.mubr.f32.mxu0 0.0
        %2568 = vmatmul.mubr.f32.gmra.mxu0 %v2373
        %v2569 = vpop.f32.mrf.mxu0
        %v2570 = vadd.f32 0.0, %v2569
        %v2571 = vpop.f32.mrf.mxu0
        %2572 = vmatprep.mubr.f32.mxu0 0.0
        %2573 = vmatmul.mubr.f32.gmra.mxu0 %v2376
        %v2574 = vpop.f32.mrf.mxu0
        %v2575 = vadd.f32 0.0, %v2574
        %v2576 = vpop.f32.mrf.mxu0
        %2577 = vmatprep.mubr.f32.mxu0 0.0
        %2578 = vmatmul.mubr.f32.gmra.mxu0 %v2379
        %v2579 = vpop.f32.mrf.mxu0
        %v2580 = vadd.f32 0.0, %v2579
        %v2581 = vpop.f32.mrf.mxu0
        %2582 = vmatprep.mubr.f32.mxu0 0.0
        %2583 = vmatmul.mubr.f32.gmra.mxu0 %v2382
        %v2584 = vpop.f32.mrf.mxu0
        %v2585 = vadd.f32 0.0, %v2584
        %v2586 = vpop.f32.mrf.mxu0
        %2587 = vmatprep.mubr.f32.mxu0 0.0
        %2588 = vmatmul.mubr.f32.gmra.mxu0 %v2385
        %v2589 = vpop.f32.mrf.mxu0
        %v2590 = vadd.f32 0.0, %v2589
        %v2591 = vpop.f32.mrf.mxu0
        %2592 = vmatprep.mubr.f32.mxu0 0.0
        %2593 = vmatmul.mubr.f32.gmra.mxu0 %v2388
        %v2594 = vpop.f32.mrf.mxu0
        %v2595 = vadd.f32 0.0, %v2594
        %v2596 = vpop.f32.mrf.mxu0
        %2597 = vmatprep.mubr.f32.mxu0 0.0
        %2598 = vmatmul.mubr.f32.gmra.mxu0 %v2391
        %v2599 = vpop.f32.mrf.mxu0
        %v2600 = vadd.f32 0.0, %v2599
        %v2601 = vpop.f32.mrf.mxu0
        %2602 = vmatprep.mubr.f32.mxu0 0.0
        %2603 = vmatmul.mubr.f32.gmra.mxu0 %v2394
        %v2604 = vpop.f32.mrf.mxu0
        %v2605 = vadd.f32 0.0, %v2604
        %v2606 = vpop.f32.mrf.mxu0
        %2607 = vmatprep.mubr.f32.mxu0 0.0
        %2608 = vmatmul.mubr.f32.gmra.mxu0 %v2397
        %v2609 = vpop.f32.mrf.mxu0
        %v2610 = vadd.f32 0.0, %v2609
        %v2611 = vpop.f32.mrf.mxu0
        %2612 = vmatprep.mubr.f32.mxu0 0.0
        %2613 = vmatmul.mubr.f32.gmra.mxu0 %v2400
        %v2614 = vpop.f32.mrf.mxu0
        %v2615 = vadd.f32 0.0, %v2614
        %v2616 = vpop.f32.mrf.mxu0
        %2617 = vmatprep.mubr.f32.mxu0 0.0
        %2618 = vmatmul.mubr.f32.gmra.mxu0 %v2403
        %v2619 = vpop.f32.mrf.mxu0
        %v2620 = vadd.f32 0.0, %v2619
        %v2621 = vpop.f32.mrf.mxu0
        %2622 = vmatprep.mubr.f32.mxu0 0.0
        %2623 = vmatmul.mubr.f32.gmra.mxu0 %v2406
        %v2624 = vpop.f32.mrf.mxu0
        %v2625 = vadd.f32 0.0, %v2624
        %v2626 = vpop.f32.mrf.mxu0
        %2627 = vmatprep.mubr.f32.mxu0 0.0
        %2628 = vmatmul.mubr.f32.gmra.mxu0 %v2409
        %v2629 = vpop.f32.mrf.mxu0
        %v2630 = vadd.f32 0.0, %v2629
        %v2631 = vpop.f32.mrf.mxu0
        %2632 = vmatprep.mubr.f32.mxu0 0.0
        %2633 = vmatmul.mubr.f32.gmra.mxu0 %v2412
        %v2634 = vpop.f32.mrf.mxu0
        %v2635 = vadd.f32 0.0, %v2634
        %v2636 = vpop.f32.mrf.mxu0
        %2637 = vmatprep.mubr.f32.mxu0 0.0
        %2638 = vmatmul.mubr.f32.gmra.mxu0 %v2415
        %v2639 = vpop.f32.mrf.mxu0
        %v2640 = vadd.f32 0.0, %v2639
        %v2641 = vpop.f32.mrf.mxu0
        %2642 = vmatprep.mubr.f32.mxu0 0.0
        %2643 = vmatmul.mubr.f32.gmra.mxu0 %v2418
        %v2644 = vpop.f32.mrf.mxu0
        %v2645 = vadd.f32 0.0, %v2644
        %v2646 = vpop.f32.mrf.mxu0
        %2647 = vmatprep.mubr.f32.mxu0 0.0
        %2648 = vmatmul.mubr.f32.gmra.mxu0 %v2421
        %v2649 = vpop.f32.mrf.mxu0
        %v2650 = vadd.f32 0.0, %v2649
        %v2651 = vpop.f32.mrf.mxu0
        %2652 = vmatprep.mubr.f32.mxu0 0.0
        %2653 = vmatmul.mubr.f32.gmra.mxu0 %v2424
        %v2654 = vpop.f32.mrf.mxu0
        %v2655 = vadd.f32 0.0, %v2654
        %v2656 = vpop.f32.mrf.mxu0
        %2657 = vmatprep.mubr.f32.mxu0 0.0
        %2658 = vmatmul.mubr.f32.gmra.mxu0 %v2427
        %v2659 = vpop.f32.mrf.mxu0
        %v2660 = vadd.f32 0.0, %v2659
        %v2661 = vpop.f32.mrf.mxu0
        %2662 = vmatprep.mubr.f32.mxu0 0.0
        %2663 = vmatmul.mubr.f32.gmra.mxu0 %v2430
        %v2664 = vpop.f32.mrf.mxu0
        %v2665 = vadd.f32 0.0, %v2664
        %v2666 = vpop.f32.mrf.mxu0
        %2667 = vmatprep.mubr.f32.mxu0 0.0
        %2668 = vmatmul.mubr.f32.gmra.mxu0 %v2433
        %v2669 = vpop.f32.mrf.mxu0
        %v2670 = vadd.f32 0.0, %v2669
        %v2671 = vpop.f32.mrf.mxu0
        %2672 = vmatprep.mubr.f32.mxu0 0.0
        %2673 = vmatmul.mubr.f32.gmra.mxu0 %v2436
        %v2674 = vpop.f32.mrf.mxu0
        %v2675 = vadd.f32 0.0, %v2674
        %v2676 = vpop.f32.mrf.mxu0
        %2677 = vmatprep.mubr.f32.mxu0 0.0
        %2678 = vmatmul.mubr.f32.gmra.mxu0 %v2439
        %v2679 = vpop.f32.mrf.mxu0
        %v2680 = vadd.f32 0.0, %v2679
        %v2681 = vpop.f32.mrf.mxu0
        %2682 = vmatprep.mubr.f32.mxu0 0.0
        %2683 = vmatmul.mubr.f32.gmra.mxu0 %v2442
        %v2684 = vpop.f32.mrf.mxu0
        %v2685 = vadd.f32 0.0, %v2684
        %v2686 = vpop.f32.mrf.mxu0
        %2687 = vmatprep.mubr.f32.mxu0 0.0
        %2688 = vmatmul.mubr.f32.gmra.mxu0 %v2445
        %v2689 = vpop.f32.mrf.mxu0
        %v2690 = vadd.f32 0.0, %v2689
        %v2691 = vpop.f32.mrf.mxu0
        %2692 = vmatprep.mubr.f32.mxu0 0.0
        %2693 = vmatmul.mubr.f32.gmra.mxu0 %v2448
        %v2694 = vpop.f32.mrf.mxu0
        %v2695 = vadd.f32 0.0, %v2694
        %v2696 = vpop.f32.mrf.mxu0
        %2697 = vdwg.mxu0
        %v2698 = vadd.f32 %v2268, %v2520
        %v2699 = vadd.f32 %v2269, %v2525
        %v2700 = vadd.f32 %v2270, %v2530
        %v2701 = vadd.f32 %v2271, %v2535
        %v2702 = vadd.f32 %v2272, %v2540
        %v2703 = vadd.f32 %v2273, %v2545
        %v2704 = vadd.f32 %v2274, %v2550
        %v2705 = vadd.f32 %v2275, %v2555
        %v2706 = vadd.f32 %v2276, %v2560
        %v2707 = vadd.f32 %v2277, %v2565
        %v2708 = vadd.f32 %v2278, %v2570
        %v2709 = vadd.f32 %v2279, %v2575
        %v2710 = vadd.f32 %v2280, %v2580
        %v2711 = vadd.f32 %v2281, %v2585
        %v2712 = vadd.f32 %v2282, %v2590
        %v2713 = vadd.f32 %v2283, %v2595
        %v2714 = vadd.f32 %v2284, %v2600
        %v2715 = vadd.f32 %v2285, %v2605
        %v2716 = vadd.f32 %v2286, %v2610
        %v2717 = vadd.f32 %v2287, %v2615
        %v2718 = vadd.f32 %v2288, %v2620
        %v2719 = vadd.f32 %v2289, %v2625
        %v2720 = vadd.f32 %v2290, %v2630
        %v2721 = vadd.f32 %v2291, %v2635
        %v2722 = vadd.f32 %v2292, %v2640
        %v2723 = vadd.f32 %v2293, %v2645
        %v2724 = vadd.f32 %v2294, %v2650
        %v2725 = vadd.f32 %v2295, %v2655
        %v2726 = vadd.f32 %v2296, %v2660
        %v2727 = vadd.f32 %v2297, %v2665
        %v2728 = vadd.f32 %v2298, %v2670
        %v2729 = vadd.f32 %v2299, %v2675
        %v2730 = vadd.f32 %v2300, %v2680
        %v2731 = vadd.f32 %v2301, %v2685
        %v2732 = vadd.f32 %v2302, %v2690
        %v2733 = vadd.f32 %v2303, %v2695
        %v2734 = vld [vmem:[%s218 + $0x24] sm:$0xff]
        %v2735 = vld [vmem:[%s218 + $0x2c] sm:$0xff]
        %v2736 = vld [vmem:[%s218 + $0x34] sm:$0xff]
        %v2737 = vld [vmem:[%s218 + $0x3c] sm:$0xff]
        %v2738 = vld [vmem:[%s218 + $0x44] sm:$0xff]
        %v2739 = vld [vmem:[%s218 + $0x4c] sm:$0xff]
        %v2740 = vld [vmem:[%s218 + $0x54] sm:$0xff]
        %v2741 = vld [vmem:[%s218 + $0x5c] sm:$0xff]
        %v2742 = vld [vmem:[%s218 + $0x64] sm:$0xff]
        %v2743 = vld [vmem:[%s218 + $0x6c] sm:$0xff]
        %v2744 = vld [vmem:[%s218 + $0x74] sm:$0xff]
        %v2745 = vld [vmem:[%s218 + $0x7c] sm:$0xff]
        %v2746 = vld [vmem:[%s218 + $0x84] sm:$0xff]
        %v2747 = vld [vmem:[%s218 + $0x8c] sm:$0xff]
        %v2748 = vld [vmem:[%s218 + $0x94] sm:$0xff]
        %v2749 = vld [vmem:[%s218 + $0x9c] sm:$0xff]
        %v2750 = vld [vmem:[%s218 + $0xa4] sm:$0xff]
        %v2751 = vld [vmem:[%s218 + $0xac] sm:$0xff]
        %v2752 = vld [vmem:[%s218 + $0xb4] sm:$0xff]
        %v2753 = vld [vmem:[%s218 + $0xbc] sm:$0xff]
        %v2754 = vld [vmem:[%s218 + $0xc4] sm:$0xff]
        %v2755 = vld [vmem:[%s218 + $0xcc] sm:$0xff]
        %v2756 = vld [vmem:[%s218 + $0xd4] sm:$0xff]
        %v2757 = vld [vmem:[%s218 + $0xdc] sm:$0xff]
        %v2758 = vld [vmem:[%s218 + $0xe4] sm:$0xff]
        %v2759 = vld [vmem:[%s218 + $0xec] sm:$0xff]
        %v2760 = vld [vmem:[%s218 + $0xf4] sm:$0xff]
        %v2761 = vld [vmem:[%s218 + $0xfc] sm:$0xff]
        %v2762 = vld [vmem:[%s218 + $0x104] sm:$0xff]
        %v2763 = vld [vmem:[%s218 + $0x10c] sm:$0xff]
        %v2764 = vld [vmem:[%s218 + $0x114] sm:$0xff]
        %v2765 = vld [vmem:[%s218 + $0x11c] sm:$0xff]
        %v2766 = vld [vmem:[%s218 + $0x124] sm:$0xff]
        %v2767 = vld [vmem:[%s218 + $0x12c] sm:$0xff]
        %v2768 = vld [vmem:[%s218 + $0x134] sm:$0xff]
        %v2769 = vld [vmem:[%s218 + $0x13c] sm:$0xff]
        %s2770 = scalar_lea.vmem %s1, 24
        %v2771 = vld [vmem:[%s2770] sm:$0xf]
        %v2773 = vsel %vm300, %v2734, 0
        %v2776 = vsel %vm300, %v2735, 0
        %v2779 = vsel %vm300, %v2736, 0
        %v2782 = vsel %vm300, %v2737, 0
        %v2785 = vsel %vm300, %v2738, 0
        %v2788 = vsel %vm300, %v2739, 0
        %v2791 = vsel %vm300, %v2740, 0
        %v2794 = vsel %vm300, %v2741, 0
        %v2797 = vsel %vm300, %v2742, 0
        %v2800 = vsel %vm300, %v2743, 0
        %v2803 = vsel %vm300, %v2744, 0
        %v2806 = vsel %vm300, %v2745, 0
        %v2809 = vsel %vm300, %v2746, 0
        %v2812 = vsel %vm300, %v2747, 0
        %v2815 = vsel %vm300, %v2748, 0
        %v2818 = vsel %vm300, %v2749, 0
        %v2821 = vsel %vm300, %v2750, 0
        %v2824 = vsel %vm300, %v2751, 0
        %v2827 = vsel %vm300, %v2752, 0
        %v2830 = vsel %vm300, %v2753, 0
        %v2833 = vsel %vm300, %v2754, 0
        %v2836 = vsel %vm300, %v2755, 0
        %v2839 = vsel %vm300, %v2756, 0
        %v2842 = vsel %vm300, %v2757, 0
        %v2845 = vsel %vm300, %v2758, 0
        %v2848 = vsel %vm300, %v2759, 0
        %v2851 = vsel %vm300, %v2760, 0
        %v2854 = vsel %vm300, %v2761, 0
        %v2857 = vsel %vm300, %v2762, 0
        %v2860 = vsel %vm300, %v2763, 0
        %v2863 = vsel %vm300, %v2764, 0
        %v2866 = vsel %vm300, %v2765, 0
        %v2869 = vsel %vm300, %v2766, 0
        %v2872 = vsel %vm300, %v2767, 0
        %v2875 = vsel %vm300, %v2768, 0
        %v2878 = vsel %vm300, %v2769, 0
        %v2881 = vsel %vm409, %v2771, 0
        %2883 = vmatprep.subr.mxu0 0.0
        %2884 = vmatpush1.msra.mxu0 0.0
        %2885 = vmatprep.subr.mxu0 0.0
        %2886 = vmatpush1.msra.mxu0 0.0
        %2887 = vmatprep.subr.mxu0 0.0
        %2888 = vmatpush1.msra.mxu0 0.0
        %2889 = vmatprep.subr.mxu0 0.0
        %2890 = vmatpush1.msra.mxu0 0.0
        %2891 = vmatprep.subr.mxu0 0.0
        %2892 = vmatpush1.msra.mxu0 0.0
        %2893 = vmatprep.subr.mxu0 0.0
        %2894 = vmatpush1.msra.mxu0 0.0
        %2895 = vmatprep.subr.mxu0 0.0
        %2896 = vmatpush1.msra.mxu0 0.0
        %2897 = vmatprep.subr.mxu0 0.0
        %2898 = vmatpush1.msra.mxu0 0.0
        %2899 = vmatprep.subr.mxu0 0.0
        %2900 = vmatpush1.msra.mxu0 0.0
        %2901 = vmatprep.subr.mxu0 0.0
        %2902 = vmatpush1.msra.mxu0 0.0
        %2903 = vmatprep.subr.mxu0 0.0
        %2904 = vmatpush1.msra.mxu0 0.0
        %2905 = vmatprep.subr.mxu0 0.0
        %2906 = vmatpush1.msra.mxu0 0.0
        %2907 = vmatprep.subr.mxu0 0.0
        %2908 = vmatpush1.msra.mxu0 0.0
        %2909 = vmatprep.subr.mxu0 0.0
        %2910 = vmatpush1.msra.mxu0 0.0
        %2911 = vmatprep.subr.mxu0 0.0
        %2912 = vmatpush1.msra.mxu0 0.0
        %2913 = vmatprep.subr.mxu0 0.0
        %2914 = vmatpush1.msra.mxu0 %v2881
        %2915 = vmatprep.subr.mxu0 0.0
        %2916 = vmatpush2.msra.mxu0 0.0
        %2917 = vmatprep.subr.mxu0 0.0
        %2918 = vmatpush2.msra.mxu0 0.0
        %2919 = vmatprep.subr.mxu0 0.0
        %2920 = vmatpush2.msra.mxu0 0.0
        %2921 = vmatprep.subr.mxu0 0.0
        %2922 = vmatpush2.msra.mxu0 0.0
        %2923 = vmatprep.subr.mxu0 0.0
        %2924 = vmatpush2.msra.mxu0 0.0
        %2925 = vmatprep.subr.mxu0 0.0
        %2926 = vmatpush2.msra.mxu0 0.0
        %2927 = vmatprep.subr.mxu0 0.0
        %2928 = vmatpush2.msra.mxu0 0.0
        %2929 = vmatprep.subr.mxu0 0.0
        %2930 = vmatpush2.msra.mxu0 0.0
        %2931 = vmatprep.subr.mxu0 0.0
        %2932 = vmatpush2.msra.mxu0 0.0
        %2933 = vmatprep.subr.mxu0 0.0
        %2934 = vmatpush2.msra.mxu0 0.0
        %2935 = vmatprep.subr.mxu0 0.0
        %2936 = vmatpush2.msra.mxu0 0.0
        %2937 = vmatprep.subr.mxu0 0.0
        %2938 = vmatpush2.msra.mxu0 0.0
        %2939 = vmatprep.subr.mxu0 0.0
        %2940 = vmatpush2.msra.mxu0 0.0
        %2941 = vmatprep.subr.mxu0 0.0
        %2942 = vmatpush2.msra.mxu0 0.0
        %2943 = vmatprep.subr.mxu0 0.0
        %2944 = vmatpush2.msra.mxu0 0.0
        %2945 = vmatprep.subr.mxu0 0.0
        %2946 = vmatpush2.msra.mxu0 0.0
        %2947 = vmatprep.mubr.f32.mxu0 0.0
        %2948 = vmatmul.mubr.f32.gmra.mxu0 %v2773
        %v2949 = vpop.f32.mrf.mxu0
        %v2950 = vadd.f32 0.0, %v2949
        %v2951 = vpop.f32.mrf.mxu0
        %2952 = vmatprep.mubr.f32.mxu0 0.0
        %2953 = vmatmul.mubr.f32.gmra.mxu0 %v2776
        %v2954 = vpop.f32.mrf.mxu0
        %v2955 = vadd.f32 0.0, %v2954
        %v2956 = vpop.f32.mrf.mxu0
        %2957 = vmatprep.mubr.f32.mxu0 0.0
        %2958 = vmatmul.mubr.f32.gmra.mxu0 %v2779
        %v2959 = vpop.f32.mrf.mxu0
        %v2960 = vadd.f32 0.0, %v2959
        %v2961 = vpop.f32.mrf.mxu0
        %2962 = vmatprep.mubr.f32.mxu0 0.0
        %2963 = vmatmul.mubr.f32.gmra.mxu0 %v2782
        %v2964 = vpop.f32.mrf.mxu0
        %v2965 = vadd.f32 0.0, %v2964
        %v2966 = vpop.f32.mrf.mxu0
        %2967 = vmatprep.mubr.f32.mxu0 0.0
        %2968 = vmatmul.mubr.f32.gmra.mxu0 %v2785
        %v2969 = vpop.f32.mrf.mxu0
        %v2970 = vadd.f32 0.0, %v2969
        %v2971 = vpop.f32.mrf.mxu0
        %2972 = vmatprep.mubr.f32.mxu0 0.0
        %2973 = vmatmul.mubr.f32.gmra.mxu0 %v2788
        %v2974 = vpop.f32.mrf.mxu0
        %v2975 = vadd.f32 0.0, %v2974
        %v2976 = vpop.f32.mrf.mxu0
        %2977 = vmatprep.mubr.f32.mxu0 0.0
        %2978 = vmatmul.mubr.f32.gmra.mxu0 %v2791
        %v2979 = vpop.f32.mrf.mxu0
        %v2980 = vadd.f32 0.0, %v2979
        %v2981 = vpop.f32.mrf.mxu0
        %2982 = vmatprep.mubr.f32.mxu0 0.0
        %2983 = vmatmul.mubr.f32.gmra.mxu0 %v2794
        %v2984 = vpop.f32.mrf.mxu0
        %v2985 = vadd.f32 0.0, %v2984
        %v2986 = vpop.f32.mrf.mxu0
        %2987 = vmatprep.mubr.f32.mxu0 0.0
        %2988 = vmatmul.mubr.f32.gmra.mxu0 %v2797
        %v2989 = vpop.f32.mrf.mxu0
        %v2990 = vadd.f32 0.0, %v2989
        %v2991 = vpop.f32.mrf.mxu0
        %2992 = vmatprep.mubr.f32.mxu0 0.0
        %2993 = vmatmul.mubr.f32.gmra.mxu0 %v2800
        %v2994 = vpop.f32.mrf.mxu0
        %v2995 = vadd.f32 0.0, %v2994
        %v2996 = vpop.f32.mrf.mxu0
        %2997 = vmatprep.mubr.f32.mxu0 0.0
        %2998 = vmatmul.mubr.f32.gmra.mxu0 %v2803
        %v2999 = vpop.f32.mrf.mxu0
        %v3000 = vadd.f32 0.0, %v2999
        %v3001 = vpop.f32.mrf.mxu0
        %3002 = vmatprep.mubr.f32.mxu0 0.0
        %3003 = vmatmul.mubr.f32.gmra.mxu0 %v2806
        %v3004 = vpop.f32.mrf.mxu0
        %v3005 = vadd.f32 0.0, %v3004
        %v3006 = vpop.f32.mrf.mxu0
        %3007 = vmatprep.mubr.f32.mxu0 0.0
        %3008 = vmatmul.mubr.f32.gmra.mxu0 %v2809
        %v3009 = vpop.f32.mrf.mxu0
        %v3010 = vadd.f32 0.0, %v3009
        %v3011 = vpop.f32.mrf.mxu0
        %3012 = vmatprep.mubr.f32.mxu0 0.0
        %3013 = vmatmul.mubr.f32.gmra.mxu0 %v2812
        %v3014 = vpop.f32.mrf.mxu0
        %v3015 = vadd.f32 0.0, %v3014
        %v3016 = vpop.f32.mrf.mxu0
        %3017 = vmatprep.mubr.f32.mxu0 0.0
        %3018 = vmatmul.mubr.f32.gmra.mxu0 %v2815
        %v3019 = vpop.f32.mrf.mxu0
        %v3020 = vadd.f32 0.0, %v3019
        %v3021 = vpop.f32.mrf.mxu0
        %3022 = vmatprep.mubr.f32.mxu0 0.0
        %3023 = vmatmul.mubr.f32.gmra.mxu0 %v2818
        %v3024 = vpop.f32.mrf.mxu0
        %v3025 = vadd.f32 0.0, %v3024
        %v3026 = vpop.f32.mrf.mxu0
        %3027 = vmatprep.mubr.f32.mxu0 0.0
        %3028 = vmatmul.mubr.f32.gmra.mxu0 %v2821
        %v3029 = vpop.f32.mrf.mxu0
        %v3030 = vadd.f32 0.0, %v3029
        %v3031 = vpop.f32.mrf.mxu0
        %3032 = vmatprep.mubr.f32.mxu0 0.0
        %3033 = vmatmul.mubr.f32.gmra.mxu0 %v2824
        %v3034 = vpop.f32.mrf.mxu0
        %v3035 = vadd.f32 0.0, %v3034
        %v3036 = vpop.f32.mrf.mxu0
        %3037 = vmatprep.mubr.f32.mxu0 0.0
        %3038 = vmatmul.mubr.f32.gmra.mxu0 %v2827
        %v3039 = vpop.f32.mrf.mxu0
        %v3040 = vadd.f32 0.0, %v3039
        %v3041 = vpop.f32.mrf.mxu0
        %3042 = vmatprep.mubr.f32.mxu0 0.0
        %3043 = vmatmul.mubr.f32.gmra.mxu0 %v2830
        %v3044 = vpop.f32.mrf.mxu0
        %v3045 = vadd.f32 0.0, %v3044
        %v3046 = vpop.f32.mrf.mxu0
        %3047 = vmatprep.mubr.f32.mxu0 0.0
        %3048 = vmatmul.mubr.f32.gmra.mxu0 %v2833
        %v3049 = vpop.f32.mrf.mxu0
        %v3050 = vadd.f32 0.0, %v3049
        %v3051 = vpop.f32.mrf.mxu0
        %3052 = vmatprep.mubr.f32.mxu0 0.0
        %3053 = vmatmul.mubr.f32.gmra.mxu0 %v2836
        %v3054 = vpop.f32.mrf.mxu0
        %v3055 = vadd.f32 0.0, %v3054
        %v3056 = vpop.f32.mrf.mxu0
        %3057 = vmatprep.mubr.f32.mxu0 0.0
        %3058 = vmatmul.mubr.f32.gmra.mxu0 %v2839
        %v3059 = vpop.f32.mrf.mxu0
        %v3060 = vadd.f32 0.0, %v3059
        %v3061 = vpop.f32.mrf.mxu0
        %3062 = vmatprep.mubr.f32.mxu0 0.0
        %3063 = vmatmul.mubr.f32.gmra.mxu0 %v2842
        %v3064 = vpop.f32.mrf.mxu0
        %v3065 = vadd.f32 0.0, %v3064
        %v3066 = vpop.f32.mrf.mxu0
        %3067 = vmatprep.mubr.f32.mxu0 0.0
        %3068 = vmatmul.mubr.f32.gmra.mxu0 %v2845
        %v3069 = vpop.f32.mrf.mxu0
        %v3070 = vadd.f32 0.0, %v3069
        %v3071 = vpop.f32.mrf.mxu0
        %3072 = vmatprep.mubr.f32.mxu0 0.0
        %3073 = vmatmul.mubr.f32.gmra.mxu0 %v2848
        %v3074 = vpop.f32.mrf.mxu0
        %v3075 = vadd.f32 0.0, %v3074
        %v3076 = vpop.f32.mrf.mxu0
        %3077 = vmatprep.mubr.f32.mxu0 0.0
        %3078 = vmatmul.mubr.f32.gmra.mxu0 %v2851
        %v3079 = vpop.f32.mrf.mxu0
        %v3080 = vadd.f32 0.0, %v3079
        %v3081 = vpop.f32.mrf.mxu0
        %3082 = vmatprep.mubr.f32.mxu0 0.0
        %3083 = vmatmul.mubr.f32.gmra.mxu0 %v2854
        %v3084 = vpop.f32.mrf.mxu0
        %v3085 = vadd.f32 0.0, %v3084
        %v3086 = vpop.f32.mrf.mxu0
        %3087 = vmatprep.mubr.f32.mxu0 0.0
        %3088 = vmatmul.mubr.f32.gmra.mxu0 %v2857
        %v3089 = vpop.f32.mrf.mxu0
        %v3090 = vadd.f32 0.0, %v3089
        %v3091 = vpop.f32.mrf.mxu0
        %3092 = vmatprep.mubr.f32.mxu0 0.0
        %3093 = vmatmul.mubr.f32.gmra.mxu0 %v2860
        %v3094 = vpop.f32.mrf.mxu0
        %v3095 = vadd.f32 0.0, %v3094
        %v3096 = vpop.f32.mrf.mxu0
        %3097 = vmatprep.mubr.f32.mxu0 0.0
        %3098 = vmatmul.mubr.f32.gmra.mxu0 %v2863
        %v3099 = vpop.f32.mrf.mxu0
        %v3100 = vadd.f32 0.0, %v3099
        %v3101 = vpop.f32.mrf.mxu0
        %3102 = vmatprep.mubr.f32.mxu0 0.0
        %3103 = vmatmul.mubr.f32.gmra.mxu0 %v2866
        %v3104 = vpop.f32.mrf.mxu0
        %v3105 = vadd.f32 0.0, %v3104
        %v3106 = vpop.f32.mrf.mxu0
        %3107 = vmatprep.mubr.f32.mxu0 0.0
        %3108 = vmatmul.mubr.f32.gmra.mxu0 %v2869
        %v3109 = vpop.f32.mrf.mxu0
        %v3110 = vadd.f32 0.0, %v3109
        %v3111 = vpop.f32.mrf.mxu0
        %3112 = vmatprep.mubr.f32.mxu0 0.0
        %3113 = vmatmul.mubr.f32.gmra.mxu0 %v2872
        %v3114 = vpop.f32.mrf.mxu0
        %v3115 = vadd.f32 0.0, %v3114
        %v3116 = vpop.f32.mrf.mxu0
        %3117 = vmatprep.mubr.f32.mxu0 0.0
        %3118 = vmatmul.mubr.f32.gmra.mxu0 %v2875
        %v3119 = vpop.f32.mrf.mxu0
        %v3120 = vadd.f32 0.0, %v3119
        %v3121 = vpop.f32.mrf.mxu0
        %3122 = vmatprep.mubr.f32.mxu0 0.0
        %3123 = vmatmul.mubr.f32.gmra.mxu0 %v2878
        %v3124 = vpop.f32.mrf.mxu0
        %v3125 = vadd.f32 0.0, %v3124
        %v3126 = vpop.f32.mrf.mxu0
        %3127 = vdwg.mxu0
        %v3128 = vadd.f32 %v2698, %v2950
        %v3129 = vadd.f32 %v2699, %v2955
        %v3130 = vadd.f32 %v2700, %v2960
        %v3131 = vadd.f32 %v2701, %v2965
        %v3132 = vadd.f32 %v2702, %v2970
        %v3133 = vadd.f32 %v2703, %v2975
        %v3134 = vadd.f32 %v2704, %v2980
        %v3135 = vadd.f32 %v2705, %v2985
        %v3136 = vadd.f32 %v2706, %v2990
        %v3137 = vadd.f32 %v2707, %v2995
        %v3138 = vadd.f32 %v2708, %v3000
        %v3139 = vadd.f32 %v2709, %v3005
        %v3140 = vadd.f32 %v2710, %v3010
        %v3141 = vadd.f32 %v2711, %v3015
        %v3142 = vadd.f32 %v2712, %v3020
        %v3143 = vadd.f32 %v2713, %v3025
        %v3144 = vadd.f32 %v2714, %v3030
        %v3145 = vadd.f32 %v2715, %v3035
        %v3146 = vadd.f32 %v2716, %v3040
        %v3147 = vadd.f32 %v2717, %v3045
        %v3148 = vadd.f32 %v2718, %v3050
        %v3149 = vadd.f32 %v2719, %v3055
        %v3150 = vadd.f32 %v2720, %v3060
        %v3151 = vadd.f32 %v2721, %v3065
        %v3152 = vadd.f32 %v2722, %v3070
        %v3153 = vadd.f32 %v2723, %v3075
        %v3154 = vadd.f32 %v2724, %v3080
        %v3155 = vadd.f32 %v2725, %v3085
        %v3156 = vadd.f32 %v2726, %v3090
        %v3157 = vadd.f32 %v2727, %v3095
        %v3158 = vadd.f32 %v2728, %v3100
        %v3159 = vadd.f32 %v2729, %v3105
        %v3160 = vadd.f32 %v2730, %v3110
        %v3161 = vadd.f32 %v2731, %v3115
        %v3162 = vadd.f32 %v2732, %v3120
        %v3163 = vadd.f32 %v2733, %v3125
        %v3164 = vld [vmem:[%s218 + $0x25] sm:$0xff]
        %v3165 = vld [vmem:[%s218 + $0x2d] sm:$0xff]
        %v3166 = vld [vmem:[%s218 + $0x35] sm:$0xff]
        %v3167 = vld [vmem:[%s218 + $0x3d] sm:$0xff]
        %v3168 = vld [vmem:[%s218 + $0x45] sm:$0xff]
        %v3169 = vld [vmem:[%s218 + $0x4d] sm:$0xff]
        %v3170 = vld [vmem:[%s218 + $0x55] sm:$0xff]
        %v3171 = vld [vmem:[%s218 + $0x5d] sm:$0xff]
        %v3172 = vld [vmem:[%s218 + $0x65] sm:$0xff]
        %v3173 = vld [vmem:[%s218 + $0x6d] sm:$0xff]
        %v3174 = vld [vmem:[%s218 + $0x75] sm:$0xff]
        %v3175 = vld [vmem:[%s218 + $0x7d] sm:$0xff]
        %v3176 = vld [vmem:[%s218 + $0x85] sm:$0xff]
        %v3177 = vld [vmem:[%s218 + $0x8d] sm:$0xff]
        %v3178 = vld [vmem:[%s218 + $0x95] sm:$0xff]
        %v3179 = vld [vmem:[%s218 + $0x9d] sm:$0xff]
        %v3180 = vld [vmem:[%s218 + $0xa5] sm:$0xff]
        %v3181 = vld [vmem:[%s218 + $0xad] sm:$0xff]
        %v3182 = vld [vmem:[%s218 + $0xb5] sm:$0xff]
        %v3183 = vld [vmem:[%s218 + $0xbd] sm:$0xff]
        %v3184 = vld [vmem:[%s218 + $0xc5] sm:$0xff]
        %v3185 = vld [vmem:[%s218 + $0xcd] sm:$0xff]
        %v3186 = vld [vmem:[%s218 + $0xd5] sm:$0xff]
        %v3187 = vld [vmem:[%s218 + $0xdd] sm:$0xff]
        %v3188 = vld [vmem:[%s218 + $0xe5] sm:$0xff]
        %v3189 = vld [vmem:[%s218 + $0xed] sm:$0xff]
        %v3190 = vld [vmem:[%s218 + $0xf5] sm:$0xff]
        %v3191 = vld [vmem:[%s218 + $0xfd] sm:$0xff]
        %v3192 = vld [vmem:[%s218 + $0x105] sm:$0xff]
        %v3193 = vld [vmem:[%s218 + $0x10d] sm:$0xff]
        %v3194 = vld [vmem:[%s218 + $0x115] sm:$0xff]
        %v3195 = vld [vmem:[%s218 + $0x11d] sm:$0xff]
        %v3196 = vld [vmem:[%s218 + $0x125] sm:$0xff]
        %v3197 = vld [vmem:[%s218 + $0x12d] sm:$0xff]
        %v3198 = vld [vmem:[%s218 + $0x135] sm:$0xff]
        %v3199 = vld [vmem:[%s218 + $0x13d] sm:$0xff]
        %s3200 = scalar_lea.vmem %s1, 28
        %v3201 = vld [vmem:[%s3200] sm:$0xf]
        %v3203 = vsel %vm300, %v3164, 0
        %v3206 = vsel %vm300, %v3165, 0
        %v3209 = vsel %vm300, %v3166, 0
        %v3212 = vsel %vm300, %v3167, 0
        %v3215 = vsel %vm300, %v3168, 0
        %v3218 = vsel %vm300, %v3169, 0
        %v3221 = vsel %vm300, %v3170, 0
        %v3224 = vsel %vm300, %v3171, 0
        %v3227 = vsel %vm300, %v3172, 0
        %v3230 = vsel %vm300, %v3173, 0
        %v3233 = vsel %vm300, %v3174, 0
        %v3236 = vsel %vm300, %v3175, 0
        %v3239 = vsel %vm300, %v3176, 0
        %v3242 = vsel %vm300, %v3177, 0
        %v3245 = vsel %vm300, %v3178, 0
        %v3248 = vsel %vm300, %v3179, 0
        %v3251 = vsel %vm300, %v3180, 0
        %v3254 = vsel %vm300, %v3181, 0
        %v3257 = vsel %vm300, %v3182, 0
        %v3260 = vsel %vm300, %v3183, 0
        %v3263 = vsel %vm300, %v3184, 0
        %v3266 = vsel %vm300, %v3185, 0
        %v3269 = vsel %vm300, %v3186, 0
        %v3272 = vsel %vm300, %v3187, 0
        %v3275 = vsel %vm300, %v3188, 0
        %v3278 = vsel %vm300, %v3189, 0
        %v3281 = vsel %vm300, %v3190, 0
        %v3284 = vsel %vm300, %v3191, 0
        %v3287 = vsel %vm300, %v3192, 0
        %v3290 = vsel %vm300, %v3193, 0
        %v3293 = vsel %vm300, %v3194, 0
        %v3296 = vsel %vm300, %v3195, 0
        %v3299 = vsel %vm300, %v3196, 0
        %v3302 = vsel %vm300, %v3197, 0
        %v3305 = vsel %vm300, %v3198, 0
        %v3308 = vsel %vm300, %v3199, 0
        %v3311 = vsel %vm409, %v3201, 0
        %3313 = vmatprep.subr.mxu0 0.0
        %3314 = vmatpush1.msra.mxu0 0.0
        %3315 = vmatprep.subr.mxu0 0.0
        %3316 = vmatpush1.msra.mxu0 0.0
        %3317 = vmatprep.subr.mxu0 0.0
        %3318 = vmatpush1.msra.mxu0 0.0
        %3319 = vmatprep.subr.mxu0 0.0
        %3320 = vmatpush1.msra.mxu0 0.0
        %3321 = vmatprep.subr.mxu0 0.0
        %3322 = vmatpush1.msra.mxu0 0.0
        %3323 = vmatprep.subr.mxu0 0.0
        %3324 = vmatpush1.msra.mxu0 0.0
        %3325 = vmatprep.subr.mxu0 0.0
        %3326 = vmatpush1.msra.mxu0 0.0
        %3327 = vmatprep.subr.mxu0 0.0
        %3328 = vmatpush1.msra.mxu0 0.0
        %3329 = vmatprep.subr.mxu0 0.0
        %3330 = vmatpush1.msra.mxu0 0.0
        %3331 = vmatprep.subr.mxu0 0.0
        %3332 = vmatpush1.msra.mxu0 0.0
        %3333 = vmatprep.subr.mxu0 0.0
        %3334 = vmatpush1.msra.mxu0 0.0
        %3335 = vmatprep.subr.mxu0 0.0
        %3336 = vmatpush1.msra.mxu0 0.0
        %3337 = vmatprep.subr.mxu0 0.0
        %3338 = vmatpush1.msra.mxu0 0.0
        %3339 = vmatprep.subr.mxu0 0.0
        %3340 = vmatpush1.msra.mxu0 0.0
        %3341 = vmatprep.subr.mxu0 0.0
        %3342 = vmatpush1.msra.mxu0 0.0
        %3343 = vmatprep.subr.mxu0 0.0
        %3344 = vmatpush1.msra.mxu0 %v3311
        %3345 = vmatprep.subr.mxu0 0.0
        %3346 = vmatpush2.msra.mxu0 0.0
        %3347 = vmatprep.subr.mxu0 0.0
        %3348 = vmatpush2.msra.mxu0 0.0
        %3349 = vmatprep.subr.mxu0 0.0
        %3350 = vmatpush2.msra.mxu0 0.0
        %3351 = vmatprep.subr.mxu0 0.0
        %3352 = vmatpush2.msra.mxu0 0.0
        %3353 = vmatprep.subr.mxu0 0.0
        %3354 = vmatpush2.msra.mxu0 0.0
        %3355 = vmatprep.subr.mxu0 0.0
        %3356 = vmatpush2.msra.mxu0 0.0
        %3357 = vmatprep.subr.mxu0 0.0
        %3358 = vmatpush2.msra.mxu0 0.0
        %3359 = vmatprep.subr.mxu0 0.0
        %3360 = vmatpush2.msra.mxu0 0.0
        %3361 = vmatprep.subr.mxu0 0.0
        %3362 = vmatpush2.msra.mxu0 0.0
        %3363 = vmatprep.subr.mxu0 0.0
        %3364 = vmatpush2.msra.mxu0 0.0
        %3365 = vmatprep.subr.mxu0 0.0
        %3366 = vmatpush2.msra.mxu0 0.0
        %3367 = vmatprep.subr.mxu0 0.0
        %3368 = vmatpush2.msra.mxu0 0.0
        %3369 = vmatprep.subr.mxu0 0.0
        %3370 = vmatpush2.msra.mxu0 0.0
        %3371 = vmatprep.subr.mxu0 0.0
        %3372 = vmatpush2.msra.mxu0 0.0
        %3373 = vmatprep.subr.mxu0 0.0
        %3374 = vmatpush2.msra.mxu0 0.0
        %3375 = vmatprep.subr.mxu0 0.0
        %3376 = vmatpush2.msra.mxu0 0.0
        %3377 = vmatprep.mubr.f32.mxu0 0.0
        %3378 = vmatmul.mubr.f32.gmra.mxu0 %v3203
        %v3379 = vpop.f32.mrf.mxu0
        %v3380 = vadd.f32 0.0, %v3379
        %v3381 = vpop.f32.mrf.mxu0
        %3382 = vmatprep.mubr.f32.mxu0 0.0
        %3383 = vmatmul.mubr.f32.gmra.mxu0 %v3206
        %v3384 = vpop.f32.mrf.mxu0
        %v3385 = vadd.f32 0.0, %v3384
        %v3386 = vpop.f32.mrf.mxu0
        %3387 = vmatprep.mubr.f32.mxu0 0.0
        %3388 = vmatmul.mubr.f32.gmra.mxu0 %v3209
        %v3389 = vpop.f32.mrf.mxu0
        %v3390 = vadd.f32 0.0, %v3389
        %v3391 = vpop.f32.mrf.mxu0
        %3392 = vmatprep.mubr.f32.mxu0 0.0
        %3393 = vmatmul.mubr.f32.gmra.mxu0 %v3212
        %v3394 = vpop.f32.mrf.mxu0
        %v3395 = vadd.f32 0.0, %v3394
        %v3396 = vpop.f32.mrf.mxu0
        %3397 = vmatprep.mubr.f32.mxu0 0.0
        %3398 = vmatmul.mubr.f32.gmra.mxu0 %v3215
        %v3399 = vpop.f32.mrf.mxu0
        %v3400 = vadd.f32 0.0, %v3399
        %v3401 = vpop.f32.mrf.mxu0
        %3402 = vmatprep.mubr.f32.mxu0 0.0
        %3403 = vmatmul.mubr.f32.gmra.mxu0 %v3218
        %v3404 = vpop.f32.mrf.mxu0
        %v3405 = vadd.f32 0.0, %v3404
        %v3406 = vpop.f32.mrf.mxu0
        %3407 = vmatprep.mubr.f32.mxu0 0.0
        %3408 = vmatmul.mubr.f32.gmra.mxu0 %v3221
        %v3409 = vpop.f32.mrf.mxu0
        %v3410 = vadd.f32 0.0, %v3409
        %v3411 = vpop.f32.mrf.mxu0
        %3412 = vmatprep.mubr.f32.mxu0 0.0
        %3413 = vmatmul.mubr.f32.gmra.mxu0 %v3224
        %v3414 = vpop.f32.mrf.mxu0
        %v3415 = vadd.f32 0.0, %v3414
        %v3416 = vpop.f32.mrf.mxu0
        %3417 = vmatprep.mubr.f32.mxu0 0.0
        %3418 = vmatmul.mubr.f32.gmra.mxu0 %v3227
        %v3419 = vpop.f32.mrf.mxu0
        %v3420 = vadd.f32 0.0, %v3419
        %v3421 = vpop.f32.mrf.mxu0
        %3422 = vmatprep.mubr.f32.mxu0 0.0
        %3423 = vmatmul.mubr.f32.gmra.mxu0 %v3230
        %v3424 = vpop.f32.mrf.mxu0
        %v3425 = vadd.f32 0.0, %v3424
        %v3426 = vpop.f32.mrf.mxu0
        %3427 = vmatprep.mubr.f32.mxu0 0.0
        %3428 = vmatmul.mubr.f32.gmra.mxu0 %v3233
        %v3429 = vpop.f32.mrf.mxu0
        %v3430 = vadd.f32 0.0, %v3429
        %v3431 = vpop.f32.mrf.mxu0
        %3432 = vmatprep.mubr.f32.mxu0 0.0
        %3433 = vmatmul.mubr.f32.gmra.mxu0 %v3236
        %v3434 = vpop.f32.mrf.mxu0
        %v3435 = vadd.f32 0.0, %v3434
        %v3436 = vpop.f32.mrf.mxu0
        %3437 = vmatprep.mubr.f32.mxu0 0.0
        %3438 = vmatmul.mubr.f32.gmra.mxu0 %v3239
        %v3439 = vpop.f32.mrf.mxu0
        %v3440 = vadd.f32 0.0, %v3439
        %v3441 = vpop.f32.mrf.mxu0
        %3442 = vmatprep.mubr.f32.mxu0 0.0
        %3443 = vmatmul.mubr.f32.gmra.mxu0 %v3242
        %v3444 = vpop.f32.mrf.mxu0
        %v3445 = vadd.f32 0.0, %v3444
        %v3446 = vpop.f32.mrf.mxu0
        %3447 = vmatprep.mubr.f32.mxu0 0.0
        %3448 = vmatmul.mubr.f32.gmra.mxu0 %v3245
        %v3449 = vpop.f32.mrf.mxu0
        %v3450 = vadd.f32 0.0, %v3449
        %v3451 = vpop.f32.mrf.mxu0
        %3452 = vmatprep.mubr.f32.mxu0 0.0
        %3453 = vmatmul.mubr.f32.gmra.mxu0 %v3248
        %v3454 = vpop.f32.mrf.mxu0
        %v3455 = vadd.f32 0.0, %v3454
        %v3456 = vpop.f32.mrf.mxu0
        %3457 = vmatprep.mubr.f32.mxu0 0.0
        %3458 = vmatmul.mubr.f32.gmra.mxu0 %v3251
        %v3459 = vpop.f32.mrf.mxu0
        %v3460 = vadd.f32 0.0, %v3459
        %v3461 = vpop.f32.mrf.mxu0
        %3462 = vmatprep.mubr.f32.mxu0 0.0
        %3463 = vmatmul.mubr.f32.gmra.mxu0 %v3254
        %v3464 = vpop.f32.mrf.mxu0
        %v3465 = vadd.f32 0.0, %v3464
        %v3466 = vpop.f32.mrf.mxu0
        %3467 = vmatprep.mubr.f32.mxu0 0.0
        %3468 = vmatmul.mubr.f32.gmra.mxu0 %v3257
        %v3469 = vpop.f32.mrf.mxu0
        %v3470 = vadd.f32 0.0, %v3469
        %v3471 = vpop.f32.mrf.mxu0
        %3472 = vmatprep.mubr.f32.mxu0 0.0
        %3473 = vmatmul.mubr.f32.gmra.mxu0 %v3260
        %v3474 = vpop.f32.mrf.mxu0
        %v3475 = vadd.f32 0.0, %v3474
        %v3476 = vpop.f32.mrf.mxu0
        %3477 = vmatprep.mubr.f32.mxu0 0.0
        %3478 = vmatmul.mubr.f32.gmra.mxu0 %v3263
        %v3479 = vpop.f32.mrf.mxu0
        %v3480 = vadd.f32 0.0, %v3479
        %v3481 = vpop.f32.mrf.mxu0
        %3482 = vmatprep.mubr.f32.mxu0 0.0
        %3483 = vmatmul.mubr.f32.gmra.mxu0 %v3266
        %v3484 = vpop.f32.mrf.mxu0
        %v3485 = vadd.f32 0.0, %v3484
        %v3486 = vpop.f32.mrf.mxu0
        %3487 = vmatprep.mubr.f32.mxu0 0.0
        %3488 = vmatmul.mubr.f32.gmra.mxu0 %v3269
        %v3489 = vpop.f32.mrf.mxu0
        %v3490 = vadd.f32 0.0, %v3489
        %v3491 = vpop.f32.mrf.mxu0
        %3492 = vmatprep.mubr.f32.mxu0 0.0
        %3493 = vmatmul.mubr.f32.gmra.mxu0 %v3272
        %v3494 = vpop.f32.mrf.mxu0
        %v3495 = vadd.f32 0.0, %v3494
        %v3496 = vpop.f32.mrf.mxu0
        %3497 = vmatprep.mubr.f32.mxu0 0.0
        %3498 = vmatmul.mubr.f32.gmra.mxu0 %v3275
        %v3499 = vpop.f32.mrf.mxu0
        %v3500 = vadd.f32 0.0, %v3499
        %v3501 = vpop.f32.mrf.mxu0
        %3502 = vmatprep.mubr.f32.mxu0 0.0
        %3503 = vmatmul.mubr.f32.gmra.mxu0 %v3278
        %v3504 = vpop.f32.mrf.mxu0
        %v3505 = vadd.f32 0.0, %v3504
        %v3506 = vpop.f32.mrf.mxu0
        %3507 = vmatprep.mubr.f32.mxu0 0.0
        %3508 = vmatmul.mubr.f32.gmra.mxu0 %v3281
        %v3509 = vpop.f32.mrf.mxu0
        %v3510 = vadd.f32 0.0, %v3509
        %v3511 = vpop.f32.mrf.mxu0
        %3512 = vmatprep.mubr.f32.mxu0 0.0
        %3513 = vmatmul.mubr.f32.gmra.mxu0 %v3284
        %v3514 = vpop.f32.mrf.mxu0
        %v3515 = vadd.f32 0.0, %v3514
        %v3516 = vpop.f32.mrf.mxu0
        %3517 = vmatprep.mubr.f32.mxu0 0.0
        %3518 = vmatmul.mubr.f32.gmra.mxu0 %v3287
        %v3519 = vpop.f32.mrf.mxu0
        %v3520 = vadd.f32 0.0, %v3519
        %v3521 = vpop.f32.mrf.mxu0
        %3522 = vmatprep.mubr.f32.mxu0 0.0
        %3523 = vmatmul.mubr.f32.gmra.mxu0 %v3290
        %v3524 = vpop.f32.mrf.mxu0
        %v3525 = vadd.f32 0.0, %v3524
        %v3526 = vpop.f32.mrf.mxu0
        %3527 = vmatprep.mubr.f32.mxu0 0.0
        %3528 = vmatmul.mubr.f32.gmra.mxu0 %v3293
        %v3529 = vpop.f32.mrf.mxu0
        %v3530 = vadd.f32 0.0, %v3529
        %v3531 = vpop.f32.mrf.mxu0
        %3532 = vmatprep.mubr.f32.mxu0 0.0
        %3533 = vmatmul.mubr.f32.gmra.mxu0 %v3296
        %v3534 = vpop.f32.mrf.mxu0
        %v3535 = vadd.f32 0.0, %v3534
        %v3536 = vpop.f32.mrf.mxu0
        %3537 = vmatprep.mubr.f32.mxu0 0.0
        %3538 = vmatmul.mubr.f32.gmra.mxu0 %v3299
        %v3539 = vpop.f32.mrf.mxu0
        %v3540 = vadd.f32 0.0, %v3539
        %v3541 = vpop.f32.mrf.mxu0
        %3542 = vmatprep.mubr.f32.mxu0 0.0
        %3543 = vmatmul.mubr.f32.gmra.mxu0 %v3302
        %v3544 = vpop.f32.mrf.mxu0
        %v3545 = vadd.f32 0.0, %v3544
        %v3546 = vpop.f32.mrf.mxu0
        %3547 = vmatprep.mubr.f32.mxu0 0.0
        %3548 = vmatmul.mubr.f32.gmra.mxu0 %v3305
        %v3549 = vpop.f32.mrf.mxu0
        %v3550 = vadd.f32 0.0, %v3549
        %v3551 = vpop.f32.mrf.mxu0
        %3552 = vmatprep.mubr.f32.mxu0 0.0
        %3553 = vmatmul.mubr.f32.gmra.mxu0 %v3308
        %v3554 = vpop.f32.mrf.mxu0
        %v3555 = vadd.f32 0.0, %v3554
        %v3556 = vpop.f32.mrf.mxu0
        %3557 = vdwg.mxu0
        %v3558 = vadd.f32 %v3128, %v3380
        %v3559 = vadd.f32 %v3129, %v3385
        %v3560 = vadd.f32 %v3130, %v3390
        %v3561 = vadd.f32 %v3131, %v3395
        %v3562 = vadd.f32 %v3132, %v3400
        %v3563 = vadd.f32 %v3133, %v3405
        %v3564 = vadd.f32 %v3134, %v3410
        %v3565 = vadd.f32 %v3135, %v3415
        %v3566 = vadd.f32 %v3136, %v3420
        %v3567 = vadd.f32 %v3137, %v3425
        %v3568 = vadd.f32 %v3138, %v3430
        %v3569 = vadd.f32 %v3139, %v3435
        %v3570 = vadd.f32 %v3140, %v3440
        %v3571 = vadd.f32 %v3141, %v3445
        %v3572 = vadd.f32 %v3142, %v3450
        %v3573 = vadd.f32 %v3143, %v3455
        %v3574 = vadd.f32 %v3144, %v3460
        %v3575 = vadd.f32 %v3145, %v3465
        %v3576 = vadd.f32 %v3146, %v3470
        %v3577 = vadd.f32 %v3147, %v3475
        %v3578 = vadd.f32 %v3148, %v3480
        %v3579 = vadd.f32 %v3149, %v3485
        %v3580 = vadd.f32 %v3150, %v3490
        %v3581 = vadd.f32 %v3151, %v3495
        %v3582 = vadd.f32 %v3152, %v3500
        %v3583 = vadd.f32 %v3153, %v3505
        %v3584 = vadd.f32 %v3154, %v3510
        %v3585 = vadd.f32 %v3155, %v3515
        %v3586 = vadd.f32 %v3156, %v3520
        %v3587 = vadd.f32 %v3157, %v3525
        %v3588 = vadd.f32 %v3158, %v3530
        %v3589 = vadd.f32 %v3159, %v3535
        %v3590 = vadd.f32 %v3160, %v3540
        %v3591 = vadd.f32 %v3161, %v3545
        %v3592 = vadd.f32 %v3162, %v3550
        %v3593 = vadd.f32 %v3163, %v3555
        %v3594 = vld [vmem:[%s218 + $0x26] sm:$0xff]
        %v3595 = vld [vmem:[%s218 + $0x2e] sm:$0xff]
        %v3596 = vld [vmem:[%s218 + $0x36] sm:$0xff]
        %v3597 = vld [vmem:[%s218 + $0x3e] sm:$0xff]
        %v3598 = vld [vmem:[%s218 + $0x46] sm:$0xff]
        %v3599 = vld [vmem:[%s218 + $0x4e] sm:$0xff]
        %v3600 = vld [vmem:[%s218 + $0x56] sm:$0xff]
        %v3601 = vld [vmem:[%s218 + $0x5e] sm:$0xff]
        %v3602 = vld [vmem:[%s218 + $0x66] sm:$0xff]
        %v3603 = vld [vmem:[%s218 + $0x6e] sm:$0xff]
        %v3604 = vld [vmem:[%s218 + $0x76] sm:$0xff]
        %v3605 = vld [vmem:[%s218 + $0x7e] sm:$0xff]
        %v3606 = vld [vmem:[%s218 + $0x86] sm:$0xff]
        %v3607 = vld [vmem:[%s218 + $0x8e] sm:$0xff]
        %v3608 = vld [vmem:[%s218 + $0x96] sm:$0xff]
        %v3609 = vld [vmem:[%s218 + $0x9e] sm:$0xff]
        %v3610 = vld [vmem:[%s218 + $0xa6] sm:$0xff]
        %v3611 = vld [vmem:[%s218 + $0xae] sm:$0xff]
        %v3612 = vld [vmem:[%s218 + $0xb6] sm:$0xff]
        %v3613 = vld [vmem:[%s218 + $0xbe] sm:$0xff]
        %v3614 = vld [vmem:[%s218 + $0xc6] sm:$0xff]
        %v3615 = vld [vmem:[%s218 + $0xce] sm:$0xff]
        %v3616 = vld [vmem:[%s218 + $0xd6] sm:$0xff]
        %v3617 = vld [vmem:[%s218 + $0xde] sm:$0xff]
        %v3618 = vld [vmem:[%s218 + $0xe6] sm:$0xff]
        %v3619 = vld [vmem:[%s218 + $0xee] sm:$0xff]
        %v3620 = vld [vmem:[%s218 + $0xf6] sm:$0xff]
        %v3621 = vld [vmem:[%s218 + $0xfe] sm:$0xff]
        %v3622 = vld [vmem:[%s218 + $0x106] sm:$0xff]
        %v3623 = vld [vmem:[%s218 + $0x10e] sm:$0xff]
        %v3624 = vld [vmem:[%s218 + $0x116] sm:$0xff]
        %v3625 = vld [vmem:[%s218 + $0x11e] sm:$0xff]
        %v3626 = vld [vmem:[%s218 + $0x126] sm:$0xff]
        %v3627 = vld [vmem:[%s218 + $0x12e] sm:$0xff]
        %v3628 = vld [vmem:[%s218 + $0x136] sm:$0xff]
        %v3629 = vld [vmem:[%s218 + $0x13e] sm:$0xff]
        %s3630 = scalar_lea.vmem %s1, 32
        %v3631 = vld [vmem:[%s3630] sm:$0xf]
        %v3633 = vsel %vm300, %v3594, 0
        %v3636 = vsel %vm300, %v3595, 0
        %v3639 = vsel %vm300, %v3596, 0
        %v3642 = vsel %vm300, %v3597, 0
        %v3645 = vsel %vm300, %v3598, 0
        %v3648 = vsel %vm300, %v3599, 0
        %v3651 = vsel %vm300, %v3600, 0
        %v3654 = vsel %vm300, %v3601, 0
        %v3657 = vsel %vm300, %v3602, 0
        %v3660 = vsel %vm300, %v3603, 0
        %v3663 = vsel %vm300, %v3604, 0
        %v3666 = vsel %vm300, %v3605, 0
        %v3669 = vsel %vm300, %v3606, 0
        %v3672 = vsel %vm300, %v3607, 0
        %v3675 = vsel %vm300, %v3608, 0
        %v3678 = vsel %vm300, %v3609, 0
        %v3681 = vsel %vm300, %v3610, 0
        %v3684 = vsel %vm300, %v3611, 0
        %v3687 = vsel %vm300, %v3612, 0
        %v3690 = vsel %vm300, %v3613, 0
        %v3693 = vsel %vm300, %v3614, 0
        %v3696 = vsel %vm300, %v3615, 0
        %v3699 = vsel %vm300, %v3616, 0
        %v3702 = vsel %vm300, %v3617, 0
        %v3705 = vsel %vm300, %v3618, 0
        %v3708 = vsel %vm300, %v3619, 0
        %v3711 = vsel %vm300, %v3620, 0
        %v3714 = vsel %vm300, %v3621, 0
        %v3717 = vsel %vm300, %v3622, 0
        %v3720 = vsel %vm300, %v3623, 0
        %v3723 = vsel %vm300, %v3624, 0
        %v3726 = vsel %vm300, %v3625, 0
        %v3729 = vsel %vm300, %v3626, 0
        %v3732 = vsel %vm300, %v3627, 0
        %v3735 = vsel %vm300, %v3628, 0
        %v3738 = vsel %vm300, %v3629, 0
        %v3741 = vsel %vm409, %v3631, 0
        %3743 = vmatprep.subr.mxu0 0.0
        %3744 = vmatpush1.msra.mxu0 0.0
        %3745 = vmatprep.subr.mxu0 0.0
        %3746 = vmatpush1.msra.mxu0 0.0
        %3747 = vmatprep.subr.mxu0 0.0
        %3748 = vmatpush1.msra.mxu0 0.0
        %3749 = vmatprep.subr.mxu0 0.0
        %3750 = vmatpush1.msra.mxu0 0.0
        %3751 = vmatprep.subr.mxu0 0.0
        %3752 = vmatpush1.msra.mxu0 0.0
        %3753 = vmatprep.subr.mxu0 0.0
        %3754 = vmatpush1.msra.mxu0 0.0
        %3755 = vmatprep.subr.mxu0 0.0
        %3756 = vmatpush1.msra.mxu0 0.0
        %3757 = vmatprep.subr.mxu0 0.0
        %3758 = vmatpush1.msra.mxu0 0.0
        %3759 = vmatprep.subr.mxu0 0.0
        %3760 = vmatpush1.msra.mxu0 0.0
        %3761 = vmatprep.subr.mxu0 0.0
        %3762 = vmatpush1.msra.mxu0 0.0
        %3763 = vmatprep.subr.mxu0 0.0
        %3764 = vmatpush1.msra.mxu0 0.0
        %3765 = vmatprep.subr.mxu0 0.0
        %3766 = vmatpush1.msra.mxu0 0.0
        %3767 = vmatprep.subr.mxu0 0.0
        %3768 = vmatpush1.msra.mxu0 0.0
        %3769 = vmatprep.subr.mxu0 0.0
        %3770 = vmatpush1.msra.mxu0 0.0
        %3771 = vmatprep.subr.mxu0 0.0
        %3772 = vmatpush1.msra.mxu0 0.0
        %3773 = vmatprep.subr.mxu0 0.0
        %3774 = vmatpush1.msra.mxu0 %v3741
        %3775 = vmatprep.subr.mxu0 0.0
        %3776 = vmatpush2.msra.mxu0 0.0
        %3777 = vmatprep.subr.mxu0 0.0
        %3778 = vmatpush2.msra.mxu0 0.0
        %3779 = vmatprep.subr.mxu0 0.0
        %3780 = vmatpush2.msra.mxu0 0.0
        %3781 = vmatprep.subr.mxu0 0.0
        %3782 = vmatpush2.msra.mxu0 0.0
        %3783 = vmatprep.subr.mxu0 0.0
        %3784 = vmatpush2.msra.mxu0 0.0
        %3785 = vmatprep.subr.mxu0 0.0
        %3786 = vmatpush2.msra.mxu0 0.0
        %3787 = vmatprep.subr.mxu0 0.0
        %3788 = vmatpush2.msra.mxu0 0.0
        %3789 = vmatprep.subr.mxu0 0.0
        %3790 = vmatpush2.msra.mxu0 0.0
        %3791 = vmatprep.subr.mxu0 0.0
        %3792 = vmatpush2.msra.mxu0 0.0
        %3793 = vmatprep.subr.mxu0 0.0
        %3794 = vmatpush2.msra.mxu0 0.0
        %3795 = vmatprep.subr.mxu0 0.0
        %3796 = vmatpush2.msra.mxu0 0.0
        %3797 = vmatprep.subr.mxu0 0.0
        %3798 = vmatpush2.msra.mxu0 0.0
        %3799 = vmatprep.subr.mxu0 0.0
        %3800 = vmatpush2.msra.mxu0 0.0
        %3801 = vmatprep.subr.mxu0 0.0
        %3802 = vmatpush2.msra.mxu0 0.0
        %3803 = vmatprep.subr.mxu0 0.0
        %3804 = vmatpush2.msra.mxu0 0.0
        %3805 = vmatprep.subr.mxu0 0.0
        %3806 = vmatpush2.msra.mxu0 0.0
        %3807 = vmatprep.mubr.f32.mxu0 0.0
        %3808 = vmatmul.mubr.f32.gmra.mxu0 %v3633
        %v3809 = vpop.f32.mrf.mxu0
        %v3810 = vadd.f32 0.0, %v3809
        %v3811 = vpop.f32.mrf.mxu0
        %3812 = vmatprep.mubr.f32.mxu0 0.0
        %3813 = vmatmul.mubr.f32.gmra.mxu0 %v3636
        %v3814 = vpop.f32.mrf.mxu0
        %v3815 = vadd.f32 0.0, %v3814
        %v3816 = vpop.f32.mrf.mxu0
        %3817 = vmatprep.mubr.f32.mxu0 0.0
        %3818 = vmatmul.mubr.f32.gmra.mxu0 %v3639
        %v3819 = vpop.f32.mrf.mxu0
        %v3820 = vadd.f32 0.0, %v3819
        %v3821 = vpop.f32.mrf.mxu0
        %3822 = vmatprep.mubr.f32.mxu0 0.0
        %3823 = vmatmul.mubr.f32.gmra.mxu0 %v3642
        %v3824 = vpop.f32.mrf.mxu0
        %v3825 = vadd.f32 0.0, %v3824
        %v3826 = vpop.f32.mrf.mxu0
        %3827 = vmatprep.mubr.f32.mxu0 0.0
        %3828 = vmatmul.mubr.f32.gmra.mxu0 %v3645
        %v3829 = vpop.f32.mrf.mxu0
        %v3830 = vadd.f32 0.0, %v3829
        %v3831 = vpop.f32.mrf.mxu0
        %3832 = vmatprep.mubr.f32.mxu0 0.0
        %3833 = vmatmul.mubr.f32.gmra.mxu0 %v3648
        %v3834 = vpop.f32.mrf.mxu0
        %v3835 = vadd.f32 0.0, %v3834
        %v3836 = vpop.f32.mrf.mxu0
        %3837 = vmatprep.mubr.f32.mxu0 0.0
        %3838 = vmatmul.mubr.f32.gmra.mxu0 %v3651
        %v3839 = vpop.f32.mrf.mxu0
        %v3840 = vadd.f32 0.0, %v3839
        %v3841 = vpop.f32.mrf.mxu0
        %3842 = vmatprep.mubr.f32.mxu0 0.0
        %3843 = vmatmul.mubr.f32.gmra.mxu0 %v3654
        %v3844 = vpop.f32.mrf.mxu0
        %v3845 = vadd.f32 0.0, %v3844
        %v3846 = vpop.f32.mrf.mxu0
        %3847 = vmatprep.mubr.f32.mxu0 0.0
        %3848 = vmatmul.mubr.f32.gmra.mxu0 %v3657
        %v3849 = vpop.f32.mrf.mxu0
        %v3850 = vadd.f32 0.0, %v3849
        %v3851 = vpop.f32.mrf.mxu0
        %3852 = vmatprep.mubr.f32.mxu0 0.0
        %3853 = vmatmul.mubr.f32.gmra.mxu0 %v3660
        %v3854 = vpop.f32.mrf.mxu0
        %v3855 = vadd.f32 0.0, %v3854
        %v3856 = vpop.f32.mrf.mxu0
        %3857 = vmatprep.mubr.f32.mxu0 0.0
        %3858 = vmatmul.mubr.f32.gmra.mxu0 %v3663
        %v3859 = vpop.f32.mrf.mxu0
        %v3860 = vadd.f32 0.0, %v3859
        %v3861 = vpop.f32.mrf.mxu0
        %3862 = vmatprep.mubr.f32.mxu0 0.0
        %3863 = vmatmul.mubr.f32.gmra.mxu0 %v3666
        %v3864 = vpop.f32.mrf.mxu0
        %v3865 = vadd.f32 0.0, %v3864
        %v3866 = vpop.f32.mrf.mxu0
        %3867 = vmatprep.mubr.f32.mxu0 0.0
        %3868 = vmatmul.mubr.f32.gmra.mxu0 %v3669
        %v3869 = vpop.f32.mrf.mxu0
        %v3870 = vadd.f32 0.0, %v3869
        %v3871 = vpop.f32.mrf.mxu0
        %3872 = vmatprep.mubr.f32.mxu0 0.0
        %3873 = vmatmul.mubr.f32.gmra.mxu0 %v3672
        %v3874 = vpop.f32.mrf.mxu0
        %v3875 = vadd.f32 0.0, %v3874
        %v3876 = vpop.f32.mrf.mxu0
        %3877 = vmatprep.mubr.f32.mxu0 0.0
        %3878 = vmatmul.mubr.f32.gmra.mxu0 %v3675
        %v3879 = vpop.f32.mrf.mxu0
        %v3880 = vadd.f32 0.0, %v3879
        %v3881 = vpop.f32.mrf.mxu0
        %3882 = vmatprep.mubr.f32.mxu0 0.0
        %3883 = vmatmul.mubr.f32.gmra.mxu0 %v3678
        %v3884 = vpop.f32.mrf.mxu0
        %v3885 = vadd.f32 0.0, %v3884
        %v3886 = vpop.f32.mrf.mxu0
        %3887 = vmatprep.mubr.f32.mxu0 0.0
        %3888 = vmatmul.mubr.f32.gmra.mxu0 %v3681
        %v3889 = vpop.f32.mrf.mxu0
        %v3890 = vadd.f32 0.0, %v3889
        %v3891 = vpop.f32.mrf.mxu0
        %3892 = vmatprep.mubr.f32.mxu0 0.0
        %3893 = vmatmul.mubr.f32.gmra.mxu0 %v3684
        %v3894 = vpop.f32.mrf.mxu0
        %v3895 = vadd.f32 0.0, %v3894
        %v3896 = vpop.f32.mrf.mxu0
        %3897 = vmatprep.mubr.f32.mxu0 0.0
        %3898 = vmatmul.mubr.f32.gmra.mxu0 %v3687
        %v3899 = vpop.f32.mrf.mxu0
        %v3900 = vadd.f32 0.0, %v3899
        %v3901 = vpop.f32.mrf.mxu0
        %3902 = vmatprep.mubr.f32.mxu0 0.0
        %3903 = vmatmul.mubr.f32.gmra.mxu0 %v3690
        %v3904 = vpop.f32.mrf.mxu0
        %v3905 = vadd.f32 0.0, %v3904
        %v3906 = vpop.f32.mrf.mxu0
        %3907 = vmatprep.mubr.f32.mxu0 0.0
        %3908 = vmatmul.mubr.f32.gmra.mxu0 %v3693
        %v3909 = vpop.f32.mrf.mxu0
        %v3910 = vadd.f32 0.0, %v3909
        %v3911 = vpop.f32.mrf.mxu0
        %3912 = vmatprep.mubr.f32.mxu0 0.0
        %3913 = vmatmul.mubr.f32.gmra.mxu0 %v3696
        %v3914 = vpop.f32.mrf.mxu0
        %v3915 = vadd.f32 0.0, %v3914
        %v3916 = vpop.f32.mrf.mxu0
        %3917 = vmatprep.mubr.f32.mxu0 0.0
        %3918 = vmatmul.mubr.f32.gmra.mxu0 %v3699
        %v3919 = vpop.f32.mrf.mxu0
        %v3920 = vadd.f32 0.0, %v3919
        %v3921 = vpop.f32.mrf.mxu0
        %3922 = vmatprep.mubr.f32.mxu0 0.0
        %3923 = vmatmul.mubr.f32.gmra.mxu0 %v3702
        %v3924 = vpop.f32.mrf.mxu0
        %v3925 = vadd.f32 0.0, %v3924
        %v3926 = vpop.f32.mrf.mxu0
        %3927 = vmatprep.mubr.f32.mxu0 0.0
        %3928 = vmatmul.mubr.f32.gmra.mxu0 %v3705
        %v3929 = vpop.f32.mrf.mxu0
        %v3930 = vadd.f32 0.0, %v3929
        %v3931 = vpop.f32.mrf.mxu0
        %3932 = vmatprep.mubr.f32.mxu0 0.0
        %3933 = vmatmul.mubr.f32.gmra.mxu0 %v3708
        %v3934 = vpop.f32.mrf.mxu0
        %v3935 = vadd.f32 0.0, %v3934
        %v3936 = vpop.f32.mrf.mxu0
        %3937 = vmatprep.mubr.f32.mxu0 0.0
        %3938 = vmatmul.mubr.f32.gmra.mxu0 %v3711
        %v3939 = vpop.f32.mrf.mxu0
        %v3940 = vadd.f32 0.0, %v3939
        %v3941 = vpop.f32.mrf.mxu0
        %3942 = vmatprep.mubr.f32.mxu0 0.0
        %3943 = vmatmul.mubr.f32.gmra.mxu0 %v3714
        %v3944 = vpop.f32.mrf.mxu0
        %v3945 = vadd.f32 0.0, %v3944
        %v3946 = vpop.f32.mrf.mxu0
        %3947 = vmatprep.mubr.f32.mxu0 0.0
        %3948 = vmatmul.mubr.f32.gmra.mxu0 %v3717
        %v3949 = vpop.f32.mrf.mxu0
        %v3950 = vadd.f32 0.0, %v3949
        %v3951 = vpop.f32.mrf.mxu0
        %3952 = vmatprep.mubr.f32.mxu0 0.0
        %3953 = vmatmul.mubr.f32.gmra.mxu0 %v3720
        %v3954 = vpop.f32.mrf.mxu0
        %v3955 = vadd.f32 0.0, %v3954
        %v3956 = vpop.f32.mrf.mxu0
        %3957 = vmatprep.mubr.f32.mxu0 0.0
        %3958 = vmatmul.mubr.f32.gmra.mxu0 %v3723
        %v3959 = vpop.f32.mrf.mxu0
        %v3960 = vadd.f32 0.0, %v3959
        %v3961 = vpop.f32.mrf.mxu0
        %3962 = vmatprep.mubr.f32.mxu0 0.0
        %3963 = vmatmul.mubr.f32.gmra.mxu0 %v3726
        %v3964 = vpop.f32.mrf.mxu0
        %v3965 = vadd.f32 0.0, %v3964
        %v3966 = vpop.f32.mrf.mxu0
        %3967 = vmatprep.mubr.f32.mxu0 0.0
        %3968 = vmatmul.mubr.f32.gmra.mxu0 %v3729
        %v3969 = vpop.f32.mrf.mxu0
        %v3970 = vadd.f32 0.0, %v3969
        %v3971 = vpop.f32.mrf.mxu0
        %3972 = vmatprep.mubr.f32.mxu0 0.0
        %3973 = vmatmul.mubr.f32.gmra.mxu0 %v3732
        %v3974 = vpop.f32.mrf.mxu0
        %v3975 = vadd.f32 0.0, %v3974
        %v3976 = vpop.f32.mrf.mxu0
        %3977 = vmatprep.mubr.f32.mxu0 0.0
        %3978 = vmatmul.mubr.f32.gmra.mxu0 %v3735
        %v3979 = vpop.f32.mrf.mxu0
        %v3980 = vadd.f32 0.0, %v3979
        %v3981 = vpop.f32.mrf.mxu0
        %3982 = vmatprep.mubr.f32.mxu0 0.0
        %3983 = vmatmul.mubr.f32.gmra.mxu0 %v3738
        %v3984 = vpop.f32.mrf.mxu0
        %v3985 = vadd.f32 0.0, %v3984
        %v3986 = vpop.f32.mrf.mxu0
        %3987 = vdwg.mxu0
        %v3988 = vadd.f32 %v3558, %v3810
        %v3989 = vadd.f32 %v3559, %v3815
        %v3990 = vadd.f32 %v3560, %v3820
        %v3991 = vadd.f32 %v3561, %v3825
        %v3992 = vadd.f32 %v3562, %v3830
        %v3993 = vadd.f32 %v3563, %v3835
        %v3994 = vadd.f32 %v3564, %v3840
        %v3995 = vadd.f32 %v3565, %v3845
        %v3996 = vadd.f32 %v3566, %v3850
        %v3997 = vadd.f32 %v3567, %v3855
        %v3998 = vadd.f32 %v3568, %v3860
        %v3999 = vadd.f32 %v3569, %v3865
        %v4000 = vadd.f32 %v3570, %v3870
        %v4001 = vadd.f32 %v3571, %v3875
        %v4002 = vadd.f32 %v3572, %v3880
        %v4003 = vadd.f32 %v3573, %v3885
        %v4004 = vadd.f32 %v3574, %v3890
        %v4005 = vadd.f32 %v3575, %v3895
        %v4006 = vadd.f32 %v3576, %v3900
        %v4007 = vadd.f32 %v3577, %v3905
        %v4008 = vadd.f32 %v3578, %v3910
        %v4009 = vadd.f32 %v3579, %v3915
        %v4010 = vadd.f32 %v3580, %v3920
        %v4011 = vadd.f32 %v3581, %v3925
        %v4012 = vadd.f32 %v3582, %v3930
        %v4013 = vadd.f32 %v3583, %v3935
        %v4014 = vadd.f32 %v3584, %v3940
        %v4015 = vadd.f32 %v3585, %v3945
        %v4016 = vadd.f32 %v3586, %v3950
        %v4017 = vadd.f32 %v3587, %v3955
        %v4018 = vadd.f32 %v3588, %v3960
        %v4019 = vadd.f32 %v3589, %v3965
        %v4020 = vadd.f32 %v3590, %v3970
        %v4021 = vadd.f32 %v3591, %v3975
        %v4022 = vadd.f32 %v3592, %v3980
        %v4023 = vadd.f32 %v3593, %v3985
        %4024 = vst [vmem:[%s209] sm:$0xff] %v3988
        %4025 = vst [vmem:[%s209 + $0x8] sm:$0xff] %v3989
        %4026 = vst [vmem:[%s209 + $0x10] sm:$0xff] %v3990
        %4027 = vst [vmem:[%s209 + $0x18] sm:$0xff] %v3991
        %4028 = vst [vmem:[%s209 + $0x20] sm:$0xff] %v3992
        %4029 = vst [vmem:[%s209 + $0x28] sm:$0xff] %v3993
        %4030 = vst [vmem:[%s209 + $0x30] sm:$0xff] %v3994
        %4031 = vst [vmem:[%s209 + $0x38] sm:$0xff] %v3995
        %4032 = vst [vmem:[%s209 + $0x40] sm:$0xff] %v3996
        %4033 = vst [vmem:[%s209 + $0x48] sm:$0xff] %v3997
        %4034 = vst [vmem:[%s209 + $0x50] sm:$0xff] %v3998
        %4035 = vst [vmem:[%s209 + $0x58] sm:$0xff] %v3999
        %4036 = vst [vmem:[%s209 + $0x60] sm:$0xff] %v4000
        %4037 = vst [vmem:[%s209 + $0x68] sm:$0xff] %v4001
        %4038 = vst [vmem:[%s209 + $0x70] sm:$0xff] %v4002
        %4039 = vst [vmem:[%s209 + $0x78] sm:$0xff] %v4003
        %4040 = vst [vmem:[%s209 + $0x80] sm:$0xff] %v4004
        %4041 = vst [vmem:[%s209 + $0x88] sm:$0xff] %v4005
        %4042 = vst [vmem:[%s209 + $0x90] sm:$0xff] %v4006
        %4043 = vst [vmem:[%s209 + $0x98] sm:$0xff] %v4007
        %4044 = vst [vmem:[%s209 + $0xa0] sm:$0xff] %v4008
        %4045 = vst [vmem:[%s209 + $0xa8] sm:$0xff] %v4009
        %4046 = vst [vmem:[%s209 + $0xb0] sm:$0xff] %v4010
        %4047 = vst [vmem:[%s209 + $0xb8] sm:$0xff] %v4011
        %4048 = vst [vmem:[%s209 + $0xc0] sm:$0xff] %v4012
        %4049 = vst [vmem:[%s209 + $0xc8] sm:$0xff] %v4013
        %4050 = vst [vmem:[%s209 + $0xd0] sm:$0xff] %v4014
        %4051 = vst [vmem:[%s209 + $0xd8] sm:$0xff] %v4015
        %4052 = vst [vmem:[%s209 + $0xe0] sm:$0xff] %v4016
        %4053 = vst [vmem:[%s209 + $0xe8] sm:$0xff] %v4017
        %4054 = vst [vmem:[%s209 + $0xf0] sm:$0xff] %v4018
        %4055 = vst [vmem:[%s209 + $0xf8] sm:$0xff] %v4019
        %4056 = vst [vmem:[%s209 + $0x100] sm:$0xff] %v4020
        %4057 = vst [vmem:[%s209 + $0x108] sm:$0xff] %v4021
        %4058 = vst [vmem:[%s209 + $0x110] sm:$0xff] %v4022
        %4059 = vst [vmem:[%s209 + $0x118] sm:$0xff] %v4023
        %v4060 = vld [vmem:[%s2] sm:$0xff]
        %v4061 = vld [vmem:[%s2 + $0x8] sm:$0xff]
        %v4062 = vld [vmem:[%s2 + $0x10] sm:$0xff]
        %v4063 = vld [vmem:[%s2 + $0x18] sm:$0xff]
        %v4064 = vld [vmem:[%s2 + $0x20] sm:$0xff]
        %v4065 = vld [vmem:[%s2 + $0x28] sm:$0xff]
        %v4066 = vld [vmem:[%s2 + $0x30] sm:$0xff]
        %v4067 = vld [vmem:[%s2 + $0x38] sm:$0xff]
        %v4068 = vld [vmem:[%s2 + $0x40] sm:$0xff]
        %v4069 = vld [vmem:[%s2 + $0x48] sm:$0xff]
        %v4070 = vld [vmem:[%s2 + $0x50] sm:$0xff]
        %v4071 = vld [vmem:[%s2 + $0x58] sm:$0xff]
        %v4072 = vld [vmem:[%s2 + $0x60] sm:$0xff]
        %v4073 = vld [vmem:[%s2 + $0x68] sm:$0xff]
        %v4074 = vld [vmem:[%s2 + $0x70] sm:$0xff]
        %v4075 = vld [vmem:[%s2 + $0x78] sm:$0xff]
        %v4076 = vld [vmem:[%s2 + $0x80] sm:$0xff]
        %v4077 = vld [vmem:[%s2 + $0x88] sm:$0xff]
        %v4078 = vld [vmem:[%s2 + $0x90] sm:$0xff]
        %v4079 = vld [vmem:[%s2 + $0x98] sm:$0xff]
        %v4080 = vld [vmem:[%s2 + $0xa0] sm:$0xff]
        %v4081 = vld [vmem:[%s2 + $0xa8] sm:$0xff]
        %v4082 = vld [vmem:[%s2 + $0xb0] sm:$0xff]
        %v4083 = vld [vmem:[%s2 + $0xb8] sm:$0xff]
        %v4084 = vld [vmem:[%s2 + $0xc0] sm:$0xff]
        %v4085 = vld [vmem:[%s2 + $0xc8] sm:$0xff]
        %v4086 = vld [vmem:[%s2 + $0xd0] sm:$0xff]
        %v4087 = vld [vmem:[%s2 + $0xd8] sm:$0xff]
        %v4088 = vld [vmem:[%s2 + $0xe0] sm:$0xff]
        %v4089 = vld [vmem:[%s2 + $0xe8] sm:$0xff]
        %v4090 = vld [vmem:[%s2 + $0xf0] sm:$0xff]
        %v4091 = vld [vmem:[%s2 + $0xf8] sm:$0xff]
        %v4092 = vld [vmem:[%s2 + $0x100] sm:$0xff]
        %v4093 = vld [vmem:[%s2 + $0x108] sm:$0xff]
        %v4094 = vld [vmem:[%s2 + $0x110] sm:$0xff]
        %v4095 = vld [vmem:[%s2 + $0x118] sm:$0xff]
        %4097 = vset.pattern.permute.xlu0 0
        %4098 = vperm.xlu0 %4097, %v4060
        %v4099 = vpop.permute.xlu0 %4098
        %4102 = vset.pattern.permute.xlu0 0
        %4103 = vperm.xlu0 %4102, %v4061
        %v4104 = vpop.permute.xlu0 %4103
        %4107 = vset.pattern.permute.xlu0 0
        %4108 = vperm.xlu0 %4107, %v4062
        %v4109 = vpop.permute.xlu0 %4108
        %4112 = vset.pattern.permute.xlu0 0
        %4113 = vperm.xlu0 %4112, %v4063
        %v4114 = vpop.permute.xlu0 %4113
        %4117 = vset.pattern.permute.xlu0 0
        %4118 = vperm.xlu0 %4117, %v4064
        %v4119 = vpop.permute.xlu0 %4118
        %4122 = vset.pattern.permute.xlu0 0
        %4123 = vperm.xlu0 %4122, %v4065
        %v4124 = vpop.permute.xlu0 %4123
        %4127 = vset.pattern.permute.xlu0 0
        %4128 = vperm.xlu0 %4127, %v4066
        %v4129 = vpop.permute.xlu0 %4128
        %4132 = vset.pattern.permute.xlu0 0
        %4133 = vperm.xlu0 %4132, %v4067
        %v4134 = vpop.permute.xlu0 %4133
        %4137 = vset.pattern.permute.xlu0 0
        %4138 = vperm.xlu0 %4137, %v4068
        %v4139 = vpop.permute.xlu0 %4138
        %4142 = vset.pattern.permute.xlu0 0
        %4143 = vperm.xlu0 %4142, %v4069
        %v4144 = vpop.permute.xlu0 %4143
        %4147 = vset.pattern.permute.xlu0 0
        %4148 = vperm.xlu0 %4147, %v4070
        %v4149 = vpop.permute.xlu0 %4148
        %4152 = vset.pattern.permute.xlu0 0
        %4153 = vperm.xlu0 %4152, %v4071
        %v4154 = vpop.permute.xlu0 %4153
        %4157 = vset.pattern.permute.xlu0 0
        %4158 = vperm.xlu0 %4157, %v4072
        %v4159 = vpop.permute.xlu0 %4158
        %4162 = vset.pattern.permute.xlu0 0
        %4163 = vperm.xlu0 %4162, %v4073
        %v4164 = vpop.permute.xlu0 %4163
        %4167 = vset.pattern.permute.xlu0 0
        %4168 = vperm.xlu0 %4167, %v4074
        %v4169 = vpop.permute.xlu0 %4168
        %4172 = vset.pattern.permute.xlu0 0
        %4173 = vperm.xlu0 %4172, %v4075
        %v4174 = vpop.permute.xlu0 %4173
        %4177 = vset.pattern.permute.xlu0 0
        %4178 = vperm.xlu0 %4177, %v4076
        %v4179 = vpop.permute.xlu0 %4178
        %4182 = vset.pattern.permute.xlu0 0
        %4183 = vperm.xlu0 %4182, %v4077
        %v4184 = vpop.permute.xlu0 %4183
        %4187 = vset.pattern.permute.xlu0 0
        %4188 = vperm.xlu0 %4187, %v4078
        %v4189 = vpop.permute.xlu0 %4188
        %4192 = vset.pattern.permute.xlu0 0
        %4193 = vperm.xlu0 %4192, %v4079
        %v4194 = vpop.permute.xlu0 %4193
        %4197 = vset.pattern.permute.xlu0 0
        %4198 = vperm.xlu0 %4197, %v4080
        %v4199 = vpop.permute.xlu0 %4198
        %4202 = vset.pattern.permute.xlu0 0
        %4203 = vperm.xlu0 %4202, %v4081
        %v4204 = vpop.permute.xlu0 %4203
        %4207 = vset.pattern.permute.xlu0 0
        %4208 = vperm.xlu0 %4207, %v4082
        %v4209 = vpop.permute.xlu0 %4208
        %4212 = vset.pattern.permute.xlu0 0
        %4213 = vperm.xlu0 %4212, %v4083
        %v4214 = vpop.permute.xlu0 %4213
        %4217 = vset.pattern.permute.xlu0 0
        %4218 = vperm.xlu0 %4217, %v4084
        %v4219 = vpop.permute.xlu0 %4218
        %4222 = vset.pattern.permute.xlu0 0
        %4223 = vperm.xlu0 %4222, %v4085
        %v4224 = vpop.permute.xlu0 %4223
        %4227 = vset.pattern.permute.xlu0 0
        %4228 = vperm.xlu0 %4227, %v4086
        %v4229 = vpop.permute.xlu0 %4228
        %4232 = vset.pattern.permute.xlu0 0
        %4233 = vperm.xlu0 %4232, %v4087
        %v4234 = vpop.permute.xlu0 %4233
        %4237 = vset.pattern.permute.xlu0 0
        %4238 = vperm.xlu0 %4237, %v4088
        %v4239 = vpop.permute.xlu0 %4238
        %4242 = vset.pattern.permute.xlu0 0
        %4243 = vperm.xlu0 %4242, %v4089
        %v4244 = vpop.permute.xlu0 %4243
        %4247 = vset.pattern.permute.xlu0 0
        %4248 = vperm.xlu0 %4247, %v4090
        %v4249 = vpop.permute.xlu0 %4248
        %4252 = vset.pattern.permute.xlu0 0
        %4253 = vperm.xlu0 %4252, %v4091
        %v4254 = vpop.permute.xlu0 %4253
        %4257 = vset.pattern.permute.xlu0 0
        %4258 = vperm.xlu0 %4257, %v4092
        %v4259 = vpop.permute.xlu0 %4258
        %4262 = vset.pattern.permute.xlu0 0
        %4263 = vperm.xlu0 %4262, %v4093
        %v4264 = vpop.permute.xlu0 %4263
        %4267 = vset.pattern.permute.xlu0 0
        %4268 = vperm.xlu0 %4267, %v4094
        %v4269 = vpop.permute.xlu0 %4268
        %4272 = vset.pattern.permute.xlu0 0
        %4273 = vperm.xlu0 %4272, %v4095
        %v4274 = vpop.permute.xlu0 %4273
        %v4276 = vmul.f32 %v3988, %v4099
        %v4277 = vmul.f32 %v3989, %v4104
        %v4278 = vmul.f32 %v3990, %v4109
        %v4279 = vmul.f32 %v3991, %v4114
        %v4280 = vmul.f32 %v3992, %v4119
        %v4281 = vmul.f32 %v3993, %v4124
        %v4282 = vmul.f32 %v3994, %v4129
        %v4283 = vmul.f32 %v3995, %v4134
        %v4284 = vmul.f32 %v3996, %v4139
        %v4285 = vmul.f32 %v3997, %v4144
        %v4286 = vmul.f32 %v3998, %v4149
        %v4287 = vmul.f32 %v3999, %v4154
        %v4288 = vmul.f32 %v4000, %v4159
        %v4289 = vmul.f32 %v4001, %v4164
        %v4290 = vmul.f32 %v4002, %v4169
        %v4291 = vmul.f32 %v4003, %v4174
        %v4292 = vmul.f32 %v4004, %v4179
        %v4293 = vmul.f32 %v4005, %v4184
        %v4294 = vmul.f32 %v4006, %v4189
        %v4295 = vmul.f32 %v4007, %v4194
        %v4296 = vmul.f32 %v4008, %v4199
        %v4297 = vmul.f32 %v4009, %v4204
        %v4298 = vmul.f32 %v4010, %v4209
        %v4299 = vmul.f32 %v4011, %v4214
        %v4300 = vmul.f32 %v4012, %v4219
        %v4301 = vmul.f32 %v4013, %v4224
        %v4302 = vmul.f32 %v4014, %v4229
        %v4303 = vmul.f32 %v4015, %v4234
        %v4304 = vmul.f32 %v4016, %v4239
        %v4305 = vmul.f32 %v4017, %v4244
        %v4306 = vmul.f32 %v4018, %v4249
        %v4307 = vmul.f32 %v4019, %v4254
        %v4308 = vmul.f32 %v4020, %v4259
        %v4309 = vmul.f32 %v4021, %v4264
        %v4310 = vmul.f32 %v4022, %v4269
        %v4311 = vmul.f32 %v4023, %v4274
        %v4312 = vld [vmem:[#allocation4] sm:$0x1]
        %v4313 = vadd.f32 %v4276, %v4277
        %v4314 = vadd.f32 %v4313, %v4278
        %v4315 = vadd.f32 %v4314, %v4279
        %v4316 = vadd.f32 %v4315, %v4280
        %v4317 = vadd.f32 %v4316, %v4281
        %v4318 = vadd.f32 %v4317, %v4282
        %v4319 = vadd.f32 %v4318, %v4283
        %v4320 = vadd.f32 %v4319, %v4284
        %v4321 = vadd.f32 %v4320, %v4285
        %v4322 = vadd.f32 %v4321, %v4286
        %v4323 = vadd.f32 %v4322, %v4287
        %v4324 = vadd.f32 %v4323, %v4288
        %v4325 = vadd.f32 %v4324, %v4289
        %v4326 = vadd.f32 %v4325, %v4290
        %v4327 = vadd.f32 %v4326, %v4291
        %v4328 = vadd.f32 %v4327, %v4292
        %v4329 = vadd.f32 %v4328, %v4293
        %v4330 = vadd.f32 %v4329, %v4294
        %v4331 = vadd.f32 %v4330, %v4295
        %v4332 = vadd.f32 %v4331, %v4296
        %v4333 = vadd.f32 %v4332, %v4297
        %v4334 = vadd.f32 %v4333, %v4298
        %v4335 = vadd.f32 %v4334, %v4299
        %v4336 = vadd.f32 %v4335, %v4300
        %v4337 = vadd.f32 %v4336, %v4301
        %v4338 = vadd.f32 %v4337, %v4302
        %v4339 = vadd.f32 %v4338, %v4303
        %v4340 = vadd.f32 %v4339, %v4304
        %v4341 = vadd.f32 %v4340, %v4305
        %v4342 = vadd.f32 %v4341, %v4306
        %v4343 = vadd.f32 %v4342, %v4307
        %v4344 = vadd.f32 %v4343, %v4308
        %v4345 = vadd.f32 %v4344, %v4309
        %v4346 = vadd.f32 %v4345, %v4310
        %v4347 = vadd.f32 %v4346, %v4311
        %v4348 = vrot.slane %v4347, 4
        %v4349 = vadd.f32 %v4347, %v4348
        %v4350 = vrot.slane %v4349, 2
        %v4351 = vadd.f32 %v4349, %v4350
        %v4352 = vrot.slane %v4351, 1
        %v4353 = vadd.f32 %v4351, %v4352
        %v4354 = vadd.f32 %v4312, %v4353
        %4355 = vst [vmem:[#allocation4] sm:$0x1] %v4354
        %v4356 = vld [vmem:[#allocation6] sm:$0x1]
        %v4357 = vmul.f32 %v4276, %v4276
        %v4358 = vmul.f32 %v4277, %v4277
        %v4359 = vmul.f32 %v4278, %v4278
        %v4360 = vmul.f32 %v4279, %v4279
        %v4361 = vmul.f32 %v4280, %v4280
        %v4362 = vmul.f32 %v4281, %v4281
        %v4363 = vmul.f32 %v4282, %v4282
        %v4364 = vmul.f32 %v4283, %v4283
        %v4365 = vmul.f32 %v4284, %v4284
        %v4366 = vmul.f32 %v4285, %v4285
        %v4367 = vmul.f32 %v4286, %v4286
        %v4368 = vmul.f32 %v4287, %v4287
        %v4369 = vmul.f32 %v4288, %v4288
        %v4370 = vmul.f32 %v4289, %v4289
        %v4371 = vmul.f32 %v4290, %v4290
        %v4372 = vmul.f32 %v4291, %v4291
        %v4373 = vmul.f32 %v4292, %v4292
        %v4374 = vmul.f32 %v4293, %v4293
        %v4375 = vmul.f32 %v4294, %v4294
        %v4376 = vmul.f32 %v4295, %v4295
        %v4377 = vmul.f32 %v4296, %v4296
        %v4378 = vmul.f32 %v4297, %v4297
        %v4379 = vmul.f32 %v4298, %v4298
        %v4380 = vmul.f32 %v4299, %v4299
        %v4381 = vmul.f32 %v4300, %v4300
        %v4382 = vmul.f32 %v4301, %v4301
        %v4383 = vmul.f32 %v4302, %v4302
        %v4384 = vmul.f32 %v4303, %v4303
        %v4385 = vmul.f32 %v4304, %v4304
        %v4386 = vmul.f32 %v4305, %v4305
        %v4387 = vmul.f32 %v4306, %v4306
        %v4388 = vmul.f32 %v4307, %v4307
        %v4389 = vmul.f32 %v4308, %v4308
        %v4390 = vmul.f32 %v4309, %v4309
        %v4391 = vmul.f32 %v4310, %v4310
        %v4392 = vmul.f32 %v4311, %v4311
        %v4393 = vadd.f32 %v4357, %v4358
        %v4394 = vadd.f32 %v4393, %v4359
        %v4395 = vadd.f32 %v4394, %v4360
        %v4396 = vadd.f32 %v4395, %v4361
        %v4397 = vadd.f32 %v4396, %v4362
        %v4398 = vadd.f32 %v4397, %v4363
        %v4399 = vadd.f32 %v4398, %v4364
        %v4400 = vadd.f32 %v4399, %v4365
        %v4401 = vadd.f32 %v4400, %v4366
        %v4402 = vadd.f32 %v4401, %v4367
        %v4403 = vadd.f32 %v4402, %v4368
        %v4404 = vadd.f32 %v4403, %v4369
        %v4405 = vadd.f32 %v4404, %v4370
        %v4406 = vadd.f32 %v4405, %v4371
        %v4407 = vadd.f32 %v4406, %v4372
        %v4408 = vadd.f32 %v4407, %v4373
        %v4409 = vadd.f32 %v4408, %v4374
        %v4410 = vadd.f32 %v4409, %v4375
        %v4411 = vadd.f32 %v4410, %v4376
        %v4412 = vadd.f32 %v4411, %v4377
        %v4413 = vadd.f32 %v4412, %v4378
        %v4414 = vadd.f32 %v4413, %v4379
        %v4415 = vadd.f32 %v4414, %v4380
        %v4416 = vadd.f32 %v4415, %v4381
        %v4417 = vadd.f32 %v4416, %v4382
        %v4418 = vadd.f32 %v4417, %v4383
        %v4419 = vadd.f32 %v4418, %v4384
        %v4420 = vadd.f32 %v4419, %v4385
        %v4421 = vadd.f32 %v4420, %v4386
        %v4422 = vadd.f32 %v4421, %v4387
        %v4423 = vadd.f32 %v4422, %v4388
        %v4424 = vadd.f32 %v4423, %v4389
        %v4425 = vadd.f32 %v4424, %v4390
        %v4426 = vadd.f32 %v4425, %v4391
        %v4427 = vadd.f32 %v4426, %v4392
        %v4428 = vrot.slane %v4427, 4
        %v4429 = vadd.f32 %v4427, %v4428
        %v4430 = vrot.slane %v4429, 2
        %v4431 = vadd.f32 %v4429, %v4430
        %v4432 = vrot.slane %v4431, 1
        %v4433 = vadd.f32 %v4431, %v4432
        %v4434 = vadd.f32 %v4356, %v4433
        %4435 = vst [vmem:[#allocation6] sm:$0x1] %v4434
        %s4436 = sand.u32 %s97, 1
        %s4437 = scalar_lea.sflag [#allocation3], %s4436
        %s4438 = sand.u32 %s97, 1
        %s4439 = smul.addr %s4438, 288
        %s4440 = scalar_lea.vmem [#allocation2], %s4439
        // Predicated region
        $region37: #{tpu_custom_call.1} parent=31 // pred_check
          %p4441 = pneg %p107
        $region38: #{tpu_custom_call.1} parent=31 // pred_check_branch
          %4443 = sbr.rel (%p4441) target = $region40
        $region39: #{tpu_custom_call.1} parent=31 // pred_region
          %s4445 = ssub.s32 4608, 4608
          %4446 = vsyncadd %s4437, %s4445
          %s4447 = smul.addr %s21, 36
          %s4448 = smul.addr %s4447, 128
          %s4449 = scalar_lea.hbm %s3, %s4448
          %s4450 = sshll.u32 %s4440, 4
          %s4451 = int_to_ptr.vmem [resolvable:$true] %s4450
          %4456 = dma.vmem_to_hbm [thread:$0]  %s4451, 4608, %s4449, %s4437, 128, 128, 8
        $region40: #{tpu_custom_call.1} parent=31 // pred_fallthru
          _
        // Predicated region
        $region41: #{tpu_custom_call.1} parent=31 // pred_check
          %p4457 = pneg %p128
        $region42: #{tpu_custom_call.1} parent=31 // pred_check_branch
          %4459 = sbr.rel (%p4457) target = $region44
        $region43: #{tpu_custom_call.1} parent=31 // pred_region
          %s4461 = ssub.s32 16, 16
          %4462 = vsyncadd [#allocation5], %s4461
          %s4464 = sshll.u32 [#allocation4], 4
          %s4465 = int_to_ptr.vmem [resolvable:$true] %s4464
          %4467 = dma.vmem_to_hbm [thread:$0]  %s4465, 16, %s4, [#allocation5]
        $region44: #{tpu_custom_call.1} parent=31 // pred_fallthru
          _
        // Predicated region
        $region45: #{tpu_custom_call.1} parent=31 // pred_check
          %p4468 = pneg %p149
        $region46: #{tpu_custom_call.1} parent=31 // pred_check_branch
          %4470 = sbr.rel (%p4468) target = $region48
        $region47: #{tpu_custom_call.1} parent=31 // pred_region
          %s4472 = ssub.s32 16, 16
          %4473 = vsyncadd [#allocation5], %s4472
          %s4475 = sshll.u32 [#allocation6], 4
          %s4476 = int_to_ptr.vmem [resolvable:$true] %s4475
          %4478 = dma.vmem_to_hbm [thread:$0]  %s4476, 16, %s5, [#allocation5]
        $region48: #{tpu_custom_call.1} parent=31 // pred_fallthru
          _
        // Predicated region
        $region49: #{tpu_custom_call.1} parent=31 // pred_check
          %p4479 = pneg %p128
        $region50: #{tpu_custom_call.1} parent=31 // pred_check_branch
          %4481 = sbr.rel (%p4479) target = $region52
        $region51: #{tpu_custom_call.1} parent=31 // pred_region
          %4482 = dma.done [#allocation5], 16
        $region52: #{tpu_custom_call.1} parent=31 // pred_fallthru
          _
        // Predicated region
        $region53: #{tpu_custom_call.1} parent=31 // pred_check
          %p4483 = pneg %p149
        $region54: #{tpu_custom_call.1} parent=31 // pred_check_branch
          %4485 = sbr.rel (%p4483) target = $region56
        $region55: #{tpu_custom_call.1} parent=31 // pred_region
          %4486 = dma.done [#allocation5], 16
        $region56: #{tpu_custom_call.1} parent=31 // pred_fallthru
          _
      $region32: #{tpu_custom_call.1} parent=5 // pred_fallthru
        _
      %p4487 = scmp.le.s32.totalorder 2, %s16
      // Predicated region
      $region57: #{tpu_custom_call.1} parent=5 // pred_check
        %p4488 = pneg %p4487
      $region58: #{tpu_custom_call.1} parent=5 // pred_check_branch
        %4490 = sbr.rel (%p4488) target = $region60
      $region59: #{tpu_custom_call.1} parent=5 // pred_region
        %s4491 = ssub.s32 %s16, 2
        // Predicated region
        $region61: #{tpu_custom_call.1} parent=59 // pred_check
          %p4492 = pneg %p113
        $region62: #{tpu_custom_call.1} parent=59 // pred_check_branch
          %4494 = sbr.rel (%p4492) target = $region64
        $region63: #{tpu_custom_call.1} parent=59 // pred_region
          %s4495 = sand.u32 %s98, 1
          %s4496 = scalar_lea.sflag [#allocation3], %s4495
          %s4497 = sand.u32 %s98, 1
          %s4498 = smul.addr %s4497, 288
          %s4499 = scalar_lea.vmem [#allocation2], %s4498
          %4500 = dma.done %s4496, 4608
        $region64: #{tpu_custom_call.1} parent=59 // pred_fallthru
          _
      $region60: #{tpu_custom_call.1} parent=5 // pred_fallthru
        _
    $region6: #{tpu_custom_call.1} parent=1 // loop_footer
      %s20 = sadd.s32 1, %s16
    $region7: #{tpu_custom_call.1} parent=1 // loop_footer_branch
      %15 = sbr.rel target = $region3
    $region8: #{tpu_custom_call.1} parent=1 // loop_exit
      _
    %4501 = vsyncpa [#allocation3], 1
    %s4502 = scalar_lea.sflag [#allocation3], 1
    %4503 = vsyncpa %s4502, 1
    %4504 = vsyncpa [#allocation5], 1

</llo_original>
